<compile_context>
chip_gen: v6e
topology: v6e:2x2x1
jax: 0.10.0
libtpu: 0.0.40
codegen_flags: <defaults>
</compile_context>

<pallas_src>
import functools

import jax
import jax.numpy as jnp
import numpy as np
from jax import lax
from jax.experimental import pallas as pl
from jax.experimental.pallas import tpu as pltpu

# ---- model / example dims (small, consistent with the module) ----
B, T, C = 2, 8, 32
N_HEAD = 4
HD = C // N_HEAD          # head dim = 8
LN_EPS = 1e-5             # torch.nn.LayerNorm default
NEG_INF = -1e30           # additive-mask value (avoids inf-inf NaNs)


def _layernorm(v, w, b):
    mu = jnp.mean(v, axis=-1, keepdims=True)
    var = jnp.mean(jnp.square(v - mu), axis=-1, keepdims=True)
    return (v - mu) * lax.rsqrt(var + LN_EPS) * w + b


def block_kernel(x_ref, cos_ref, sin_ref, mask_ref,
                 ln1w_ref, ln1b_ref, wqkv_ref, bqkv_ref, wproj_ref, bproj_ref,
                 ln2w_ref, ln2b_ref, w13_ref, b13_ref, w2_ref, b2_ref,
                 o_ref, *, n_head, matmul_dtype):
    """One grid step = `bb` batch elements flattened to (bb*T, C) rows.

    Weights arrive pre-transposed (in, out) and (optionally) pre-cast to bf16.
    The qkv weight has 5*C output columns [q/sqrt(hd) | k | v | swapneg(q)/sqrt(hd)
    | swapneg(k)], so interleaved RoPE is two fused multiply-adds on the VPU.
    Heads are handled with a single reshape+transpose into a (bb*H, T, hd) batch for
    two batched einsums; causality is a plain (T, T) additive mask.
    """
    c = x_ref.shape[-1]
    hd = c // n_head
    seq = cos_ref.shape[0]
    rows = x_ref.shape[0]
    bb = rows // seq

    x = x_ref[...]                                   # (rows, C) f32
    cos = cos_ref[...][None]                         # (1, T, C)
    sin = sin_ref[...][None]

    # ---------------- attention branch ----------------
    h = _layernorm(x, ln1w_ref[...], ln1b_ref[...])
    qkv = jnp.dot(h.astype(matmul_dtype), wqkv_ref[...],
                  preferred_element_type=jnp.float32) + bqkv_ref[...]   # (rows, 5C)

    # RoPE as two multiply-adds (swap-negate columns precomputed in the weight).
    q = qkv[:, 0 * c:1 * c].reshape(bb, seq, c) * cos + qkv[:, 3 * c:4 * c].reshape(bb, seq, c) * sin
    k = qkv[:, 1 * c:2 * c].reshape(bb, seq, c) * cos + qkv[:, 4 * c:5 * c].reshape(bb, seq, c) * sin
    v = qkv[:, 2 * c:3 * c].reshape(bb, seq, c)

    def heads(t):   # (bb, T, C) -> (bb*H, T, hd): one reshape + one transpose
        t = jnp.swapaxes(t.reshape(bb, seq, n_head, hd), 1, 2)
        return t.reshape(bb * n_head, seq, hd)

    qh, kh, vh = heads(q), heads(k), heads(v)        # (g, T, hd), g = bb*H

    s = jnp.einsum('gqd,gkd->gqk', qh.astype(matmul_dtype), kh.astype(matmul_dtype),
                   preferred_element_type=jnp.float32)          # (g, T, T)
    s = s + mask_ref[...]                            # (T, T) causal additive mask
    s = s - jnp.max(s, axis=-1, keepdims=True)
    p = jnp.exp(s)
    p = p * pl.reciprocal(jnp.sum(p, axis=-1, keepdims=True))   # exact reciprocal
    yh = jnp.einsum('gqk,gkd->gqd', p.astype(matmul_dtype), vh.astype(matmul_dtype),
                    preferred_element_type=jnp.float32)         # (g, T, hd)

    # merge heads back: one transpose + reshape (no per-head concatenate)
    y = jnp.swapaxes(yh.reshape(bb, n_head, seq, hd), 1, 2).reshape(rows, c)

    x = x + jnp.dot(y.astype(matmul_dtype), wproj_ref[...],
                    preferred_element_type=jnp.float32) + bproj_ref[...]

    # ---------------- MLP branch: fc2(fc1(x) * silu(fc3(x))) ----------------
    h2 = _layernorm(x, ln2w_ref[...], ln2b_ref[...])
    a13 = jnp.dot(h2.astype(matmul_dtype), w13_ref[...],
                  preferred_element_type=jnp.float32) + b13_ref[...]    # (rows, 8C)
    f = w2_ref.shape[0]                              # 4*C
    a1 = a13[:, :f]
    a3 = a13[:, f:]
    g = a1 * (a3 * jax.nn.sigmoid(a3))
    o_ref[...] = x + jnp.dot(g.astype(matmul_dtype), w2_ref[...],
                             preferred_element_type=jnp.float32) + b2_ref[...]


# ---------------- wrapper-side (one-time) layout plumbing ----------------
def _prep_params(p, n_head, matmul_dtype=jnp.float32):
    """PyTorch-layout params -> kernel-ready, pre-transposed / fused / extended."""
    c = p["wproj"].shape[0]
    hd = c // n_head
    scale = 1.0 / float(np.sqrt(hd))

    # pairwise swap-negate as a right-multiply: (x @ P)[2i] = -x[2i+1], (x @ P)[2i+1] = x[2i]
    P_np = np.zeros((c, c), np.float32)
    for i in range(c // 2):
        P_np[2 * i + 1, 2 * i] = -1.0
        P_np[2 * i, 2 * i + 1] = 1.0
    P = jnp.asarray(P_np)

    wqkv = p["wqkv"]                                  # (3C, C) torch layout
    bqkv = p["bqkv"].reshape(1, 3 * c)
    wq_t = wqkv[0 * c:1 * c].T * scale                # (C, C), 1/sqrt(hd) folded into q
    wk_t = wqkv[1 * c:2 * c].T
    wv_t = wqkv[2 * c:3 * c].T
    bq = bqkv[:, 0 * c:1 * c] * scale
    bk = bqkv[:, 1 * c:2 * c]
    bv = bqkv[:, 2 * c:3 * c]
    wqkv_ext = jnp.concatenate([wq_t, wk_t, wv_t, wq_t @ P, wk_t @ P], axis=1)   # (C, 5C)
    bqkv_ext = jnp.concatenate([bq, bk, bv, bq @ P, bk @ P], axis=1)             # (1, 5C)

    w13_t = jnp.concatenate([p["w1"].T, p["w3"].T], axis=1)                      # (C, 8C)
    b13 = jnp.concatenate([p["b1"].reshape(1, -1), p["b3"].reshape(1, -1)], axis=1)

    md = matmul_dtype
    return (p["ln1_w"].reshape(1, c), p["ln1_b"].reshape(1, c),
            wqkv_ext.astype(md), bqkv_ext, p["wproj"].T.astype(md), p["bproj"].reshape(1, c),
            p["ln2_w"].reshape(1, c), p["ln2_b"].reshape(1, c),
            w13_t.astype(md), b13, p["w2"].T.astype(md), p["b2"].reshape(1, c))


def _build_rope_tables(cos_half, sin_half, n_head):
    # (T, hd/2) -> interleave-expand to (T, hd) -> tile across heads to (T, C).
    cos_c = jnp.tile(jnp.repeat(cos_half, 2, axis=-1), (1, n_head))
    sin_c = jnp.tile(jnp.repeat(sin_half, 2, axis=-1), (1, n_head))
    return cos_c, sin_c


def _build_mask(seq_len):
    r = np.arange(seq_len)
    causal = r[:, None] >= r[None, :]
    return jnp.asarray(np.where(causal, 0.0, NEG_INF).astype(np.float32))


def _default_batch_block(batch, seq_len):
    """Pick the per-step batch block so rows-per-step ~ MXU height (128 on v5e,
    256 on v6e/v7x) when the shapes allow it; never split a tiny problem across
    TensorCores (duplicated weight DMAs + per-step overhead for no gain)."""
    try:
        kind = jax.devices()[0].device_kind.lower()
    except Exception:
        kind = ""
    target_rows = 256 if any(t in kind for t in ("v6", "v7", "tpu7")) else 128
    bb = max(1, min(batch, target_rows // max(seq_len, 1)))
    while batch % bb:                    # round down to a divisor of batch
        bb -= 1
    return bb


def block_forward(x, params, cos_half, sin_half, n_head=N_HEAD, batch_block=None,
                  matmul_dtype=jnp.float32):
    bx, tx, cx = x.shape
    bb = batch_block if batch_block is not None else _default_batch_block(bx, tx)
    assert bx % bb == 0
    grid_len = bx // bb
    rows = bb * tx

    prepped = _prep_params(params, n_head, matmul_dtype)
    cos_c, sin_c = _build_rope_tables(cos_half, sin_half, n_head)   # (T, C), not (rows, C)
    mask = _build_mask(tx)                                          # (T, T), not (rows, rows)
    x2 = x.reshape(bx * tx, cx).astype(jnp.float32)                 # lane/sublane-dense slab

    args = (x2, cos_c, sin_c, mask) + prepped

    def full_spec(a):
        return pl.BlockSpec(a.shape, lambda i: (0,) * a.ndim)

    in_specs = [pl.BlockSpec((rows, cx), lambda i: (i, 0))] + \
               [full_spec(a) for a in args[1:]]

    out = pl.pallas_call(
        functools.partial(block_kernel, n_head=n_head, matmul_dtype=matmul_dtype),
        out_shape=jax.ShapeDtypeStruct((bx * tx, cx), jnp.float32),
        grid_spec=pltpu.PrefetchScalarGridSpec(
            num_scalar_prefetch=0,
            grid=(grid_len,),
            in_specs=in_specs,
            out_specs=pl.BlockSpec((rows, cx), lambda i: (i, 0)),
        ),
        compiler_params=pltpu.CompilerParams(
            dimension_semantics=("parallel",)),
    )(*args)
    return out.reshape(bx, tx, cx)


# ---------------- pure-JAX reference (for sanity check) ----------------
def ref_block(x, p, cos_h, sin_h, n_head=N_HEAD):
    b_, t_, c_ = x.shape
    hd = c_ // n_head

    def ln(v, w, b):
        mu = v.mean(-1, keepdims=True)
        var = ((v - mu) ** 2).mean(-1, keepdims=True)
        return (v - mu) / jnp.sqrt(var + LN_EPS) * w + b

    h = ln(x, p["ln1_w"], p["ln1_b"])
    qkv = h @ p["wqkv"].T + p["bqkv"]
    q, k, v = jnp.split(qkv, 3, axis=-1)

    def heads(t):
        return t.reshape(b_, t_, n_head, hd).transpose(0, 2, 1, 3)

    q, k, v = heads(q), heads(k), heads(v)

    def rope(t):  # matches torch view_as_complex * freqs_cis
        tr = t.reshape(*t.shape[:-1], hd // 2, 2)
        re = tr[..., 0] * cos_h - tr[..., 1] * sin_h
        im = tr[..., 0] * sin_h + tr[..., 1] * cos_h
        return jnp.stack([re, im], axis=-1).reshape(t.shape)

    q, k = rope(q), rope(k)
    s = jnp.einsum("bhtd,bhsd->bhts", q, k) / jnp.sqrt(float(hd))
    causal = jnp.tril(jnp.ones((t_, t_), bool))
    s = jnp.where(causal, s, -jnp.inf)
    a = jax.nn.softmax(s, axis=-1)
    y = jnp.einsum("bhts,bhsd->bhtd", a, v).transpose(0, 2, 1, 3).reshape(b_, t_, c_)
    x = x + y @ p["wproj"].T + p["bproj"]
    h2 = ln(x, p["ln2_w"], p["ln2_b"])
    a1 = h2 @ p["w1"].T + p["b1"]
    a3 = h2 @ p["w3"].T + p["b3"]
    g = a1 * (a3 * jax.nn.sigmoid(a3))
    return x + g @ p["w2"].T + p["b2"]


if __name__ == "__main__":
    key = jax.random.PRNGKey(0)
    ks = jax.random.split(key, 14)

    def rnd(k, shape, scale=0.05):
        return (scale * jax.random.normal(k, shape)).astype(jnp.float32)

    params = {
        "ln1_w": 1.0 + rnd(ks[0], (1, C)), "ln1_b": rnd(ks[1], (1, C)),
        "wqkv":  rnd(ks[2], (3 * C, C)),   "bqkv":  rnd(ks[3], (1, 3 * C)),
        "wproj": rnd(ks[4], (C, C)),       "bproj": rnd(ks[5], (1, C)),
        "ln2_w": 1.0 + rnd(ks[6], (1, C)), "ln2_b": rnd(ks[7], (1, C)),
        "w1":    rnd(ks[8], (4 * C, C)),   "b1":    rnd(ks[9], (1, 4 * C)),
        "w3":    rnd(ks[10], (4 * C, C)),  "b3":    rnd(ks[11], (1, 4 * C)),
        "w2":    rnd(ks[12], (C, 4 * C)),  "b2":    rnd(ks[13], (1, C)),
    }

    # RoPE tables (freqs_cis equivalent): theta = 10000
    inv_freq = 1.0 / (10000.0 ** (np.arange(0, HD, 2, dtype=np.float32) / HD))
    angles = np.outer(np.arange(T, dtype=np.float32), inv_freq)       # (T, HD//2)
    cos_h = jnp.asarray(np.cos(angles), jnp.float32)
    sin_h = jnp.asarray(np.sin(angles), jnp.float32)

    x = jax.random.normal(jax.random.PRNGKey(42), (B, T, C), jnp.float32)

    # f32 matmul path: strict parity with the PyTorch-equivalent reference.
    out = jax.block_until_ready(block_forward(x, params, cos_h, sin_h))
    ref = ref_block(x, params, cos_h, sin_h)
    np.testing.assert_allclose(np.asarray(out), np.asarray(ref), rtol=1e-3, atol=1e-3)

    # bf16-MXU path (recommended for production shapes on v6e/v7x): operands cast at
    # the dot boundary only, f32 accumulation; checked with a looser tolerance.
    out_bf16 = jax.block_until_ready(
        block_forward(x, params, cos_h, sin_h, matmul_dtype=jnp.bfloat16))
    np.testing.assert_allclose(np.asarray(out_bf16), np.asarray(ref), rtol=5e-2, atol=5e-2)

    print("KERNEL_OK")
</pallas_src>

<mosaic_0001>
module attributes {stable_mosaic.version = 11 : i64} {
  func.func @block_kernel(%arg0: i32, %arg1: memref<16x32xf32, #tpu.memory_space<vmem>>, %arg2: memref<8x32xf32, #tpu.memory_space<vmem>>, %arg3: memref<8x32xf32, #tpu.memory_space<vmem>>, %arg4: memref<8x8xf32, #tpu.memory_space<vmem>>, %arg5: memref<1x32xf32, #tpu.memory_space<vmem>>, %arg6: memref<1x32xf32, #tpu.memory_space<vmem>>, %arg7: memref<32x160xf32, #tpu.memory_space<vmem>>, %arg8: memref<1x160xf32, #tpu.memory_space<vmem>>, %arg9: memref<32x32xf32, #tpu.memory_space<vmem>>, %arg10: memref<1x32xf32, #tpu.memory_space<vmem>>, %arg11: memref<1x32xf32, #tpu.memory_space<vmem>>, %arg12: memref<1x32xf32, #tpu.memory_space<vmem>>, %arg13: memref<32x256xf32, #tpu.memory_space<vmem>>, %arg14: memref<1x256xf32, #tpu.memory_space<vmem>>, %arg15: memref<128x32xf32, #tpu.memory_space<vmem>>, %arg16: memref<1x32xf32, #tpu.memory_space<vmem>>, %arg17: memref<16x32xf32, #tpu.memory_space<vmem>>) attributes {dimension_semantics = [#tpu.dimension_semantics<parallel>], iteration_bounds = array<i64: 1>, scalar_prefetch = 0 : i64, scratch_operands = 0 : i64, tpu.core_type = #tpu.core_type<tc>, window_params = [{transform_indices = @transform_0, window_bounds = array<i64: 16, 32>}, {pipeline_mode = #tpu.pipeline_mode<synchronous>, transform_indices = @transform_1, window_bounds = array<i64: 8, 32>}, {pipeline_mode = #tpu.pipeline_mode<synchronous>, transform_indices = @transform_2, window_bounds = array<i64: 8, 32>}, {pipeline_mode = #tpu.pipeline_mode<synchronous>, transform_indices = @transform_3, window_bounds = array<i64: 8, 8>}, {pipeline_mode = #tpu.pipeline_mode<synchronous>, transform_indices = @transform_4, window_bounds = array<i64: 1, 32>}, {pipeline_mode = #tpu.pipeline_mode<synchronous>, transform_indices = @transform_5, window_bounds = array<i64: 1, 32>}, {pipeline_mode = #tpu.pipeline_mode<synchronous>, transform_indices = @transform_6, window_bounds = array<i64: 32, 160>}, {pipeline_mode = #tpu.pipeline_mode<synchronous>, transform_indices = @transform_7, window_bounds = array<i64: 1, 160>}, {pipeline_mode = #tpu.pipeline_mode<synchronous>, transform_indices = @transform_8, window_bounds = array<i64: 32, 32>}, {pipeline_mode = #tpu.pipeline_mode<synchronous>, transform_indices = @transform_9, window_bounds = array<i64: 1, 32>}, {pipeline_mode = #tpu.pipeline_mode<synchronous>, transform_indices = @transform_10, window_bounds = array<i64: 1, 32>}, {pipeline_mode = #tpu.pipeline_mode<synchronous>, transform_indices = @transform_11, window_bounds = array<i64: 1, 32>}, {pipeline_mode = #tpu.pipeline_mode<synchronous>, transform_indices = @transform_12, window_bounds = array<i64: 32, 256>}, {pipeline_mode = #tpu.pipeline_mode<synchronous>, transform_indices = @transform_13, window_bounds = array<i64: 1, 256>}, {pipeline_mode = #tpu.pipeline_mode<synchronous>, transform_indices = @transform_14, window_bounds = array<i64: 128, 32>}, {pipeline_mode = #tpu.pipeline_mode<synchronous>, transform_indices = @transform_15, window_bounds = array<i64: 1, 32>}, {transform_indices = @transform_16, window_bounds = array<i64: 16, 32>}]} {
    %c0 = arith.constant 0 : index
    %c0_0 = arith.constant 0 : index
    %0 = vector.load %arg1[%c0, %c0_0] : memref<16x32xf32, #tpu.memory_space<vmem>>, vector<16x32xf32>
    %c0_1 = arith.constant 0 : index
    %c0_2 = arith.constant 0 : index
    %1 = vector.load %arg2[%c0_1, %c0_2] : memref<8x32xf32, #tpu.memory_space<vmem>>, vector<8x32xf32>
    %2 = vector.shape_cast %1 : vector<8x32xf32> to vector<1x8x32xf32>
    %c0_3 = arith.constant 0 : index
    %c0_4 = arith.constant 0 : index
    %3 = vector.load %arg3[%c0_3, %c0_4] : memref<8x32xf32, #tpu.memory_space<vmem>>, vector<8x32xf32>
    %4 = vector.shape_cast %3 : vector<8x32xf32> to vector<1x8x32xf32>
    %c0_5 = arith.constant 0 : index
    %c0_6 = arith.constant 0 : index
    %5 = vector.load %arg5[%c0_5, %c0_6] : memref<1x32xf32, #tpu.memory_space<vmem>>, vector<1x32xf32>
    %c0_7 = arith.constant 0 : index
    %c0_8 = arith.constant 0 : index
    %6 = vector.load %arg6[%c0_7, %c0_8] : memref<1x32xf32, #tpu.memory_space<vmem>>, vector<1x32xf32>
    %cst = arith.constant dense<0.000000e+00> : vector<16xf32>
    %7 = vector.multi_reduction <add>, %0, %cst [1] : vector<16x32xf32> to vector<16xf32>
    %8 = vector.shape_cast %7 : vector<16xf32> to vector<16x1xf32>
    %cst_9 = arith.constant 3.200000e+01 : f32
    %9 = vector.broadcast %cst_9 : f32 to vector<16x1xf32>
    %10 = arith.divf %8, %9 : vector<16x1xf32>
    %11 = vector.broadcast %10 : vector<16x1xf32> to vector<16x32xf32>
    %12 = arith.subf %0, %11 : vector<16x32xf32>
    %13 = arith.mulf %12, %12 : vector<16x32xf32>
    %cst_10 = arith.constant dense<0.000000e+00> : vector<16xf32>
    %14 = vector.multi_reduction <add>, %13, %cst_10 [1] : vector<16x32xf32> to vector<16xf32>
    %15 = vector.shape_cast %14 : vector<16xf32> to vector<16x1xf32>
    %cst_11 = arith.constant 3.200000e+01 : f32
    %16 = vector.broadcast %cst_11 : f32 to vector<16x1xf32>
    %17 = arith.divf %15, %16 : vector<16x1xf32>
    %18 = vector.broadcast %10 : vector<16x1xf32> to vector<16x32xf32>
    %19 = arith.subf %0, %18 : vector<16x32xf32>
    %cst_12 = arith.constant 9.99999974E-6 : f32
    %20 = vector.broadcast %cst_12 : f32 to vector<16x1xf32>
    %21 = arith.addf %17, %20 : vector<16x1xf32>
    %22 = math.rsqrt %21 : vector<16x1xf32>
    %23 = vector.broadcast %22 : vector<16x1xf32> to vector<16x32xf32>
    %24 = arith.mulf %19, %23 : vector<16x32xf32>
    %25 = vector.broadcast %5 : vector<1x32xf32> to vector<16x32xf32>
    %26 = arith.mulf %24, %25 : vector<16x32xf32>
    %27 = vector.broadcast %6 : vector<1x32xf32> to vector<16x32xf32>
    %28 = arith.addf %26, %27 : vector<16x32xf32>
    %c0_13 = arith.constant 0 : index
    %c0_14 = arith.constant 0 : index
    %29 = vector.load %arg7[%c0_13, %c0_14] : memref<32x160xf32, #tpu.memory_space<vmem>>, vector<32x160xf32>
    %cst_15 = arith.constant dense<0.000000e+00> : vector<16x160xf32>
    %30 = tpu.matmul %28, %29, %cst_15 {dimension_numbers = #tpu.dot_dimension_numbers<[1], [0], [0], [1], [0, 0, 1, 1], [], []>} : vector<16x32xf32>, vector<32x160xf32>, vector<16x160xf32> -> vector<16x160xf32>
    %c0_16 = arith.constant 0 : index
    %c0_17 = arith.constant 0 : index
    %31 = vector.load %arg8[%c0_16, %c0_17] : memref<1x160xf32, #tpu.memory_space<vmem>>, vector<1x160xf32>
    %32 = vector.broadcast %31 : vector<1x160xf32> to vector<16x160xf32>
    %33 = arith.addf %30, %32 : vector<16x160xf32>
    %34 = vector.extract_strided_slice %33 {offsets = [0, 0], sizes = [16, 32], strides = [1, 1]} : vector<16x160xf32> to vector<16x32xf32>
    %35 = vector.shape_cast %34 : vector<16x32xf32> to vector<2x8x32xf32>
    %36 = vector.broadcast %2 : vector<1x8x32xf32> to vector<2x8x32xf32>
    %37 = arith.mulf %35, %36 : vector<2x8x32xf32>
    %38 = vector.extract_strided_slice %33 {offsets = [0, 96], sizes = [16, 32], strides = [1, 1]} : vector<16x160xf32> to vector<16x32xf32>
    %39 = vector.shape_cast %38 : vector<16x32xf32> to vector<2x8x32xf32>
    %40 = vector.broadcast %4 : vector<1x8x32xf32> to vector<2x8x32xf32>
    %41 = arith.mulf %39, %40 : vector<2x8x32xf32>
    %42 = arith.addf %37, %41 : vector<2x8x32xf32>
    %43 = vector.extract_strided_slice %33 {offsets = [0, 32], sizes = [16, 32], strides = [1, 1]} : vector<16x160xf32> to vector<16x32xf32>
    %44 = vector.shape_cast %43 : vector<16x32xf32> to vector<2x8x32xf32>
    %45 = vector.broadcast %2 : vector<1x8x32xf32> to vector<2x8x32xf32>
    %46 = arith.mulf %44, %45 : vector<2x8x32xf32>
    %47 = vector.extract_strided_slice %33 {offsets = [0, 128], sizes = [16, 32], strides = [1, 1]} : vector<16x160xf32> to vector<16x32xf32>
    %48 = vector.shape_cast %47 : vector<16x32xf32> to vector<2x8x32xf32>
    %49 = vector.broadcast %4 : vector<1x8x32xf32> to vector<2x8x32xf32>
    %50 = arith.mulf %48, %49 : vector<2x8x32xf32>
    %51 = arith.addf %46, %50 : vector<2x8x32xf32>
    %52 = vector.extract_strided_slice %33 {offsets = [0, 64], sizes = [16, 32], strides = [1, 1]} : vector<16x160xf32> to vector<16x32xf32>
    %53 = vector.shape_cast %52 : vector<16x32xf32> to vector<2x8x32xf32>
    %54 = vector.shape_cast %42 : vector<2x8x32xf32> to vector<2x8x4x8xf32>
    %55 = tpu.transpose %54, [0, 2, 1, 3] : vector<2x8x4x8xf32> -> vector<2x4x8x8xf32>
    %56 = vector.shape_cast %55 : vector<2x4x8x8xf32> to vector<8x8x8xf32>
    %57 = vector.shape_cast %51 : vector<2x8x32xf32> to vector<2x8x4x8xf32>
    %58 = tpu.transpose %57, [0, 2, 1, 3] : vector<2x8x4x8xf32> -> vector<2x4x8x8xf32>
    %59 = vector.shape_cast %58 : vector<2x4x8x8xf32> to vector<8x8x8xf32>
    %60 = vector.shape_cast %53 : vector<2x8x32xf32> to vector<2x8x4x8xf32>
    %61 = tpu.transpose %60, [0, 2, 1, 3] : vector<2x8x4x8xf32> -> vector<2x4x8x8xf32>
    %62 = vector.shape_cast %61 : vector<2x4x8x8xf32> to vector<8x8x8xf32>
    "tpu.trace_start"() <{level = 10 : i32, message = "gqd,gkd->gqk"}> : () -> ()
    %cst_18 = arith.constant dense<0.000000e+00> : vector<8x8x8xf32>
    %63 = tpu.matmul %56, %59, %cst_18 {dimension_numbers = #tpu.dot_dimension_numbers<[2], [2], [1], [1], [0, 0, 0, 1, 1, 1], [0], [0]>} : vector<8x8x8xf32>, vector<8x8x8xf32>, vector<8x8x8xf32> -> vector<8x8x8xf32>
    "tpu.trace_stop"() : () -> ()
    %c0_19 = arith.constant 0 : index
    %c0_20 = arith.constant 0 : index
    %64 = vector.load %arg4[%c0_19, %c0_20] : memref<8x8xf32, #tpu.memory_space<vmem>>, vector<8x8xf32>
    %65 = vector.shape_cast %64 : vector<8x8xf32> to vector<1x8x8xf32>
    %66 = vector.broadcast %65 : vector<1x8x8xf32> to vector<8x8x8xf32>
    %67 = arith.addf %63, %66 : vector<8x8x8xf32>
    %cst_21 = arith.constant dense<0xFF800000> : vector<8x8xf32>
    %68 = vector.multi_reduction <maximumf>, %67, %cst_21 [2] : vector<8x8x8xf32> to vector<8x8xf32>
    %69 = vector.shape_cast %68 : vector<8x8xf32> to vector<8x8x1xf32>
    %70 = vector.broadcast %69 : vector<8x8x1xf32> to vector<8x8x8xf32>
    %71 = arith.subf %67, %70 : vector<8x8x8xf32>
    %72 = math.exp %71 : vector<8x8x8xf32>
    %cst_22 = arith.constant dense<0.000000e+00> : vector<8x8xf32>
    %73 = vector.multi_reduction <add>, %72, %cst_22 [2] : vector<8x8x8xf32> to vector<8x8xf32>
    %74 = vector.shape_cast %73 : vector<8x8xf32> to vector<8x8x1xf32>
    %75 = tpu.reciprocal %74 : vector<8x8x1xf32> -> vector<8x8x1xf32>
    %76 = vector.broadcast %75 : vector<8x8x1xf32> to vector<8x8x8xf32>
    %77 = arith.mulf %72, %76 : vector<8x8x8xf32>
    "tpu.trace_start"() <{level = 10 : i32, message = "gqk,gkd->gqd"}> : () -> ()
    %cst_23 = arith.constant dense<0.000000e+00> : vector<8x8x8xf32>
    %78 = tpu.matmul %77, %62, %cst_23 {dimension_numbers = #tpu.dot_dimension_numbers<[2], [1], [1], [2], [0, 0, 0, 1, 1, 2], [0], [0]>} : vector<8x8x8xf32>, vector<8x8x8xf32>, vector<8x8x8xf32> -> vector<8x8x8xf32>
    "tpu.trace_stop"() : () -> ()
    %79 = vector.shape_cast %78 : vector<8x8x8xf32> to vector<2x4x8x8xf32>
    %80 = tpu.transpose %79, [0, 2, 1, 3] : vector<2x4x8x8xf32> -> vector<2x8x4x8xf32>
    %81 = vector.shape_cast %80 : vector<2x8x4x8xf32> to vector<16x32xf32>
    %c0_24 = arith.constant 0 : index
    %c0_25 = arith.constant 0 : index
    %82 = vector.load %arg9[%c0_24, %c0_25] : memref<32x32xf32, #tpu.memory_space<vmem>>, vector<32x32xf32>
    %cst_26 = arith.constant dense<0.000000e+00> : vector<16x32xf32>
    %83 = tpu.matmul %81, %82, %cst_26 {dimension_numbers = #tpu.dot_dimension_numbers<[1], [0], [0], [1], [0, 0, 1, 1], [], []>} : vector<16x32xf32>, vector<32x32xf32>, vector<16x32xf32> -> vector<16x32xf32>
    %84 = arith.addf %0, %83 : vector<16x32xf32>
    %c0_27 = arith.constant 0 : index
    %c0_28 = arith.constant 0 : index
    %85 = vector.load %arg10[%c0_27, %c0_28] : memref<1x32xf32, #tpu.memory_space<vmem>>, vector<1x32xf32>
    %86 = vector.broadcast %85 : vector<1x32xf32> to vector<16x32xf32>
    %87 = arith.addf %84, %86 : vector<16x32xf32>
    %c0_29 = arith.constant 0 : index
    %c0_30 = arith.constant 0 : index
    %88 = vector.load %arg11[%c0_29, %c0_30] : memref<1x32xf32, #tpu.memory_space<vmem>>, vector<1x32xf32>
    %c0_31 = arith.constant 0 : index
    %c0_32 = arith.constant 0 : index
    %89 = vector.load %arg12[%c0_31, %c0_32] : memref<1x32xf32, #tpu.memory_space<vmem>>, vector<1x32xf32>
    %cst_33 = arith.constant dense<0.000000e+00> : vector<16xf32>
    %90 = vector.multi_reduction <add>, %87, %cst_33 [1] : vector<16x32xf32> to vector<16xf32>
    %91 = vector.shape_cast %90 : vector<16xf32> to vector<16x1xf32>
    %cst_34 = arith.constant 3.200000e+01 : f32
    %92 = vector.broadcast %cst_34 : f32 to vector<16x1xf32>
    %93 = arith.divf %91, %92 : vector<16x1xf32>
    %94 = vector.broadcast %93 : vector<16x1xf32> to vector<16x32xf32>
    %95 = arith.subf %87, %94 : vector<16x32xf32>
    %96 = arith.mulf %95, %95 : vector<16x32xf32>
    %cst_35 = arith.constant dense<0.000000e+00> : vector<16xf32>
    %97 = vector.multi_reduction <add>, %96, %cst_35 [1] : vector<16x32xf32> to vector<16xf32>
    %98 = vector.shape_cast %97 : vector<16xf32> to vector<16x1xf32>
    %cst_36 = arith.constant 3.200000e+01 : f32
    %99 = vector.broadcast %cst_36 : f32 to vector<16x1xf32>
    %100 = arith.divf %98, %99 : vector<16x1xf32>
    %101 = vector.broadcast %93 : vector<16x1xf32> to vector<16x32xf32>
    %102 = arith.subf %87, %101 : vector<16x32xf32>
    %cst_37 = arith.constant 9.99999974E-6 : f32
    %103 = vector.broadcast %cst_37 : f32 to vector<16x1xf32>
    %104 = arith.addf %100, %103 : vector<16x1xf32>
    %105 = math.rsqrt %104 : vector<16x1xf32>
    %106 = vector.broadcast %105 : vector<16x1xf32> to vector<16x32xf32>
    %107 = arith.mulf %102, %106 : vector<16x32xf32>
    %108 = vector.broadcast %88 : vector<1x32xf32> to vector<16x32xf32>
    %109 = arith.mulf %107, %108 : vector<16x32xf32>
    %110 = vector.broadcast %89 : vector<1x32xf32> to vector<16x32xf32>
    %111 = arith.addf %109, %110 : vector<16x32xf32>
    %c0_38 = arith.constant 0 : index
    %c0_39 = arith.constant 0 : index
    %112 = vector.load %arg13[%c0_38, %c0_39] : memref<32x256xf32, #tpu.memory_space<vmem>>, vector<32x256xf32>
    %cst_40 = arith.constant dense<0.000000e+00> : vector<16x256xf32>
    %113 = tpu.matmul %111, %112, %cst_40 {dimension_numbers = #tpu.dot_dimension_numbers<[1], [0], [0], [1], [0, 0, 1, 1], [], []>} : vector<16x32xf32>, vector<32x256xf32>, vector<16x256xf32> -> vector<16x256xf32>
    %c0_41 = arith.constant 0 : index
    %c0_42 = arith.constant 0 : index
    %114 = vector.load %arg14[%c0_41, %c0_42] : memref<1x256xf32, #tpu.memory_space<vmem>>, vector<1x256xf32>
    %115 = vector.broadcast %114 : vector<1x256xf32> to vector<16x256xf32>
    %116 = arith.addf %113, %115 : vector<16x256xf32>
    %117 = vector.extract_strided_slice %116 {offsets = [0, 0], sizes = [16, 128], strides = [1, 1]} : vector<16x256xf32> to vector<16x128xf32>
    %118 = vector.extract_strided_slice %116 {offsets = [0, 128], sizes = [16, 128], strides = [1, 1]} : vector<16x256xf32> to vector<16x128xf32>
    %119 = arith.negf %118 : vector<16x128xf32>
    %120 = math.exp %119 : vector<16x128xf32>
    %cst_43 = arith.constant 1.000000e+00 : f32
    %121 = vector.broadcast %cst_43 : f32 to vector<16x128xf32>
    %122 = arith.addf %121, %120 : vector<16x128xf32>
    %123 = arith.divf %121, %122 : vector<16x128xf32>
    %124 = arith.mulf %118, %123 : vector<16x128xf32>
    %125 = arith.mulf %117, %124 : vector<16x128xf32>
    %c0_44 = arith.constant 0 : index
    %c0_45 = arith.constant 0 : index
    %126 = vector.load %arg15[%c0_44, %c0_45] : memref<128x32xf32, #tpu.memory_space<vmem>>, vector<128x32xf32>
    %cst_46 = arith.constant dense<0.000000e+00> : vector<16x32xf32>
    %127 = tpu.matmul %125, %126, %cst_46 {dimension_numbers = #tpu.dot_dimension_numbers<[1], [0], [0], [1], [0, 0, 1, 1], [], []>} : vector<16x128xf32>, vector<128x32xf32>, vector<16x32xf32> -> vector<16x32xf32>
    %128 = arith.addf %87, %127 : vector<16x32xf32>
    %c0_47 = arith.constant 0 : index
    %c0_48 = arith.constant 0 : index
    %129 = vector.load %arg16[%c0_47, %c0_48] : memref<1x32xf32, #tpu.memory_space<vmem>>, vector<1x32xf32>
    %130 = vector.broadcast %129 : vector<1x32xf32> to vector<16x32xf32>
    %131 = arith.addf %128, %130 : vector<16x32xf32>
    %c0_49 = arith.constant 0 : index
    %c0_50 = arith.constant 0 : index
    %132 = vector.load %arg17[%c0_49, %c0_50] : memref<16x32xf32, #tpu.memory_space<vmem>>, vector<16x32xf32>
    tpu.vector_store %arg17[%c0_49, %c0_50], %131 {strides = array<i32>} : memref<16x32xf32, #tpu.memory_space<vmem>>, vector<16x32xf32>,
    return
  }
  func.func @transform_0(%arg0: i32) -> (i32, i32) {
    %c0_i32 = arith.constant 0 : i32
    %c0_i32_0 = arith.constant 0 : i32
    return %arg0, %c0_i32 : i32, i32
  }
  func.func @transform_1(%arg0: i32) -> (i32, i32) {
    %c0_i32 = arith.constant 0 : i32
    %c0_i32_0 = arith.constant 0 : i32
    %c0_i32_1 = arith.constant 0 : i32
    return %c0_i32, %c0_i32_0 : i32, i32
  }
  func.func @transform_2(%arg0: i32) -> (i32, i32) {
    %c0_i32 = arith.constant 0 : i32
    %c0_i32_0 = arith.constant 0 : i32
    %c0_i32_1 = arith.constant 0 : i32
    return %c0_i32, %c0_i32_0 : i32, i32
  }
  func.func @transform_3(%arg0: i32) -> (i32, i32) {
    %c0_i32 = arith.constant 0 : i32
    %c0_i32_0 = arith.constant 0 : i32
    %c0_i32_1 = arith.constant 0 : i32
    return %c0_i32, %c0_i32_0 : i32, i32
  }
  func.func @transform_4(%arg0: i32) -> (i32, i32) {
    %c0_i32 = arith.constant 0 : i32
    %c0_i32_0 = arith.constant 0 : i32
    %c0_i32_1 = arith.constant 0 : i32
    return %c0_i32, %c0_i32_0 : i32, i32
  }
  func.func @transform_5(%arg0: i32) -> (i32, i32) {
    %c0_i32 = arith.constant 0 : i32
    %c0_i32_0 = arith.constant 0 : i32
    %c0_i32_1 = arith.constant 0 : i32
    return %c0_i32, %c0_i32_0 : i32, i32
  }
  func.func @transform_6(%arg0: i32) -> (i32, i32) {
    %c0_i32 = arith.constant 0 : i32
    %c0_i32_0 = arith.constant 0 : i32
    %c0_i32_1 = arith.constant 0 : i32
    return %c0_i32, %c0_i32_0 : i32, i32
  }
  func.func @transform_7(%arg0: i32) -> (i32, i32) {
    %c0_i32 = arith.constant 0 : i32
    %c0_i32_0 = arith.constant 0 : i32
    %c0_i32_1 = arith.constant 0 : i32
    return %c0_i32, %c0_i32_0 : i32, i32
  }
  func.func @transform_8(%arg0: i32) -> (i32, i32) {
    %c0_i32 = arith.constant 0 : i32
    %c0_i32_0 = arith.constant 0 : i32
    %c0_i32_1 = arith.constant 0 : i32
    return %c0_i32, %c0_i32_0 : i32, i32
  }
  func.func @transform_9(%arg0: i32) -> (i32, i32) {
    %c0_i32 = arith.constant 0 : i32
    %c0_i32_0 = arith.constant 0 : i32
    %c0_i32_1 = arith.constant 0 : i32
    return %c0_i32, %c0_i32_0 : i32, i32
  }
  func.func @transform_10(%arg0: i32) -> (i32, i32) {
    %c0_i32 = arith.constant 0 : i32
    %c0_i32_0 = arith.constant 0 : i32
    %c0_i32_1 = arith.constant 0 : i32
    return %c0_i32, %c0_i32_0 : i32, i32
  }
  func.func @transform_11(%arg0: i32) -> (i32, i32) {
    %c0_i32 = arith.constant 0 : i32
    %c0_i32_0 = arith.constant 0 : i32
    %c0_i32_1 = arith.constant 0 : i32
    return %c0_i32, %c0_i32_0 : i32, i32
  }
  func.func @transform_12(%arg0: i32) -> (i32, i32) {
    %c0_i32 = arith.constant 0 : i32
    %c0_i32_0 = arith.constant 0 : i32
    %c0_i32_1 = arith.constant 0 : i32
    return %c0_i32, %c0_i32_0 : i32, i32
  }
  func.func @transform_13(%arg0: i32) -> (i32, i32) {
    %c0_i32 = arith.constant 0 : i32
    %c0_i32_0 = arith.constant 0 : i32
    %c0_i32_1 = arith.constant 0 : i32
    return %c0_i32, %c0_i32_0 : i32, i32
  }
  func.func @transform_14(%arg0: i32) -> (i32, i32) {
    %c0_i32 = arith.constant 0 : i32
    %c0_i32_0 = arith.constant 0 : i32
    %c0_i32_1 = arith.constant 0 : i32
    return %c0_i32, %c0_i32_0 : i32, i32
  }
  func.func @transform_15(%arg0: i32) -> (i32, i32) {
    %c0_i32 = arith.constant 0 : i32
    %c0_i32_0 = arith.constant 0 : i32
    %c0_i32_1 = arith.constant 0 : i32
    return %c0_i32, %c0_i32_0 : i32, i32
  }
  func.func @transform_16(%arg0: i32) -> (i32, i32) {
    %c0_i32 = arith.constant 0 : i32
    %c0_i32_0 = arith.constant 0 : i32
    return %arg0, %c0_i32 : i32, i32
  }
}

</mosaic_0001>

<llo_original>
// kernel: tpu_custom_call.1
$region0: #{tpu_custom_call.1}
  #allocation0 [shape = 'u32[]', space=smem, size = 0x4, offset = 0x4, fixed_abs, tag = 'smem constant byte address 0x4 - core index']
  #allocation1 [shape = 'u32[144,128]{1,0:T(1,128)}', space=vmem, size = 0x12000, scoped, tag = 'internal scratch']
  %s0 = inlined_call_operand.hbm [shape: f32[16,32], index: 0, kind: input, shape index: {}]
  %s1 = inlined_call_operand.hbm [shape: f32[8,32], index: 1, kind: input, shape index: {}]
  %s2 = inlined_call_operand.hbm [shape: f32[8,32], index: 2, kind: input, shape index: {}]
  %s3 = inlined_call_operand.hbm [shape: f32[8,8], index: 3, kind: input, shape index: {}]
  %s4 = inlined_call_operand.vmem [shape: f32[1,32], index: 4, kind: input, shape index: {}]
  %s5 = inlined_call_operand.vmem [shape: f32[1,32], index: 5, kind: input, shape index: {}]
  %s6 = inlined_call_operand.vmem [shape: f32[32,160], index: 6, kind: input, shape index: {}]
  %s7 = inlined_call_operand.vmem [shape: f32[1,160], index: 7, kind: input, shape index: {}]
  %s8 = inlined_call_operand.vmem [shape: f32[32,32], index: 8, kind: input, shape index: {}]
  %s9 = inlined_call_operand.vmem [shape: f32[1,32], index: 9, kind: input, shape index: {}]
  %s10 = inlined_call_operand.vmem [shape: f32[1,32], index: 10, kind: input, shape index: {}]
  %s11 = inlined_call_operand.vmem [shape: f32[1,32], index: 11, kind: input, shape index: {}]
  %s12 = inlined_call_operand.vmem [shape: f32[32,256], index: 12, kind: input, shape index: {}]
  %s13 = inlined_call_operand.vmem [shape: f32[1,256], index: 13, kind: input, shape index: {}]
  %s14 = inlined_call_operand.vmem [shape: f32[128,32], index: 14, kind: input, shape index: {}]
  %s15 = inlined_call_operand.vmem [shape: f32[1,32], index: 15, kind: input, shape index: {}]
  %s16 = inlined_call_operand.hbm [shape: f32[16,32], index: 16, kind: output, shape index: {}]
  %s17 = sld [smem:[#allocation0]]
  $region90: #{tpu_custom_call.1} parent=0
    _
  %s19 = ssub.s32 1, %s17
  %s20 = scalar_select 0, %s19, %s17
  $region1: #{tpu_custom_call.1} parent=0
    #allocation2 [shape = 'u8[8192]{0}', space=vmem, size = 0x2000, scoped, tag = 'input window, operand 0, single buffered']
    #allocation3 [shape = 's32[1]{0}', space=sflag, size = 0x4, scoped, tag = 'scoped memory for tpu_custom_call.1']
    #allocation4 [shape = 's32[1]{0}', space=sflag, size = 0x4, scoped, tag = 'scoped memory for tpu_custom_call.1']
    #allocation5 [shape = 'u8[4096]{0}', space=vmem, size = 0x1000, scoped, tag = 'input window, operand 1, single buffered']
    #allocation6 [shape = 's32[1]{0}', space=sflag, size = 0x4, scoped, tag = 'scoped memory for tpu_custom_call.1']
    #allocation7 [shape = 'u8[4096]{0}', space=vmem, size = 0x1000, scoped, tag = 'input window, operand 2, single buffered']
    #allocation8 [shape = 'u8[4096]{0}', space=vmem, size = 0x1000, scoped, tag = 'input window, operand 3, single buffered']
    #allocation9 [shape = 's32[1]{0}', space=sflag, size = 0x4, scoped, tag = 'scoped memory for tpu_custom_call.1']
    #allocation10 [shape = 'u8[8192]{0}', space=vmem, size = 0x2000, scoped, tag = 'output window, operand 0, single buffered']
    %21 = vsyncpa [#allocation3], 0
    %22 = vsyncpa [#allocation6], 0
    %23 = vsyncpa [#allocation9], 0
    %24 = vsyncpa [#allocation4], 0
    // Predicated region
    $region2: #{tpu_custom_call.1} parent=1 // pred_check
      _
    $region3: #{tpu_custom_call.1} parent=1 // pred_check_branch
      %26 = sbr.rel (0) target = $region5
    $region4: #{tpu_custom_call.1} parent=1 // pred_region
      %s28 = ssub.s32 256, 256
      %29 = vsyncadd [#allocation3], %s28
      %s30 = sshll.u32 [#allocation2], 4
      %s31 = int_to_ptr.vmem [resolvable:$true] %s30
      %36 = dma.hbm_to_vmem [thread:$0]  %s0, 256, %s31, [#allocation3], 128, 128, 8
    $region5: #{tpu_custom_call.1} parent=1 // pred_fallthru
      _
    // Predicated region
    $region6: #{tpu_custom_call.1} parent=1 // pred_check
      _
    $region7: #{tpu_custom_call.1} parent=1 // pred_check_branch
      %38 = sbr.rel (0) target = $region9
    $region8: #{tpu_custom_call.1} parent=1 // pred_region
      %s40 = ssub.s32 128, 128
      %41 = vsyncadd [#allocation6], %s40
      %s43 = sshll.u32 [#allocation5], 4
      %s44 = int_to_ptr.vmem [resolvable:$true] %s43
      %46 = dma.hbm_to_vmem [thread:$0]  %s1, 128, %s44, [#allocation6]
    $region9: #{tpu_custom_call.1} parent=1 // pred_fallthru
      _
    // Predicated region
    $region10: #{tpu_custom_call.1} parent=1 // pred_check
      _
    $region11: #{tpu_custom_call.1} parent=1 // pred_check_branch
      %48 = sbr.rel (0) target = $region13
    $region12: #{tpu_custom_call.1} parent=1 // pred_region
      %s50 = ssub.s32 128, 128
      %51 = vsyncadd [#allocation6], %s50
      %s53 = sshll.u32 [#allocation7], 4
      %s54 = int_to_ptr.vmem [resolvable:$true] %s53
      %56 = dma.hbm_to_vmem [thread:$0]  %s2, 128, %s54, [#allocation6]
    $region13: #{tpu_custom_call.1} parent=1 // pred_fallthru
      _
    // Predicated region
    $region14: #{tpu_custom_call.1} parent=1 // pred_check
      _
    $region15: #{tpu_custom_call.1} parent=1 // pred_check_branch
      %58 = sbr.rel (0) target = $region17
    $region16: #{tpu_custom_call.1} parent=1 // pred_region
      %s60 = ssub.s32 128, 128
      %61 = vsyncadd [#allocation9], %s60
      %s63 = sshll.u32 [#allocation8], 4
      %s64 = int_to_ptr.vmem [resolvable:$true] %s63
      %66 = dma.hbm_to_vmem [thread:$0]  %s3, 128, %s64, [#allocation9]
    $region17: #{tpu_custom_call.1} parent=1 // pred_fallthru
      _
    // Predicated region
    $region18: #{tpu_custom_call.1} parent=1 // pred_check
      _
    $region19: #{tpu_custom_call.1} parent=1 // pred_check_branch
      %68 = sbr.rel (0) target = $region21
    $region20: #{tpu_custom_call.1} parent=1 // pred_region
      _
    $region21: #{tpu_custom_call.1} parent=1 // pred_fallthru
      _
    // Predicated region
    $region22: #{tpu_custom_call.1} parent=1 // pred_check
      _
    $region23: #{tpu_custom_call.1} parent=1 // pred_check_branch
      %70 = sbr.rel (0) target = $region25
    $region24: #{tpu_custom_call.1} parent=1 // pred_region
      _
    $region25: #{tpu_custom_call.1} parent=1 // pred_fallthru
      _
    // Predicated region
    $region26: #{tpu_custom_call.1} parent=1 // pred_check
      _
    $region27: #{tpu_custom_call.1} parent=1 // pred_check_branch
      %72 = sbr.rel (0) target = $region29
    $region28: #{tpu_custom_call.1} parent=1 // pred_region
      _
    $region29: #{tpu_custom_call.1} parent=1 // pred_fallthru
      _
    // Predicated region
    $region30: #{tpu_custom_call.1} parent=1 // pred_check
      _
    $region31: #{tpu_custom_call.1} parent=1 // pred_check_branch
      %74 = sbr.rel (0) target = $region33
    $region32: #{tpu_custom_call.1} parent=1 // pred_region
      _
    $region33: #{tpu_custom_call.1} parent=1 // pred_fallthru
      _
    // Predicated region
    $region34: #{tpu_custom_call.1} parent=1 // pred_check
      _
    $region35: #{tpu_custom_call.1} parent=1 // pred_check_branch
      %76 = sbr.rel (0) target = $region37
    $region36: #{tpu_custom_call.1} parent=1 // pred_region
      _
    $region37: #{tpu_custom_call.1} parent=1 // pred_fallthru
      _
    // Predicated region
    $region38: #{tpu_custom_call.1} parent=1 // pred_check
      _
    $region39: #{tpu_custom_call.1} parent=1 // pred_check_branch
      %78 = sbr.rel (0) target = $region41
    $region40: #{tpu_custom_call.1} parent=1 // pred_region
      _
    $region41: #{tpu_custom_call.1} parent=1 // pred_fallthru
      _
    // Predicated region
    $region42: #{tpu_custom_call.1} parent=1 // pred_check
      _
    $region43: #{tpu_custom_call.1} parent=1 // pred_check_branch
      %80 = sbr.rel (0) target = $region45
    $region44: #{tpu_custom_call.1} parent=1 // pred_region
      _
    $region45: #{tpu_custom_call.1} parent=1 // pred_fallthru
      _
    // Predicated region
    $region46: #{tpu_custom_call.1} parent=1 // pred_check
      _
    $region47: #{tpu_custom_call.1} parent=1 // pred_check_branch
      %82 = sbr.rel (0) target = $region49
    $region48: #{tpu_custom_call.1} parent=1 // pred_region
      _
    $region49: #{tpu_custom_call.1} parent=1 // pred_fallthru
      _
    // Predicated region
    $region50: #{tpu_custom_call.1} parent=1 // pred_check
      _
    $region51: #{tpu_custom_call.1} parent=1 // pred_check_branch
      %84 = sbr.rel (0) target = $region53
    $region52: #{tpu_custom_call.1} parent=1 // pred_region
      _
    $region53: #{tpu_custom_call.1} parent=1 // pred_fallthru
      _
    // Predicated region
    $region54: #{tpu_custom_call.1} parent=1 // pred_check
      _
    $region55: #{tpu_custom_call.1} parent=1 // pred_check_branch
      %86 = sbr.rel (0) target = $region57
    $region56: #{tpu_custom_call.1} parent=1 // pred_region
      _
    $region57: #{tpu_custom_call.1} parent=1 // pred_fallthru
      _
    // Predicated region
    $region58: #{tpu_custom_call.1} parent=1 // pred_check
      _
    $region59: #{tpu_custom_call.1} parent=1 // pred_check_branch
      %88 = sbr.rel (0) target = $region61
    $region60: #{tpu_custom_call.1} parent=1 // pred_region
      _
    $region61: #{tpu_custom_call.1} parent=1 // pred_fallthru
      _
    // Predicated region
    $region62: #{tpu_custom_call.1} parent=1 // pred_check
      _
    $region63: #{tpu_custom_call.1} parent=1 // pred_check_branch
      %90 = sbr.rel (0) target = $region65
    $region64: #{tpu_custom_call.1} parent=1 // pred_region
      _
    $region65: #{tpu_custom_call.1} parent=1 // pred_fallthru
      _
    // Predicated region
    $region66: #{tpu_custom_call.1} parent=1 // pred_check
      _
    $region67: #{tpu_custom_call.1} parent=1 // pred_check_branch
      %92 = sbr.rel (0) target = $region69
    $region68: #{tpu_custom_call.1} parent=1 // pred_region
      %93 = dma.done [#allocation3], 256
    $region69: #{tpu_custom_call.1} parent=1 // pred_fallthru
      _
    // Predicated region
    $region70: #{tpu_custom_call.1} parent=1 // pred_check
      _
    $region71: #{tpu_custom_call.1} parent=1 // pred_check_branch
      %95 = sbr.rel (0) target = $region73
    $region72: #{tpu_custom_call.1} parent=1 // pred_region
      %96 = dma.done [#allocation6], 128
    $region73: #{tpu_custom_call.1} parent=1 // pred_fallthru
      _
    // Predicated region
    $region74: #{tpu_custom_call.1} parent=1 // pred_check
      _
    $region75: #{tpu_custom_call.1} parent=1 // pred_check_branch
      %98 = sbr.rel (0) target = $region77
    $region76: #{tpu_custom_call.1} parent=1 // pred_region
      %99 = dma.done [#allocation6], 128
    $region77: #{tpu_custom_call.1} parent=1 // pred_fallthru
      _
    // Predicated region
    $region78: #{tpu_custom_call.1} parent=1 // pred_check
      _
    $region79: #{tpu_custom_call.1} parent=1 // pred_check_branch
      %101 = sbr.rel (0) target = $region81
    $region80: #{tpu_custom_call.1} parent=1 // pred_region
      %102 = dma.done [#allocation9], 128
    $region81: #{tpu_custom_call.1} parent=1 // pred_fallthru
      _
    %v103 = vld [vmem:[#allocation2] sm:$0xff]
    %v104 = vld [vmem:[#allocation2 + $0x8] sm:$0xff]
    %v105 = vld [vmem:[#allocation5] sm:$0xff]
    %v106 = vld [vmem:[#allocation7] sm:$0xff]
    %v107 = vld [vmem:[%s4] sm:$0x1]
    %v108 = vld [vmem:[%s5] sm:$0x1]
    %vm109 = vcmask 261120
    %v110 = vsel %vm109, %v103, 0.0
    %111 = vadd.xlane.f32.xlu0 %v110
    %v112 = vpop.xlane.xlu0 %111
    %v113 = vsel %vm109, %v104, 0.0
    %114 = vadd.xlane.f32.xlu0 %v113
    %v115 = vpop.xlane.xlu0 %114
    %v116 = vrcp.pop 32.0
    %v117 = vmul.f32 %v112, %v116
    %v118 = vmul.f32 %v115, %v116
    %v119 = vsub.f32 %v103, %v117
    %v120 = vsub.f32 %v104, %v118
    %v121 = vmul.f32 %v119, %v119
    %v122 = vmul.f32 %v120, %v120
    %v123 = vsel %vm109, %v121, 0.0
    %124 = vadd.xlane.f32.xlu0 %v123
    %v125 = vpop.xlane.xlu0 %124
    %v126 = vsel %vm109, %v122, 0.0
    %127 = vadd.xlane.f32.xlu0 %v126
    %v128 = vpop.xlane.xlu0 %127
    %v129 = vmul.f32 %v125, %v116
    %v130 = vmul.f32 %v128, %v116
    %v131 = vadd.f32 %v129, 1e-05
    %v132 = vadd.f32 %v130, 1e-05
    %v133 = vrsqrt.pop %v131
    %v134 = vrsqrt.pop %v132
    %v135 = vmul.f32 %v119, %v133
    %v136 = vmul.f32 %v120, %v134
    %v138 = vlaneseq
    %v139 = vshrl.u32 %v138, 7
    %v140 = vsub.s32 0, %v139
    %v141 = vrot.slane %v107, %v140
    %v143 = vmul.f32 %v135, %v141
    %v144 = vmul.f32 %v136, %v141
    %v146 = vlaneseq
    %v147 = vshrl.u32 %v146, 7
    %v148 = vsub.s32 0, %v147
    %v149 = vrot.slane %v108, %v148
    %v151 = vadd.f32 %v143, %v149
    %v152 = vadd.f32 %v144, %v149
    %v153 = vld [vmem:[%s6] sm:$0xff]
    %v154 = vld [vmem:[%s6 + $0x8] sm:$0xff]
    %v155 = vld [vmem:[%s6 + $0x10] sm:$0xff]
    %v156 = vld [vmem:[%s6 + $0x18] sm:$0xff]
    %v157 = vld [vmem:[%s6 + $0x20] sm:$0xff]
    %v158 = vld [vmem:[%s6 + $0x28] sm:$0xff]
    %v159 = vld [vmem:[%s6 + $0x30] sm:$0xff]
    %v160 = vld [vmem:[%s6 + $0x38] sm:$0xff]
    %v161 = vld [vmem:[%s7] sm:$0x3]
    %v163 = vlaneseq
    %v164 = vshrl.u32 %v163, 7
    %v165 = vsub.s32 0, %v164
    %v166 = vrot.slane %v161, %v165
    %v167 = vlaneseq
    %v168 = vshrl.u32 %v167, 7
    %v169 = vsub.s32 1, %v168
    %v170 = vrot.slane %v161, %v169
    %v174 = vsel %vm109, %v151, 0
    %v177 = vsel %vm109, %v152, 0
    %179 = vmatprep.subr.mxu0 0.0
    %180 = vmatpush1.msra.mxu0 0.0
    %181 = vmatprep.subr.mxu0 0.0
    %182 = vmatpush1.msra.mxu0 0.0
    %183 = vmatprep.subr.mxu0 0.0
    %184 = vmatpush1.msra.mxu0 0.0
    %185 = vmatprep.subr.mxu0 0.0
    %186 = vmatpush1.msra.mxu0 0.0
    %187 = vmatprep.subr.mxu0 0.0
    %188 = vmatpush1.msra.mxu0 0.0
    %189 = vmatprep.subr.mxu0 0.0
    %190 = vmatpush1.msra.mxu0 0.0
    %191 = vmatprep.subr.mxu0 0.0
    %192 = vmatpush1.msra.mxu0 0.0
    %193 = vmatprep.subr.mxu0 0.0
    %194 = vmatpush1.msra.mxu0 0.0
    %195 = vmatprep.subr.mxu0 0.0
    %196 = vmatpush1.msra.mxu0 0.0
    %197 = vmatprep.subr.mxu0 0.0
    %198 = vmatpush1.msra.mxu0 0.0
    %199 = vmatprep.subr.mxu0 0.0
    %200 = vmatpush1.msra.mxu0 0.0
    %201 = vmatprep.subr.mxu0 0.0
    %202 = vmatpush1.msra.mxu0 0.0
    %203 = vmatprep.subr.mxu0 %v160
    %204 = vmatpush1.msra.mxu0 %v159
    %205 = vmatprep.subr.mxu0 %v158
    %206 = vmatpush1.msra.mxu0 %v157
    %207 = vmatprep.subr.mxu0 %v156
    %208 = vmatpush1.msra.mxu0 %v155
    %209 = vmatprep.subr.mxu0 %v154
    %210 = vmatpush1.msra.mxu0 %v153
    %211 = vmatprep.subr.mxu0 0.0
    %212 = vmatpush2.msra.mxu0 0.0
    %213 = vmatprep.subr.mxu0 0.0
    %214 = vmatpush2.msra.mxu0 0.0
    %215 = vmatprep.subr.mxu0 0.0
    %216 = vmatpush2.msra.mxu0 0.0
    %217 = vmatprep.subr.mxu0 0.0
    %218 = vmatpush2.msra.mxu0 0.0
    %219 = vmatprep.subr.mxu0 0.0
    %220 = vmatpush2.msra.mxu0 0.0
    %221 = vmatprep.subr.mxu0 0.0
    %222 = vmatpush2.msra.mxu0 0.0
    %223 = vmatprep.subr.mxu0 0.0
    %224 = vmatpush2.msra.mxu0 0.0
    %225 = vmatprep.subr.mxu0 0.0
    %226 = vmatpush2.msra.mxu0 0.0
    %227 = vmatprep.subr.mxu0 0.0
    %228 = vmatpush2.msra.mxu0 0.0
    %229 = vmatprep.subr.mxu0 0.0
    %230 = vmatpush2.msra.mxu0 0.0
    %231 = vmatprep.subr.mxu0 0.0
    %232 = vmatpush2.msra.mxu0 0.0
    %233 = vmatprep.subr.mxu0 0.0
    %234 = vmatpush2.msra.mxu0 0.0
    %235 = vmatprep.subr.mxu0 0.0
    %236 = vmatpush2.msra.mxu0 0.0
    %237 = vmatprep.subr.mxu0 0.0
    %238 = vmatpush2.msra.mxu0 0.0
    %239 = vmatprep.subr.mxu0 0.0
    %240 = vmatpush2.msra.mxu0 0.0
    %241 = vmatprep.subr.mxu0 0.0
    %242 = vmatpush2.msra.mxu0 0.0
    %243 = vmatprep.mubr.f32.mxu0 0.0
    %244 = vmatmul.mubr.f32.gmra.mxu0 %v174
    %v245 = vpop.f32.mrf.mxu0
    %v246 = vadd.f32 %v166, %v245
    %v247 = vpop.f32.mrf.mxu0
    %v248 = vadd.f32 %v170, %v247
    %249 = vmatprep.mubr.f32.mxu0 0.0
    %250 = vmatmul.mubr.f32.gmra.mxu0 %v177
    %v251 = vpop.f32.mrf.mxu0
    %v252 = vadd.f32 %v166, %v251
    %v253 = vpop.f32.mrf.mxu0
    %v254 = vadd.f32 %v170, %v253
    %255 = vdwg.mxu0
    %v256 = vmul.f32 %v246, %v105
    %v257 = vmul.f32 %v252, %v105
    %259 = vrot.lane.b32.xlu0 %v106, 96
    %v260 = vpop.permute.xlu0 %259
    %v262 = vmul.f32 %v246, %v260
    %v263 = vmul.f32 %v252, %v260
    %266 = vrot.lane.b32.xlu0 %v262, 32
    %v267 = vpop.permute.xlu0 %266
    %268 = vrot.lane.b32.xlu0 %v263, 32
    %v269 = vpop.permute.xlu0 %268
    %v272 = vadd.f32 %v256, %v267
    %v273 = vadd.f32 %v257, %v269
    %275 = vrot.lane.b32.xlu0 %v105, 32
    %v276 = vpop.permute.xlu0 %275
    %v278 = vmul.f32 %v246, %v276
    %v279 = vmul.f32 %v252, %v276
    %v280 = vmul.f32 %v248, %v106
    %v281 = vmul.f32 %v254, %v106
    %284 = vrot.lane.b32.xlu0 %v280, 32
    %v285 = vpop.permute.xlu0 %284
    %286 = vrot.lane.b32.xlu0 %v281, 32
    %v287 = vpop.permute.xlu0 %286
    %v290 = vadd.f32 %v278, %v285
    %v291 = vadd.f32 %v279, %v287
    %294 = vrot.lane.b32.xlu0 %v272, 120
    %v295 = vpop.permute.xlu0 %294
    %296 = vrot.lane.b32.xlu0 %v273, 120
    %v297 = vpop.permute.xlu0 %296
    %300 = vrot.lane.b32.xlu0 %v272, 112
    %v301 = vpop.permute.xlu0 %300
    %302 = vrot.lane.b32.xlu0 %v273, 112
    %v303 = vpop.permute.xlu0 %302
    %306 = vrot.lane.b32.xlu0 %v272, 104
    %v307 = vpop.permute.xlu0 %306
    %308 = vrot.lane.b32.xlu0 %v273, 104
    %v309 = vpop.permute.xlu0 %308
    %v312 = vcombine.low %v272, %v301
    %v313 = vcombine.high %v272, %v301
    %v315 = vunpack.c.l.s4 1983009808
    %v316 = vunpack.c.0.s8 %v315
    %v317 = vlaneseq
    %v318 = vshrl.u32 %v317, 7
    %v319 = vsub.s32 %v316, %v318
    %v320 = vrot.slane %v312, %v319
    %v322 = vunpack.c.l.s4 1983009808
    %v323 = vunpack.c.0.s8 %v322
    %v324 = vlaneseq
    %v325 = vshrl.u32 %v324, 7
    %v326 = vsub.s32 %v323, %v325
    %v327 = vrot.slane %v313, %v326
    %v328 = vcombine.low %v295, %v307
    %v329 = vcombine.high %v295, %v307
    %v331 = vunpack.c.l.s4 1983009808
    %v332 = vunpack.c.0.s8 %v331
    %v333 = vlaneseq
    %v334 = vshrl.u32 %v333, 7
    %v335 = vsub.s32 %v332, %v334
    %v336 = vrot.slane %v328, %v335
    %v338 = vunpack.c.l.s4 1983009808
    %v339 = vunpack.c.0.s8 %v338
    %v340 = vlaneseq
    %v341 = vshrl.u32 %v340, 7
    %v342 = vsub.s32 %v339, %v341
    %v343 = vrot.slane %v329, %v342
    %v344 = vcombine.low %v320, %v336
    %v345 = vcombine.high %v320, %v336
    %v347 = vunpack.c.l.s4 1934713408
    %v348 = vunpack.c.0.s8 %v347
    %v349 = vlaneseq
    %v350 = vshrl.u32 %v349, 7
    %v351 = vsub.s32 %v348, %v350
    %v352 = vrot.slane %v344, %v351
    %v354 = vunpack.c.l.s4 1934713408
    %v355 = vunpack.c.0.s8 %v354
    %v356 = vlaneseq
    %v357 = vshrl.u32 %v356, 7
    %v358 = vsub.s32 %v355, %v357
    %v359 = vrot.slane %v345, %v358
    %v360 = vcombine.low %v327, %v343
    %v361 = vcombine.high %v327, %v343
    %v363 = vunpack.c.l.s4 1934713408
    %v364 = vunpack.c.0.s8 %v363
    %v365 = vlaneseq
    %v366 = vshrl.u32 %v365, 7
    %v367 = vsub.s32 %v364, %v366
    %v368 = vrot.slane %v360, %v367
    %v370 = vunpack.c.l.s4 1934713408
    %v371 = vunpack.c.0.s8 %v370
    %v372 = vlaneseq
    %v373 = vshrl.u32 %v372, 7
    %v374 = vsub.s32 %v371, %v373
    %v375 = vrot.slane %v361, %v374
    %v376 = vcombine.high %v352, 0.0
    %v377 = vcombine.high %v359, 0.0
    %v378 = vcombine.high %v368, 0.0
    %v379 = vcombine.high %v375, 0.0
    %v380 = vcombine.low %v273, %v303
    %v381 = vcombine.high %v273, %v303
    %v383 = vunpack.c.l.s4 1983009808
    %v384 = vunpack.c.0.s8 %v383
    %v385 = vlaneseq
    %v386 = vshrl.u32 %v385, 7
    %v387 = vsub.s32 %v384, %v386
    %v388 = vrot.slane %v380, %v387
    %v390 = vunpack.c.l.s4 1983009808
    %v391 = vunpack.c.0.s8 %v390
    %v392 = vlaneseq
    %v393 = vshrl.u32 %v392, 7
    %v394 = vsub.s32 %v391, %v393
    %v395 = vrot.slane %v381, %v394
    %v396 = vcombine.low %v297, %v309
    %v397 = vcombine.high %v297, %v309
    %v399 = vunpack.c.l.s4 1983009808
    %v400 = vunpack.c.0.s8 %v399
    %v401 = vlaneseq
    %v402 = vshrl.u32 %v401, 7
    %v403 = vsub.s32 %v400, %v402
    %v404 = vrot.slane %v396, %v403
    %v406 = vunpack.c.l.s4 1983009808
    %v407 = vunpack.c.0.s8 %v406
    %v408 = vlaneseq
    %v409 = vshrl.u32 %v408, 7
    %v410 = vsub.s32 %v407, %v409
    %v411 = vrot.slane %v397, %v410
    %v412 = vcombine.low %v388, %v404
    %v413 = vcombine.high %v388, %v404
    %v415 = vunpack.c.l.s4 1934713408
    %v416 = vunpack.c.0.s8 %v415
    %v417 = vlaneseq
    %v418 = vshrl.u32 %v417, 7
    %v419 = vsub.s32 %v416, %v418
    %v420 = vrot.slane %v412, %v419
    %v422 = vunpack.c.l.s4 1934713408
    %v423 = vunpack.c.0.s8 %v422
    %v424 = vlaneseq
    %v425 = vshrl.u32 %v424, 7
    %v426 = vsub.s32 %v423, %v425
    %v427 = vrot.slane %v413, %v426
    %v428 = vcombine.low %v395, %v411
    %v429 = vcombine.high %v395, %v411
    %v431 = vunpack.c.l.s4 1934713408
    %v432 = vunpack.c.0.s8 %v431
    %v433 = vlaneseq
    %v434 = vshrl.u32 %v433, 7
    %v435 = vsub.s32 %v432, %v434
    %v436 = vrot.slane %v428, %v435
    %v438 = vunpack.c.l.s4 1934713408
    %v439 = vunpack.c.0.s8 %v438
    %v440 = vlaneseq
    %v441 = vshrl.u32 %v440, 7
    %v442 = vsub.s32 %v439, %v441
    %v443 = vrot.slane %v429, %v442
    %v444 = vcombine.high %v420, 0.0
    %v445 = vcombine.high %v427, 0.0
    %v446 = vcombine.high %v436, 0.0
    %v447 = vcombine.high %v443, 0.0
    %v448 = vcombine.low %v352, %v359
    %v450 = vunpack.c.l.s4 1983009808
    %v451 = vunpack.c.0.s8 %v450
    %v452 = vlaneseq
    %v453 = vshrl.u32 %v452, 7
    %v454 = vsub.s32 %v451, %v453
    %v455 = vrot.slane %v448, %v454
    %v456 = vcombine.low %v376, %v377
    %v458 = vunpack.c.l.s4 1983009808
    %v459 = vunpack.c.0.s8 %v458
    %v460 = vlaneseq
    %v461 = vshrl.u32 %v460, 7
    %v462 = vsub.s32 %v459, %v461
    %v463 = vrot.slane %v456, %v462
    %v464 = vcombine.low %v368, %v375
    %v466 = vunpack.c.l.s4 1983009808
    %v467 = vunpack.c.0.s8 %v466
    %v468 = vlaneseq
    %v469 = vshrl.u32 %v468, 7
    %v470 = vsub.s32 %v467, %v469
    %v471 = vrot.slane %v464, %v470
    %v472 = vcombine.low %v378, %v379
    %v474 = vunpack.c.l.s4 1983009808
    %v475 = vunpack.c.0.s8 %v474
    %v476 = vlaneseq
    %v477 = vshrl.u32 %v476, 7
    %v478 = vsub.s32 %v475, %v477
    %v479 = vrot.slane %v472, %v478
    %v480 = vcombine.low %v455, %v463
    %v481 = vcombine.high %v455, %v463
    %v483 = vunpack.c.l.s4 1934713408
    %v484 = vunpack.c.0.s8 %v483
    %v485 = vlaneseq
    %v486 = vshrl.u32 %v485, 7
    %v487 = vsub.s32 %v484, %v486
    %v488 = vrot.slane %v480, %v487
    %v490 = vunpack.c.l.s4 1934713408
    %v491 = vunpack.c.0.s8 %v490
    %v492 = vlaneseq
    %v493 = vshrl.u32 %v492, 7
    %v494 = vsub.s32 %v491, %v493
    %v495 = vrot.slane %v481, %v494
    %v496 = vcombine.low %v471, %v479
    %v497 = vcombine.high %v471, %v479
    %v499 = vunpack.c.l.s4 1934713408
    %v500 = vunpack.c.0.s8 %v499
    %v501 = vlaneseq
    %v502 = vshrl.u32 %v501, 7
    %v503 = vsub.s32 %v500, %v502
    %v504 = vrot.slane %v496, %v503
    %v506 = vunpack.c.l.s4 1934713408
    %v507 = vunpack.c.0.s8 %v506
    %v508 = vlaneseq
    %v509 = vshrl.u32 %v508, 7
    %v510 = vsub.s32 %v507, %v509
    %v511 = vrot.slane %v497, %v510
    %v512 = vcombine.low %v488, %v504
    %v513 = vcombine.high %v488, %v504
    %v514 = vcombine.low %v495, %v511
    %v515 = vcombine.high %v495, %v511
    %v516 = vcombine.low %v420, %v427
    %v518 = vunpack.c.l.s4 1983009808
    %v519 = vunpack.c.0.s8 %v518
    %v520 = vlaneseq
    %v521 = vshrl.u32 %v520, 7
    %v522 = vsub.s32 %v519, %v521
    %v523 = vrot.slane %v516, %v522
    %v524 = vcombine.low %v444, %v445
    %v526 = vunpack.c.l.s4 1983009808
    %v527 = vunpack.c.0.s8 %v526
    %v528 = vlaneseq
    %v529 = vshrl.u32 %v528, 7
    %v530 = vsub.s32 %v527, %v529
    %v531 = vrot.slane %v524, %v530
    %v532 = vcombine.low %v436, %v443
    %v534 = vunpack.c.l.s4 1983009808
    %v535 = vunpack.c.0.s8 %v534
    %v536 = vlaneseq
    %v537 = vshrl.u32 %v536, 7
    %v538 = vsub.s32 %v535, %v537
    %v539 = vrot.slane %v532, %v538
    %v540 = vcombine.low %v446, %v447
    %v542 = vunpack.c.l.s4 1983009808
    %v543 = vunpack.c.0.s8 %v542
    %v544 = vlaneseq
    %v545 = vshrl.u32 %v544, 7
    %v546 = vsub.s32 %v543, %v545
    %v547 = vrot.slane %v540, %v546
    %v548 = vcombine.low %v523, %v531
    %v549 = vcombine.high %v523, %v531
    %v551 = vunpack.c.l.s4 1934713408
    %v552 = vunpack.c.0.s8 %v551
    %v553 = vlaneseq
    %v554 = vshrl.u32 %v553, 7
    %v555 = vsub.s32 %v552, %v554
    %v556 = vrot.slane %v548, %v555
    %v558 = vunpack.c.l.s4 1934713408
    %v559 = vunpack.c.0.s8 %v558
    %v560 = vlaneseq
    %v561 = vshrl.u32 %v560, 7
    %v562 = vsub.s32 %v559, %v561
    %v563 = vrot.slane %v549, %v562
    %v564 = vcombine.low %v539, %v547
    %v565 = vcombine.high %v539, %v547
    %v567 = vunpack.c.l.s4 1934713408
    %v568 = vunpack.c.0.s8 %v567
    %v569 = vlaneseq
    %v570 = vshrl.u32 %v569, 7
    %v571 = vsub.s32 %v568, %v570
    %v572 = vrot.slane %v564, %v571
    %v574 = vunpack.c.l.s4 1934713408
    %v575 = vunpack.c.0.s8 %v574
    %v576 = vlaneseq
    %v577 = vshrl.u32 %v576, 7
    %v578 = vsub.s32 %v575, %v577
    %v579 = vrot.slane %v565, %v578
    %v580 = vcombine.low %v556, %v572
    %v581 = vcombine.high %v556, %v572
    %v582 = vcombine.low %v563, %v579
    %v583 = vcombine.high %v563, %v579
    %586 = vrot.lane.b32.xlu0 %v290, 120
    %v587 = vpop.permute.xlu0 %586
    %588 = vrot.lane.b32.xlu0 %v291, 120
    %v589 = vpop.permute.xlu0 %588
    %590 = vrot.lane.b32.xlu0 %v290, 112
    %v591 = vpop.permute.xlu0 %590
    %592 = vrot.lane.b32.xlu0 %v291, 112
    %v593 = vpop.permute.xlu0 %592
    %594 = vrot.lane.b32.xlu0 %v290, 104
    %v595 = vpop.permute.xlu0 %594
    %596 = vrot.lane.b32.xlu0 %v291, 104
    %v597 = vpop.permute.xlu0 %596
    %598 = vrot.lane.b32.xlu0 %v290, 96
    %v599 = vpop.permute.xlu0 %598
    %600 = vrot.lane.b32.xlu0 %v587, 96
    %v601 = vpop.permute.xlu0 %600
    %602 = vrot.lane.b32.xlu0 %v591, 96
    %v603 = vpop.permute.xlu0 %602
    %604 = vrot.lane.b32.xlu0 %v595, 96
    %v605 = vpop.permute.xlu0 %604
    %606 = vrot.lane.b32.xlu0 %v291, 96
    %v607 = vpop.permute.xlu0 %606
    %608 = vrot.lane.b32.xlu0 %v589, 96
    %v609 = vpop.permute.xlu0 %608
    %610 = vrot.lane.b32.xlu0 %v593, 96
    %v611 = vpop.permute.xlu0 %610
    %612 = vrot.lane.b32.xlu0 %v597, 96
    %v613 = vpop.permute.xlu0 %612
    %v622 = vcombine.low %v599, %v603
    %v623 = vcombine.high %v599, %v603
    %v625 = vunpack.c.l.s4 1983009808
    %v626 = vunpack.c.0.s8 %v625
    %v627 = vlaneseq
    %v628 = vshrl.u32 %v627, 7
    %v629 = vsub.s32 %v626, %v628
    %v630 = vrot.slane %v622, %v629
    %v632 = vunpack.c.l.s4 1983009808
    %v633 = vunpack.c.0.s8 %v632
    %v634 = vlaneseq
    %v635 = vshrl.u32 %v634, 7
    %v636 = vsub.s32 %v633, %v635
    %v637 = vrot.slane %v623, %v636
    %v638 = vcombine.low %v601, %v605
    %v639 = vcombine.high %v601, %v605
    %v641 = vunpack.c.l.s4 1983009808
    %v642 = vunpack.c.0.s8 %v641
    %v643 = vlaneseq
    %v644 = vshrl.u32 %v643, 7
    %v645 = vsub.s32 %v642, %v644
    %v646 = vrot.slane %v638, %v645
    %v648 = vunpack.c.l.s4 1983009808
    %v649 = vunpack.c.0.s8 %v648
    %v650 = vlaneseq
    %v651 = vshrl.u32 %v650, 7
    %v652 = vsub.s32 %v649, %v651
    %v653 = vrot.slane %v639, %v652
    %v654 = vcombine.low %v630, %v646
    %v655 = vcombine.high %v630, %v646
    %v657 = vunpack.c.l.s4 1934713408
    %v658 = vunpack.c.0.s8 %v657
    %v659 = vlaneseq
    %v660 = vshrl.u32 %v659, 7
    %v661 = vsub.s32 %v658, %v660
    %v662 = vrot.slane %v654, %v661
    %v664 = vunpack.c.l.s4 1934713408
    %v665 = vunpack.c.0.s8 %v664
    %v666 = vlaneseq
    %v667 = vshrl.u32 %v666, 7
    %v668 = vsub.s32 %v665, %v667
    %v669 = vrot.slane %v655, %v668
    %v670 = vcombine.low %v637, %v653
    %v671 = vcombine.high %v637, %v653
    %v673 = vunpack.c.l.s4 1934713408
    %v674 = vunpack.c.0.s8 %v673
    %v675 = vlaneseq
    %v676 = vshrl.u32 %v675, 7
    %v677 = vsub.s32 %v674, %v676
    %v678 = vrot.slane %v670, %v677
    %v680 = vunpack.c.l.s4 1934713408
    %v681 = vunpack.c.0.s8 %v680
    %v682 = vlaneseq
    %v683 = vshrl.u32 %v682, 7
    %v684 = vsub.s32 %v681, %v683
    %v685 = vrot.slane %v671, %v684
    %v686 = vcombine.high %v662, 0.0
    %v687 = vcombine.high %v669, 0.0
    %v688 = vcombine.high %v678, 0.0
    %v689 = vcombine.high %v685, 0.0
    %v690 = vcombine.low %v607, %v611
    %v691 = vcombine.high %v607, %v611
    %v693 = vunpack.c.l.s4 1983009808
    %v694 = vunpack.c.0.s8 %v693
    %v695 = vlaneseq
    %v696 = vshrl.u32 %v695, 7
    %v697 = vsub.s32 %v694, %v696
    %v698 = vrot.slane %v690, %v697
    %v700 = vunpack.c.l.s4 1983009808
    %v701 = vunpack.c.0.s8 %v700
    %v702 = vlaneseq
    %v703 = vshrl.u32 %v702, 7
    %v704 = vsub.s32 %v701, %v703
    %v705 = vrot.slane %v691, %v704
    %v706 = vcombine.low %v609, %v613
    %v707 = vcombine.high %v609, %v613
    %v709 = vunpack.c.l.s4 1983009808
    %v710 = vunpack.c.0.s8 %v709
    %v711 = vlaneseq
    %v712 = vshrl.u32 %v711, 7
    %v713 = vsub.s32 %v710, %v712
    %v714 = vrot.slane %v706, %v713
    %v716 = vunpack.c.l.s4 1983009808
    %v717 = vunpack.c.0.s8 %v716
    %v718 = vlaneseq
    %v719 = vshrl.u32 %v718, 7
    %v720 = vsub.s32 %v717, %v719
    %v721 = vrot.slane %v707, %v720
    %v722 = vcombine.low %v698, %v714
    %v723 = vcombine.high %v698, %v714
    %v725 = vunpack.c.l.s4 1934713408
    %v726 = vunpack.c.0.s8 %v725
    %v727 = vlaneseq
    %v728 = vshrl.u32 %v727, 7
    %v729 = vsub.s32 %v726, %v728
    %v730 = vrot.slane %v722, %v729
    %v732 = vunpack.c.l.s4 1934713408
    %v733 = vunpack.c.0.s8 %v732
    %v734 = vlaneseq
    %v735 = vshrl.u32 %v734, 7
    %v736 = vsub.s32 %v733, %v735
    %v737 = vrot.slane %v723, %v736
    %v738 = vcombine.low %v705, %v721
    %v739 = vcombine.high %v705, %v721
    %v741 = vunpack.c.l.s4 1934713408
    %v742 = vunpack.c.0.s8 %v741
    %v743 = vlaneseq
    %v744 = vshrl.u32 %v743, 7
    %v745 = vsub.s32 %v742, %v744
    %v746 = vrot.slane %v738, %v745
    %v748 = vunpack.c.l.s4 1934713408
    %v749 = vunpack.c.0.s8 %v748
    %v750 = vlaneseq
    %v751 = vshrl.u32 %v750, 7
    %v752 = vsub.s32 %v749, %v751
    %v753 = vrot.slane %v739, %v752
    %v754 = vcombine.high %v730, 0.0
    %v755 = vcombine.high %v737, 0.0
    %v756 = vcombine.high %v746, 0.0
    %v757 = vcombine.high %v753, 0.0
    %v758 = vcombine.low %v662, %v669
    %v760 = vunpack.c.l.s4 1983009808
    %v761 = vunpack.c.0.s8 %v760
    %v762 = vlaneseq
    %v763 = vshrl.u32 %v762, 7
    %v764 = vsub.s32 %v761, %v763
    %v765 = vrot.slane %v758, %v764
    %v766 = vcombine.low %v686, %v687
    %v768 = vunpack.c.l.s4 1983009808
    %v769 = vunpack.c.0.s8 %v768
    %v770 = vlaneseq
    %v771 = vshrl.u32 %v770, 7
    %v772 = vsub.s32 %v769, %v771
    %v773 = vrot.slane %v766, %v772
    %v774 = vcombine.low %v678, %v685
    %v776 = vunpack.c.l.s4 1983009808
    %v777 = vunpack.c.0.s8 %v776
    %v778 = vlaneseq
    %v779 = vshrl.u32 %v778, 7
    %v780 = vsub.s32 %v777, %v779
    %v781 = vrot.slane %v774, %v780
    %v782 = vcombine.low %v688, %v689
    %v784 = vunpack.c.l.s4 1983009808
    %v785 = vunpack.c.0.s8 %v784
    %v786 = vlaneseq
    %v787 = vshrl.u32 %v786, 7
    %v788 = vsub.s32 %v785, %v787
    %v789 = vrot.slane %v782, %v788
    %v790 = vcombine.low %v765, %v773
    %v791 = vcombine.high %v765, %v773
    %v793 = vunpack.c.l.s4 1934713408
    %v794 = vunpack.c.0.s8 %v793
    %v795 = vlaneseq
    %v796 = vshrl.u32 %v795, 7
    %v797 = vsub.s32 %v794, %v796
    %v798 = vrot.slane %v790, %v797
    %v800 = vunpack.c.l.s4 1934713408
    %v801 = vunpack.c.0.s8 %v800
    %v802 = vlaneseq
    %v803 = vshrl.u32 %v802, 7
    %v804 = vsub.s32 %v801, %v803
    %v805 = vrot.slane %v791, %v804
    %v806 = vcombine.low %v781, %v789
    %v807 = vcombine.high %v781, %v789
    %v809 = vunpack.c.l.s4 1934713408
    %v810 = vunpack.c.0.s8 %v809
    %v811 = vlaneseq
    %v812 = vshrl.u32 %v811, 7
    %v813 = vsub.s32 %v810, %v812
    %v814 = vrot.slane %v806, %v813
    %v816 = vunpack.c.l.s4 1934713408
    %v817 = vunpack.c.0.s8 %v816
    %v818 = vlaneseq
    %v819 = vshrl.u32 %v818, 7
    %v820 = vsub.s32 %v817, %v819
    %v821 = vrot.slane %v807, %v820
    %v822 = vcombine.low %v798, %v814
    %v823 = vcombine.high %v798, %v814
    %v824 = vcombine.low %v805, %v821
    %v825 = vcombine.high %v805, %v821
    %v826 = vcombine.low %v730, %v737
    %v828 = vunpack.c.l.s4 1983009808
    %v829 = vunpack.c.0.s8 %v828
    %v830 = vlaneseq
    %v831 = vshrl.u32 %v830, 7
    %v832 = vsub.s32 %v829, %v831
    %v833 = vrot.slane %v826, %v832
    %v834 = vcombine.low %v754, %v755
    %v836 = vunpack.c.l.s4 1983009808
    %v837 = vunpack.c.0.s8 %v836
    %v838 = vlaneseq
    %v839 = vshrl.u32 %v838, 7
    %v840 = vsub.s32 %v837, %v839
    %v841 = vrot.slane %v834, %v840
    %v842 = vcombine.low %v746, %v753
    %v844 = vunpack.c.l.s4 1983009808
    %v845 = vunpack.c.0.s8 %v844
    %v846 = vlaneseq
    %v847 = vshrl.u32 %v846, 7
    %v848 = vsub.s32 %v845, %v847
    %v849 = vrot.slane %v842, %v848
    %v850 = vcombine.low %v756, %v757
    %v852 = vunpack.c.l.s4 1983009808
    %v853 = vunpack.c.0.s8 %v852
    %v854 = vlaneseq
    %v855 = vshrl.u32 %v854, 7
    %v856 = vsub.s32 %v853, %v855
    %v857 = vrot.slane %v850, %v856
    %v858 = vcombine.low %v833, %v841
    %v859 = vcombine.high %v833, %v841
    %v861 = vunpack.c.l.s4 1934713408
    %v862 = vunpack.c.0.s8 %v861
    %v863 = vlaneseq
    %v864 = vshrl.u32 %v863, 7
    %v865 = vsub.s32 %v862, %v864
    %v866 = vrot.slane %v858, %v865
    %v868 = vunpack.c.l.s4 1934713408
    %v869 = vunpack.c.0.s8 %v868
    %v870 = vlaneseq
    %v871 = vshrl.u32 %v870, 7
    %v872 = vsub.s32 %v869, %v871
    %v873 = vrot.slane %v859, %v872
    %v874 = vcombine.low %v849, %v857
    %v875 = vcombine.high %v849, %v857
    %v877 = vunpack.c.l.s4 1934713408
    %v878 = vunpack.c.0.s8 %v877
    %v879 = vlaneseq
    %v880 = vshrl.u32 %v879, 7
    %v881 = vsub.s32 %v878, %v880
    %v882 = vrot.slane %v874, %v881
    %v884 = vunpack.c.l.s4 1934713408
    %v885 = vunpack.c.0.s8 %v884
    %v886 = vlaneseq
    %v887 = vshrl.u32 %v886, 7
    %v888 = vsub.s32 %v885, %v887
    %v889 = vrot.slane %v875, %v888
    %v890 = vcombine.low %v866, %v882
    %v891 = vcombine.high %v866, %v882
    %v892 = vcombine.low %v873, %v889
    %v893 = vcombine.high %v873, %v889
    %896 = vrot.lane.b32.xlu0 %v246, 120
    %v897 = vpop.permute.xlu0 %896
    %898 = vrot.lane.b32.xlu0 %v252, 120
    %v899 = vpop.permute.xlu0 %898
    %900 = vrot.lane.b32.xlu0 %v246, 112
    %v901 = vpop.permute.xlu0 %900
    %902 = vrot.lane.b32.xlu0 %v252, 112
    %v903 = vpop.permute.xlu0 %902
    %904 = vrot.lane.b32.xlu0 %v246, 104
    %v905 = vpop.permute.xlu0 %904
    %906 = vrot.lane.b32.xlu0 %v252, 104
    %v907 = vpop.permute.xlu0 %906
    %908 = vrot.lane.b32.xlu0 %v246, 64
    %v909 = vpop.permute.xlu0 %908
    %910 = vrot.lane.b32.xlu0 %v252, 64
    %v911 = vpop.permute.xlu0 %910
    %912 = vrot.lane.b32.xlu0 %v897, 64
    %v913 = vpop.permute.xlu0 %912
    %914 = vrot.lane.b32.xlu0 %v899, 64
    %v915 = vpop.permute.xlu0 %914
    %916 = vrot.lane.b32.xlu0 %v901, 64
    %v917 = vpop.permute.xlu0 %916
    %918 = vrot.lane.b32.xlu0 %v903, 64
    %v919 = vpop.permute.xlu0 %918
    %920 = vrot.lane.b32.xlu0 %v905, 64
    %v921 = vpop.permute.xlu0 %920
    %922 = vrot.lane.b32.xlu0 %v907, 64
    %v923 = vpop.permute.xlu0 %922
    %v932 = vcombine.low %v909, %v917
    %v933 = vcombine.high %v909, %v917
    %v935 = vunpack.c.l.s4 1983009808
    %v936 = vunpack.c.0.s8 %v935
    %v937 = vlaneseq
    %v938 = vshrl.u32 %v937, 7
    %v939 = vsub.s32 %v936, %v938
    %v940 = vrot.slane %v932, %v939
    %v942 = vunpack.c.l.s4 1983009808
    %v943 = vunpack.c.0.s8 %v942
    %v944 = vlaneseq
    %v945 = vshrl.u32 %v944, 7
    %v946 = vsub.s32 %v943, %v945
    %v947 = vrot.slane %v933, %v946
    %v948 = vcombine.low %v913, %v921
    %v949 = vcombine.high %v913, %v921
    %v951 = vunpack.c.l.s4 1983009808
    %v952 = vunpack.c.0.s8 %v951
    %v953 = vlaneseq
    %v954 = vshrl.u32 %v953, 7
    %v955 = vsub.s32 %v952, %v954
    %v956 = vrot.slane %v948, %v955
    %v958 = vunpack.c.l.s4 1983009808
    %v959 = vunpack.c.0.s8 %v958
    %v960 = vlaneseq
    %v961 = vshrl.u32 %v960, 7
    %v962 = vsub.s32 %v959, %v961
    %v963 = vrot.slane %v949, %v962
    %v964 = vcombine.low %v940, %v956
    %v965 = vcombine.high %v940, %v956
    %v967 = vunpack.c.l.s4 1934713408
    %v968 = vunpack.c.0.s8 %v967
    %v969 = vlaneseq
    %v970 = vshrl.u32 %v969, 7
    %v971 = vsub.s32 %v968, %v970
    %v972 = vrot.slane %v964, %v971
    %v974 = vunpack.c.l.s4 1934713408
    %v975 = vunpack.c.0.s8 %v974
    %v976 = vlaneseq
    %v977 = vshrl.u32 %v976, 7
    %v978 = vsub.s32 %v975, %v977
    %v979 = vrot.slane %v965, %v978
    %v980 = vcombine.low %v947, %v963
    %v981 = vcombine.high %v947, %v963
    %v983 = vunpack.c.l.s4 1934713408
    %v984 = vunpack.c.0.s8 %v983
    %v985 = vlaneseq
    %v986 = vshrl.u32 %v985, 7
    %v987 = vsub.s32 %v984, %v986
    %v988 = vrot.slane %v980, %v987
    %v990 = vunpack.c.l.s4 1934713408
    %v991 = vunpack.c.0.s8 %v990
    %v992 = vlaneseq
    %v993 = vshrl.u32 %v992, 7
    %v994 = vsub.s32 %v991, %v993
    %v995 = vrot.slane %v981, %v994
    %v996 = vcombine.high %v972, 0.0
    %v997 = vcombine.high %v979, 0.0
    %v998 = vcombine.high %v988, 0.0
    %v999 = vcombine.high %v995, 0.0
    %v1000 = vcombine.low %v911, %v919
    %v1001 = vcombine.high %v911, %v919
    %v1003 = vunpack.c.l.s4 1983009808
    %v1004 = vunpack.c.0.s8 %v1003
    %v1005 = vlaneseq
    %v1006 = vshrl.u32 %v1005, 7
    %v1007 = vsub.s32 %v1004, %v1006
    %v1008 = vrot.slane %v1000, %v1007
    %v1010 = vunpack.c.l.s4 1983009808
    %v1011 = vunpack.c.0.s8 %v1010
    %v1012 = vlaneseq
    %v1013 = vshrl.u32 %v1012, 7
    %v1014 = vsub.s32 %v1011, %v1013
    %v1015 = vrot.slane %v1001, %v1014
    %v1016 = vcombine.low %v915, %v923
    %v1017 = vcombine.high %v915, %v923
    %v1019 = vunpack.c.l.s4 1983009808
    %v1020 = vunpack.c.0.s8 %v1019
    %v1021 = vlaneseq
    %v1022 = vshrl.u32 %v1021, 7
    %v1023 = vsub.s32 %v1020, %v1022
    %v1024 = vrot.slane %v1016, %v1023
    %v1026 = vunpack.c.l.s4 1983009808
    %v1027 = vunpack.c.0.s8 %v1026
    %v1028 = vlaneseq
    %v1029 = vshrl.u32 %v1028, 7
    %v1030 = vsub.s32 %v1027, %v1029
    %v1031 = vrot.slane %v1017, %v1030
    %v1032 = vcombine.low %v1008, %v1024
    %v1033 = vcombine.high %v1008, %v1024
    %v1035 = vunpack.c.l.s4 1934713408
    %v1036 = vunpack.c.0.s8 %v1035
    %v1037 = vlaneseq
    %v1038 = vshrl.u32 %v1037, 7
    %v1039 = vsub.s32 %v1036, %v1038
    %v1040 = vrot.slane %v1032, %v1039
    %v1042 = vunpack.c.l.s4 1934713408
    %v1043 = vunpack.c.0.s8 %v1042
    %v1044 = vlaneseq
    %v1045 = vshrl.u32 %v1044, 7
    %v1046 = vsub.s32 %v1043, %v1045
    %v1047 = vrot.slane %v1033, %v1046
    %v1048 = vcombine.low %v1015, %v1031
    %v1049 = vcombine.high %v1015, %v1031
    %v1051 = vunpack.c.l.s4 1934713408
    %v1052 = vunpack.c.0.s8 %v1051
    %v1053 = vlaneseq
    %v1054 = vshrl.u32 %v1053, 7
    %v1055 = vsub.s32 %v1052, %v1054
    %v1056 = vrot.slane %v1048, %v1055
    %v1058 = vunpack.c.l.s4 1934713408
    %v1059 = vunpack.c.0.s8 %v1058
    %v1060 = vlaneseq
    %v1061 = vshrl.u32 %v1060, 7
    %v1062 = vsub.s32 %v1059, %v1061
    %v1063 = vrot.slane %v1049, %v1062
    %v1064 = vcombine.high %v1040, 0.0
    %v1065 = vcombine.high %v1047, 0.0
    %v1066 = vcombine.high %v1056, 0.0
    %v1067 = vcombine.high %v1063, 0.0
    %v1068 = vcombine.low %v972, %v979
    %v1070 = vunpack.c.l.s4 1983009808
    %v1071 = vunpack.c.0.s8 %v1070
    %v1072 = vlaneseq
    %v1073 = vshrl.u32 %v1072, 7
    %v1074 = vsub.s32 %v1071, %v1073
    %v1075 = vrot.slane %v1068, %v1074
    %v1076 = vcombine.low %v996, %v997
    %v1078 = vunpack.c.l.s4 1983009808
    %v1079 = vunpack.c.0.s8 %v1078
    %v1080 = vlaneseq
    %v1081 = vshrl.u32 %v1080, 7
    %v1082 = vsub.s32 %v1079, %v1081
    %v1083 = vrot.slane %v1076, %v1082
    %v1084 = vcombine.low %v988, %v995
    %v1086 = vunpack.c.l.s4 1983009808
    %v1087 = vunpack.c.0.s8 %v1086
    %v1088 = vlaneseq
    %v1089 = vshrl.u32 %v1088, 7
    %v1090 = vsub.s32 %v1087, %v1089
    %v1091 = vrot.slane %v1084, %v1090
    %v1092 = vcombine.low %v998, %v999
    %v1094 = vunpack.c.l.s4 1983009808
    %v1095 = vunpack.c.0.s8 %v1094
    %v1096 = vlaneseq
    %v1097 = vshrl.u32 %v1096, 7
    %v1098 = vsub.s32 %v1095, %v1097
    %v1099 = vrot.slane %v1092, %v1098
    %v1100 = vcombine.low %v1075, %v1083
    %v1101 = vcombine.high %v1075, %v1083
    %v1103 = vunpack.c.l.s4 1934713408
    %v1104 = vunpack.c.0.s8 %v1103
    %v1105 = vlaneseq
    %v1106 = vshrl.u32 %v1105, 7
    %v1107 = vsub.s32 %v1104, %v1106
    %v1108 = vrot.slane %v1100, %v1107
    %v1110 = vunpack.c.l.s4 1934713408
    %v1111 = vunpack.c.0.s8 %v1110
    %v1112 = vlaneseq
    %v1113 = vshrl.u32 %v1112, 7
    %v1114 = vsub.s32 %v1111, %v1113
    %v1115 = vrot.slane %v1101, %v1114
    %v1116 = vcombine.low %v1091, %v1099
    %v1117 = vcombine.high %v1091, %v1099
    %v1119 = vunpack.c.l.s4 1934713408
    %v1120 = vunpack.c.0.s8 %v1119
    %v1121 = vlaneseq
    %v1122 = vshrl.u32 %v1121, 7
    %v1123 = vsub.s32 %v1120, %v1122
    %v1124 = vrot.slane %v1116, %v1123
    %v1126 = vunpack.c.l.s4 1934713408
    %v1127 = vunpack.c.0.s8 %v1126
    %v1128 = vlaneseq
    %v1129 = vshrl.u32 %v1128, 7
    %v1130 = vsub.s32 %v1127, %v1129
    %v1131 = vrot.slane %v1117, %v1130
    %v1132 = vcombine.low %v1108, %v1124
    %v1133 = vcombine.high %v1108, %v1124
    %v1134 = vcombine.low %v1115, %v1131
    %v1135 = vcombine.high %v1115, %v1131
    %v1136 = vcombine.low %v1040, %v1047
    %v1138 = vunpack.c.l.s4 1983009808
    %v1139 = vunpack.c.0.s8 %v1138
    %v1140 = vlaneseq
    %v1141 = vshrl.u32 %v1140, 7
    %v1142 = vsub.s32 %v1139, %v1141
    %v1143 = vrot.slane %v1136, %v1142
    %v1144 = vcombine.low %v1064, %v1065
    %v1146 = vunpack.c.l.s4 1983009808
    %v1147 = vunpack.c.0.s8 %v1146
    %v1148 = vlaneseq
    %v1149 = vshrl.u32 %v1148, 7
    %v1150 = vsub.s32 %v1147, %v1149
    %v1151 = vrot.slane %v1144, %v1150
    %v1152 = vcombine.low %v1056, %v1063
    %v1154 = vunpack.c.l.s4 1983009808
    %v1155 = vunpack.c.0.s8 %v1154
    %v1156 = vlaneseq
    %v1157 = vshrl.u32 %v1156, 7
    %v1158 = vsub.s32 %v1155, %v1157
    %v1159 = vrot.slane %v1152, %v1158
    %v1160 = vcombine.low %v1066, %v1067
    %v1162 = vunpack.c.l.s4 1983009808
    %v1163 = vunpack.c.0.s8 %v1162
    %v1164 = vlaneseq
    %v1165 = vshrl.u32 %v1164, 7
    %v1166 = vsub.s32 %v1163, %v1165
    %v1167 = vrot.slane %v1160, %v1166
    %v1168 = vcombine.low %v1143, %v1151
    %v1169 = vcombine.high %v1143, %v1151
    %v1171 = vunpack.c.l.s4 1934713408
    %v1172 = vunpack.c.0.s8 %v1171
    %v1173 = vlaneseq
    %v1174 = vshrl.u32 %v1173, 7
    %v1175 = vsub.s32 %v1172, %v1174
    %v1176 = vrot.slane %v1168, %v1175
    %v1178 = vunpack.c.l.s4 1934713408
    %v1179 = vunpack.c.0.s8 %v1178
    %v1180 = vlaneseq
    %v1181 = vshrl.u32 %v1180, 7
    %v1182 = vsub.s32 %v1179, %v1181
    %v1183 = vrot.slane %v1169, %v1182
    %v1184 = vcombine.low %v1159, %v1167
    %v1185 = vcombine.high %v1159, %v1167
    %v1187 = vunpack.c.l.s4 1934713408
    %v1188 = vunpack.c.0.s8 %v1187
    %v1189 = vlaneseq
    %v1190 = vshrl.u32 %v1189, 7
    %v1191 = vsub.s32 %v1188, %v1190
    %v1192 = vrot.slane %v1184, %v1191
    %v1194 = vunpack.c.l.s4 1934713408
    %v1195 = vunpack.c.0.s8 %v1194
    %v1196 = vlaneseq
    %v1197 = vshrl.u32 %v1196, 7
    %v1198 = vsub.s32 %v1195, %v1197
    %v1199 = vrot.slane %v1185, %v1198
    %v1200 = vcombine.low %v1176, %v1192
    %v1201 = vcombine.high %v1176, %v1192
    %v1202 = vcombine.low %v1183, %v1199
    %v1203 = vcombine.high %v1183, %v1199
    %v1204 = vld [vmem:[#allocation8] sm:$0xff]
    %vm1205 = vcmask 64512
    %v1207 = vsel %vm1205, %v512, 0
    %v1210 = vsel %vm1205, %v822, 0
    %1212 = vmatprep.subr.mxu0 0.0
    %1213 = vmatpush1.xpose.msra.mxu0 0.0
    %1214 = vmatprep.subr.mxu0 0.0
    %1215 = vmatpush1.xpose.msra.mxu0 0.0
    %1216 = vmatprep.subr.mxu0 0.0
    %1217 = vmatpush1.xpose.msra.mxu0 0.0
    %1218 = vmatprep.subr.mxu0 0.0
    %1219 = vmatpush1.xpose.msra.mxu0 0.0
    %1220 = vmatprep.subr.mxu0 0.0
    %1221 = vmatpush1.xpose.msra.mxu0 0.0
    %1222 = vmatprep.subr.mxu0 0.0
    %1223 = vmatpush1.xpose.msra.mxu0 0.0
    %1224 = vmatprep.subr.mxu0 0.0
    %1225 = vmatpush1.xpose.msra.mxu0 0.0
    %1226 = vmatprep.subr.mxu0 0.0
    %1227 = vmatpush1.xpose.msra.mxu0 0.0
    %1228 = vmatprep.subr.mxu0 0.0
    %1229 = vmatpush1.xpose.msra.mxu0 0.0
    %1230 = vmatprep.subr.mxu0 0.0
    %1231 = vmatpush1.xpose.msra.mxu0 0.0
    %1232 = vmatprep.subr.mxu0 0.0
    %1233 = vmatpush1.xpose.msra.mxu0 0.0
    %1234 = vmatprep.subr.mxu0 0.0
    %1235 = vmatpush1.xpose.msra.mxu0 0.0
    %1236 = vmatprep.subr.mxu0 0.0
    %1237 = vmatpush1.xpose.msra.mxu0 0.0
    %1238 = vmatprep.subr.mxu0 0.0
    %1239 = vmatpush1.xpose.msra.mxu0 0.0
    %1240 = vmatprep.subr.mxu0 0.0
    %1241 = vmatpush1.xpose.msra.mxu0 0.0
    %1242 = vmatprep.subr.mxu0 0.0
    %1243 = vmatpush1.xpose.msra.mxu0 %v1210
    %1244 = vmatprep.subr.mxu0 0.0
    %1245 = vmatpush2.xpose.msra.mxu0 0.0
    %1246 = vmatprep.subr.mxu0 0.0
    %1247 = vmatpush2.xpose.msra.mxu0 0.0
    %1248 = vmatprep.subr.mxu0 0.0
    %1249 = vmatpush2.xpose.msra.mxu0 0.0
    %1250 = vmatprep.subr.mxu0 0.0
    %1251 = vmatpush2.xpose.msra.mxu0 0.0
    %1252 = vmatprep.subr.mxu0 0.0
    %1253 = vmatpush2.xpose.msra.mxu0 0.0
    %1254 = vmatprep.subr.mxu0 0.0
    %1255 = vmatpush2.xpose.msra.mxu0 0.0
    %1256 = vmatprep.subr.mxu0 0.0
    %1257 = vmatpush2.xpose.msra.mxu0 0.0
    %1258 = vmatprep.subr.mxu0 0.0
    %1259 = vmatpush2.xpose.msra.mxu0 0.0
    %1260 = vmatprep.subr.mxu0 0.0
    %1261 = vmatpush2.xpose.msra.mxu0 0.0
    %1262 = vmatprep.subr.mxu0 0.0
    %1263 = vmatpush2.xpose.msra.mxu0 0.0
    %1264 = vmatprep.subr.mxu0 0.0
    %1265 = vmatpush2.xpose.msra.mxu0 0.0
    %1266 = vmatprep.subr.mxu0 0.0
    %1267 = vmatpush2.xpose.msra.mxu0 0.0
    %1268 = vmatprep.subr.mxu0 0.0
    %1269 = vmatpush2.xpose.msra.mxu0 0.0
    %1270 = vmatprep.subr.mxu0 0.0
    %1271 = vmatpush2.xpose.msra.mxu0 0.0
    %1272 = vmatprep.subr.mxu0 0.0
    %1273 = vmatpush2.xpose.msra.mxu0 0.0
    %1274 = vmatprep.subr.mxu0 0.0
    %1275 = vmatpush2.xpose.msra.mxu0 0.0
    %1276 = vmatprep.mubr.f32.mxu0 0.0
    %1277 = vmatmul.mubr.f32.gmra.mxu0 %v1207
    %v1278 = vpop.f32.mrf.mxu0
    %v1279 = vadd.f32 %v1204, %v1278
    %v1280 = vpop.f32.mrf.mxu0
    %1281 = vdwg.mxu0
    %v1283 = vsel %vm1205, %v513, 0
    %v1286 = vsel %vm1205, %v823, 0
    %1288 = vmatprep.subr.mxu0 0.0
    %1289 = vmatpush1.xpose.msra.mxu0 0.0
    %1290 = vmatprep.subr.mxu0 0.0
    %1291 = vmatpush1.xpose.msra.mxu0 0.0
    %1292 = vmatprep.subr.mxu0 0.0
    %1293 = vmatpush1.xpose.msra.mxu0 0.0
    %1294 = vmatprep.subr.mxu0 0.0
    %1295 = vmatpush1.xpose.msra.mxu0 0.0
    %1296 = vmatprep.subr.mxu0 0.0
    %1297 = vmatpush1.xpose.msra.mxu0 0.0
    %1298 = vmatprep.subr.mxu0 0.0
    %1299 = vmatpush1.xpose.msra.mxu0 0.0
    %1300 = vmatprep.subr.mxu0 0.0
    %1301 = vmatpush1.xpose.msra.mxu0 0.0
    %1302 = vmatprep.subr.mxu0 0.0
    %1303 = vmatpush1.xpose.msra.mxu0 0.0
    %1304 = vmatprep.subr.mxu0 0.0
    %1305 = vmatpush1.xpose.msra.mxu0 0.0
    %1306 = vmatprep.subr.mxu0 0.0
    %1307 = vmatpush1.xpose.msra.mxu0 0.0
    %1308 = vmatprep.subr.mxu0 0.0
    %1309 = vmatpush1.xpose.msra.mxu0 0.0
    %1310 = vmatprep.subr.mxu0 0.0
    %1311 = vmatpush1.xpose.msra.mxu0 0.0
    %1312 = vmatprep.subr.mxu0 0.0
    %1313 = vmatpush1.xpose.msra.mxu0 0.0
    %1314 = vmatprep.subr.mxu0 0.0
    %1315 = vmatpush1.xpose.msra.mxu0 0.0
    %1316 = vmatprep.subr.mxu0 0.0
    %1317 = vmatpush1.xpose.msra.mxu0 0.0
    %1318 = vmatprep.subr.mxu0 0.0
    %1319 = vmatpush1.xpose.msra.mxu0 %v1286
    %1320 = vmatprep.subr.mxu0 0.0
    %1321 = vmatpush2.xpose.msra.mxu0 0.0
    %1322 = vmatprep.subr.mxu0 0.0
    %1323 = vmatpush2.xpose.msra.mxu0 0.0
    %1324 = vmatprep.subr.mxu0 0.0
    %1325 = vmatpush2.xpose.msra.mxu0 0.0
    %1326 = vmatprep.subr.mxu0 0.0
    %1327 = vmatpush2.xpose.msra.mxu0 0.0
    %1328 = vmatprep.subr.mxu0 0.0
    %1329 = vmatpush2.xpose.msra.mxu0 0.0
    %1330 = vmatprep.subr.mxu0 0.0
    %1331 = vmatpush2.xpose.msra.mxu0 0.0
    %1332 = vmatprep.subr.mxu0 0.0
    %1333 = vmatpush2.xpose.msra.mxu0 0.0
    %1334 = vmatprep.subr.mxu0 0.0
    %1335 = vmatpush2.xpose.msra.mxu0 0.0
    %1336 = vmatprep.subr.mxu0 0.0
    %1337 = vmatpush2.xpose.msra.mxu0 0.0
    %1338 = vmatprep.subr.mxu0 0.0
    %1339 = vmatpush2.xpose.msra.mxu0 0.0
    %1340 = vmatprep.subr.mxu0 0.0
    %1341 = vmatpush2.xpose.msra.mxu0 0.0
    %1342 = vmatprep.subr.mxu0 0.0
    %1343 = vmatpush2.xpose.msra.mxu0 0.0
    %1344 = vmatprep.subr.mxu0 0.0
    %1345 = vmatpush2.xpose.msra.mxu0 0.0
    %1346 = vmatprep.subr.mxu0 0.0
    %1347 = vmatpush2.xpose.msra.mxu0 0.0
    %1348 = vmatprep.subr.mxu0 0.0
    %1349 = vmatpush2.xpose.msra.mxu0 0.0
    %1350 = vmatprep.subr.mxu0 0.0
    %1351 = vmatpush2.xpose.msra.mxu0 0.0
    %1352 = vmatprep.mubr.f32.mxu0 0.0
    %1353 = vmatmul.mubr.f32.gmra.mxu0 %v1283
    %v1354 = vpop.f32.mrf.mxu0
    %v1355 = vadd.f32 %v1204, %v1354
    %v1356 = vpop.f32.mrf.mxu0
    %1357 = vdwg.mxu0
    %v1359 = vsel %vm1205, %v514, 0
    %v1362 = vsel %vm1205, %v824, 0
    %1364 = vmatprep.subr.mxu0 0.0
    %1365 = vmatpush1.xpose.msra.mxu0 0.0
    %1366 = vmatprep.subr.mxu0 0.0
    %1367 = vmatpush1.xpose.msra.mxu0 0.0
    %1368 = vmatprep.subr.mxu0 0.0
    %1369 = vmatpush1.xpose.msra.mxu0 0.0
    %1370 = vmatprep.subr.mxu0 0.0
    %1371 = vmatpush1.xpose.msra.mxu0 0.0
    %1372 = vmatprep.subr.mxu0 0.0
    %1373 = vmatpush1.xpose.msra.mxu0 0.0
    %1374 = vmatprep.subr.mxu0 0.0
    %1375 = vmatpush1.xpose.msra.mxu0 0.0
    %1376 = vmatprep.subr.mxu0 0.0
    %1377 = vmatpush1.xpose.msra.mxu0 0.0
    %1378 = vmatprep.subr.mxu0 0.0
    %1379 = vmatpush1.xpose.msra.mxu0 0.0
    %1380 = vmatprep.subr.mxu0 0.0
    %1381 = vmatpush1.xpose.msra.mxu0 0.0
    %1382 = vmatprep.subr.mxu0 0.0
    %1383 = vmatpush1.xpose.msra.mxu0 0.0
    %1384 = vmatprep.subr.mxu0 0.0
    %1385 = vmatpush1.xpose.msra.mxu0 0.0
    %1386 = vmatprep.subr.mxu0 0.0
    %1387 = vmatpush1.xpose.msra.mxu0 0.0
    %1388 = vmatprep.subr.mxu0 0.0
    %1389 = vmatpush1.xpose.msra.mxu0 0.0
    %1390 = vmatprep.subr.mxu0 0.0
    %1391 = vmatpush1.xpose.msra.mxu0 0.0
    %1392 = vmatprep.subr.mxu0 0.0
    %1393 = vmatpush1.xpose.msra.mxu0 0.0
    %1394 = vmatprep.subr.mxu0 0.0
    %1395 = vmatpush1.xpose.msra.mxu0 %v1362
    %1396 = vmatprep.subr.mxu0 0.0
    %1397 = vmatpush2.xpose.msra.mxu0 0.0
    %1398 = vmatprep.subr.mxu0 0.0
    %1399 = vmatpush2.xpose.msra.mxu0 0.0
    %1400 = vmatprep.subr.mxu0 0.0
    %1401 = vmatpush2.xpose.msra.mxu0 0.0
    %1402 = vmatprep.subr.mxu0 0.0
    %1403 = vmatpush2.xpose.msra.mxu0 0.0
    %1404 = vmatprep.subr.mxu0 0.0
    %1405 = vmatpush2.xpose.msra.mxu0 0.0
    %1406 = vmatprep.subr.mxu0 0.0
    %1407 = vmatpush2.xpose.msra.mxu0 0.0
    %1408 = vmatprep.subr.mxu0 0.0
    %1409 = vmatpush2.xpose.msra.mxu0 0.0
    %1410 = vmatprep.subr.mxu0 0.0
    %1411 = vmatpush2.xpose.msra.mxu0 0.0
    %1412 = vmatprep.subr.mxu0 0.0
    %1413 = vmatpush2.xpose.msra.mxu0 0.0
    %1414 = vmatprep.subr.mxu0 0.0
    %1415 = vmatpush2.xpose.msra.mxu0 0.0
    %1416 = vmatprep.subr.mxu0 0.0
    %1417 = vmatpush2.xpose.msra.mxu0 0.0
    %1418 = vmatprep.subr.mxu0 0.0
    %1419 = vmatpush2.xpose.msra.mxu0 0.0
    %1420 = vmatprep.subr.mxu0 0.0
    %1421 = vmatpush2.xpose.msra.mxu0 0.0
    %1422 = vmatprep.subr.mxu0 0.0
    %1423 = vmatpush2.xpose.msra.mxu0 0.0
    %1424 = vmatprep.subr.mxu0 0.0
    %1425 = vmatpush2.xpose.msra.mxu0 0.0
    %1426 = vmatprep.subr.mxu0 0.0
    %1427 = vmatpush2.xpose.msra.mxu0 0.0
    %1428 = vmatprep.mubr.f32.mxu0 0.0
    %1429 = vmatmul.mubr.f32.gmra.mxu0 %v1359
    %v1430 = vpop.f32.mrf.mxu0
    %v1431 = vadd.f32 %v1204, %v1430
    %v1432 = vpop.f32.mrf.mxu0
    %1433 = vdwg.mxu0
    %v1435 = vsel %vm1205, %v515, 0
    %v1438 = vsel %vm1205, %v825, 0
    %1440 = vmatprep.subr.mxu0 0.0
    %1441 = vmatpush1.xpose.msra.mxu0 0.0
    %1442 = vmatprep.subr.mxu0 0.0
    %1443 = vmatpush1.xpose.msra.mxu0 0.0
    %1444 = vmatprep.subr.mxu0 0.0
    %1445 = vmatpush1.xpose.msra.mxu0 0.0
    %1446 = vmatprep.subr.mxu0 0.0
    %1447 = vmatpush1.xpose.msra.mxu0 0.0
    %1448 = vmatprep.subr.mxu0 0.0
    %1449 = vmatpush1.xpose.msra.mxu0 0.0
    %1450 = vmatprep.subr.mxu0 0.0
    %1451 = vmatpush1.xpose.msra.mxu0 0.0
    %1452 = vmatprep.subr.mxu0 0.0
    %1453 = vmatpush1.xpose.msra.mxu0 0.0
    %1454 = vmatprep.subr.mxu0 0.0
    %1455 = vmatpush1.xpose.msra.mxu0 0.0
    %1456 = vmatprep.subr.mxu0 0.0
    %1457 = vmatpush1.xpose.msra.mxu0 0.0
    %1458 = vmatprep.subr.mxu0 0.0
    %1459 = vmatpush1.xpose.msra.mxu0 0.0
    %1460 = vmatprep.subr.mxu0 0.0
    %1461 = vmatpush1.xpose.msra.mxu0 0.0
    %1462 = vmatprep.subr.mxu0 0.0
    %1463 = vmatpush1.xpose.msra.mxu0 0.0
    %1464 = vmatprep.subr.mxu0 0.0
    %1465 = vmatpush1.xpose.msra.mxu0 0.0
    %1466 = vmatprep.subr.mxu0 0.0
    %1467 = vmatpush1.xpose.msra.mxu0 0.0
    %1468 = vmatprep.subr.mxu0 0.0
    %1469 = vmatpush1.xpose.msra.mxu0 0.0
    %1470 = vmatprep.subr.mxu0 0.0
    %1471 = vmatpush1.xpose.msra.mxu0 %v1438
    %1472 = vmatprep.subr.mxu0 0.0
    %1473 = vmatpush2.xpose.msra.mxu0 0.0
    %1474 = vmatprep.subr.mxu0 0.0
    %1475 = vmatpush2.xpose.msra.mxu0 0.0
    %1476 = vmatprep.subr.mxu0 0.0
    %1477 = vmatpush2.xpose.msra.mxu0 0.0
    %1478 = vmatprep.subr.mxu0 0.0
    %1479 = vmatpush2.xpose.msra.mxu0 0.0
    %1480 = vmatprep.subr.mxu0 0.0
    %1481 = vmatpush2.xpose.msra.mxu0 0.0
    %1482 = vmatprep.subr.mxu0 0.0
    %1483 = vmatpush2.xpose.msra.mxu0 0.0
    %1484 = vmatprep.subr.mxu0 0.0
    %1485 = vmatpush2.xpose.msra.mxu0 0.0
    %1486 = vmatprep.subr.mxu0 0.0
    %1487 = vmatpush2.xpose.msra.mxu0 0.0
    %1488 = vmatprep.subr.mxu0 0.0
    %1489 = vmatpush2.xpose.msra.mxu0 0.0
    %1490 = vmatprep.subr.mxu0 0.0
    %1491 = vmatpush2.xpose.msra.mxu0 0.0
    %1492 = vmatprep.subr.mxu0 0.0
    %1493 = vmatpush2.xpose.msra.mxu0 0.0
    %1494 = vmatprep.subr.mxu0 0.0
    %1495 = vmatpush2.xpose.msra.mxu0 0.0
    %1496 = vmatprep.subr.mxu0 0.0
    %1497 = vmatpush2.xpose.msra.mxu0 0.0
    %1498 = vmatprep.subr.mxu0 0.0
    %1499 = vmatpush2.xpose.msra.mxu0 0.0
    %1500 = vmatprep.subr.mxu0 0.0
    %1501 = vmatpush2.xpose.msra.mxu0 0.0
    %1502 = vmatprep.subr.mxu0 0.0
    %1503 = vmatpush2.xpose.msra.mxu0 0.0
    %1504 = vmatprep.mubr.f32.mxu0 0.0
    %1505 = vmatmul.mubr.f32.gmra.mxu0 %v1435
    %v1506 = vpop.f32.mrf.mxu0
    %v1507 = vadd.f32 %v1204, %v1506
    %v1508 = vpop.f32.mrf.mxu0
    %1509 = vdwg.mxu0
    %v1511 = vsel %vm1205, %v580, 0
    %v1514 = vsel %vm1205, %v890, 0
    %1516 = vmatprep.subr.mxu0 0.0
    %1517 = vmatpush1.xpose.msra.mxu0 0.0
    %1518 = vmatprep.subr.mxu0 0.0
    %1519 = vmatpush1.xpose.msra.mxu0 0.0
    %1520 = vmatprep.subr.mxu0 0.0
    %1521 = vmatpush1.xpose.msra.mxu0 0.0
    %1522 = vmatprep.subr.mxu0 0.0
    %1523 = vmatpush1.xpose.msra.mxu0 0.0
    %1524 = vmatprep.subr.mxu0 0.0
    %1525 = vmatpush1.xpose.msra.mxu0 0.0
    %1526 = vmatprep.subr.mxu0 0.0
    %1527 = vmatpush1.xpose.msra.mxu0 0.0
    %1528 = vmatprep.subr.mxu0 0.0
    %1529 = vmatpush1.xpose.msra.mxu0 0.0
    %1530 = vmatprep.subr.mxu0 0.0
    %1531 = vmatpush1.xpose.msra.mxu0 0.0
    %1532 = vmatprep.subr.mxu0 0.0
    %1533 = vmatpush1.xpose.msra.mxu0 0.0
    %1534 = vmatprep.subr.mxu0 0.0
    %1535 = vmatpush1.xpose.msra.mxu0 0.0
    %1536 = vmatprep.subr.mxu0 0.0
    %1537 = vmatpush1.xpose.msra.mxu0 0.0
    %1538 = vmatprep.subr.mxu0 0.0
    %1539 = vmatpush1.xpose.msra.mxu0 0.0
    %1540 = vmatprep.subr.mxu0 0.0
    %1541 = vmatpush1.xpose.msra.mxu0 0.0
    %1542 = vmatprep.subr.mxu0 0.0
    %1543 = vmatpush1.xpose.msra.mxu0 0.0
    %1544 = vmatprep.subr.mxu0 0.0
    %1545 = vmatpush1.xpose.msra.mxu0 0.0
    %1546 = vmatprep.subr.mxu0 0.0
    %1547 = vmatpush1.xpose.msra.mxu0 %v1514
    %1548 = vmatprep.subr.mxu0 0.0
    %1549 = vmatpush2.xpose.msra.mxu0 0.0
    %1550 = vmatprep.subr.mxu0 0.0
    %1551 = vmatpush2.xpose.msra.mxu0 0.0
    %1552 = vmatprep.subr.mxu0 0.0
    %1553 = vmatpush2.xpose.msra.mxu0 0.0
    %1554 = vmatprep.subr.mxu0 0.0
    %1555 = vmatpush2.xpose.msra.mxu0 0.0
    %1556 = vmatprep.subr.mxu0 0.0
    %1557 = vmatpush2.xpose.msra.mxu0 0.0
    %1558 = vmatprep.subr.mxu0 0.0
    %1559 = vmatpush2.xpose.msra.mxu0 0.0
    %1560 = vmatprep.subr.mxu0 0.0
    %1561 = vmatpush2.xpose.msra.mxu0 0.0
    %1562 = vmatprep.subr.mxu0 0.0
    %1563 = vmatpush2.xpose.msra.mxu0 0.0
    %1564 = vmatprep.subr.mxu0 0.0
    %1565 = vmatpush2.xpose.msra.mxu0 0.0
    %1566 = vmatprep.subr.mxu0 0.0
    %1567 = vmatpush2.xpose.msra.mxu0 0.0
    %1568 = vmatprep.subr.mxu0 0.0
    %1569 = vmatpush2.xpose.msra.mxu0 0.0
    %1570 = vmatprep.subr.mxu0 0.0
    %1571 = vmatpush2.xpose.msra.mxu0 0.0
    %1572 = vmatprep.subr.mxu0 0.0
    %1573 = vmatpush2.xpose.msra.mxu0 0.0
    %1574 = vmatprep.subr.mxu0 0.0
    %1575 = vmatpush2.xpose.msra.mxu0 0.0
    %1576 = vmatprep.subr.mxu0 0.0
    %1577 = vmatpush2.xpose.msra.mxu0 0.0
    %1578 = vmatprep.subr.mxu0 0.0
    %1579 = vmatpush2.xpose.msra.mxu0 0.0
    %1580 = vmatprep.mubr.f32.mxu0 0.0
    %1581 = vmatmul.mubr.f32.gmra.mxu0 %v1511
    %v1582 = vpop.f32.mrf.mxu0
    %v1583 = vadd.f32 %v1204, %v1582
    %v1584 = vpop.f32.mrf.mxu0
    %1585 = vdwg.mxu0
    %v1587 = vsel %vm1205, %v581, 0
    %v1590 = vsel %vm1205, %v891, 0
    %1592 = vmatprep.subr.mxu0 0.0
    %1593 = vmatpush1.xpose.msra.mxu0 0.0
    %1594 = vmatprep.subr.mxu0 0.0
    %1595 = vmatpush1.xpose.msra.mxu0 0.0
    %1596 = vmatprep.subr.mxu0 0.0
    %1597 = vmatpush1.xpose.msra.mxu0 0.0
    %1598 = vmatprep.subr.mxu0 0.0
    %1599 = vmatpush1.xpose.msra.mxu0 0.0
    %1600 = vmatprep.subr.mxu0 0.0
    %1601 = vmatpush1.xpose.msra.mxu0 0.0
    %1602 = vmatprep.subr.mxu0 0.0
    %1603 = vmatpush1.xpose.msra.mxu0 0.0
    %1604 = vmatprep.subr.mxu0 0.0
    %1605 = vmatpush1.xpose.msra.mxu0 0.0
    %1606 = vmatprep.subr.mxu0 0.0
    %1607 = vmatpush1.xpose.msra.mxu0 0.0
    %1608 = vmatprep.subr.mxu0 0.0
    %1609 = vmatpush1.xpose.msra.mxu0 0.0
    %1610 = vmatprep.subr.mxu0 0.0
    %1611 = vmatpush1.xpose.msra.mxu0 0.0
    %1612 = vmatprep.subr.mxu0 0.0
    %1613 = vmatpush1.xpose.msra.mxu0 0.0
    %1614 = vmatprep.subr.mxu0 0.0
    %1615 = vmatpush1.xpose.msra.mxu0 0.0
    %1616 = vmatprep.subr.mxu0 0.0
    %1617 = vmatpush1.xpose.msra.mxu0 0.0
    %1618 = vmatprep.subr.mxu0 0.0
    %1619 = vmatpush1.xpose.msra.mxu0 0.0
    %1620 = vmatprep.subr.mxu0 0.0
    %1621 = vmatpush1.xpose.msra.mxu0 0.0
    %1622 = vmatprep.subr.mxu0 0.0
    %1623 = vmatpush1.xpose.msra.mxu0 %v1590
    %1624 = vmatprep.subr.mxu0 0.0
    %1625 = vmatpush2.xpose.msra.mxu0 0.0
    %1626 = vmatprep.subr.mxu0 0.0
    %1627 = vmatpush2.xpose.msra.mxu0 0.0
    %1628 = vmatprep.subr.mxu0 0.0
    %1629 = vmatpush2.xpose.msra.mxu0 0.0
    %1630 = vmatprep.subr.mxu0 0.0
    %1631 = vmatpush2.xpose.msra.mxu0 0.0
    %1632 = vmatprep.subr.mxu0 0.0
    %1633 = vmatpush2.xpose.msra.mxu0 0.0
    %1634 = vmatprep.subr.mxu0 0.0
    %1635 = vmatpush2.xpose.msra.mxu0 0.0
    %1636 = vmatprep.subr.mxu0 0.0
    %1637 = vmatpush2.xpose.msra.mxu0 0.0
    %1638 = vmatprep.subr.mxu0 0.0
    %1639 = vmatpush2.xpose.msra.mxu0 0.0
    %1640 = vmatprep.subr.mxu0 0.0
    %1641 = vmatpush2.xpose.msra.mxu0 0.0
    %1642 = vmatprep.subr.mxu0 0.0
    %1643 = vmatpush2.xpose.msra.mxu0 0.0
    %1644 = vmatprep.subr.mxu0 0.0
    %1645 = vmatpush2.xpose.msra.mxu0 0.0
    %1646 = vmatprep.subr.mxu0 0.0
    %1647 = vmatpush2.xpose.msra.mxu0 0.0
    %1648 = vmatprep.subr.mxu0 0.0
    %1649 = vmatpush2.xpose.msra.mxu0 0.0
    %1650 = vmatprep.subr.mxu0 0.0
    %1651 = vmatpush2.xpose.msra.mxu0 0.0
    %1652 = vmatprep.subr.mxu0 0.0
    %1653 = vmatpush2.xpose.msra.mxu0 0.0
    %1654 = vmatprep.subr.mxu0 0.0
    %1655 = vmatpush2.xpose.msra.mxu0 0.0
    %1656 = vmatprep.mubr.f32.mxu0 0.0
    %1657 = vmatmul.mubr.f32.gmra.mxu0 %v1587
    %v1658 = vpop.f32.mrf.mxu0
    %v1659 = vadd.f32 %v1204, %v1658
    %v1660 = vpop.f32.mrf.mxu0
    %1661 = vdwg.mxu0
    %v1663 = vsel %vm1205, %v582, 0
    %v1666 = vsel %vm1205, %v892, 0
    %1668 = vmatprep.subr.mxu0 0.0
    %1669 = vmatpush1.xpose.msra.mxu0 0.0
    %1670 = vmatprep.subr.mxu0 0.0
    %1671 = vmatpush1.xpose.msra.mxu0 0.0
    %1672 = vmatprep.subr.mxu0 0.0
    %1673 = vmatpush1.xpose.msra.mxu0 0.0
    %1674 = vmatprep.subr.mxu0 0.0
    %1675 = vmatpush1.xpose.msra.mxu0 0.0
    %1676 = vmatprep.subr.mxu0 0.0
    %1677 = vmatpush1.xpose.msra.mxu0 0.0
    %1678 = vmatprep.subr.mxu0 0.0
    %1679 = vmatpush1.xpose.msra.mxu0 0.0
    %1680 = vmatprep.subr.mxu0 0.0
    %1681 = vmatpush1.xpose.msra.mxu0 0.0
    %1682 = vmatprep.subr.mxu0 0.0
    %1683 = vmatpush1.xpose.msra.mxu0 0.0
    %1684 = vmatprep.subr.mxu0 0.0
    %1685 = vmatpush1.xpose.msra.mxu0 0.0
    %1686 = vmatprep.subr.mxu0 0.0
    %1687 = vmatpush1.xpose.msra.mxu0 0.0
    %1688 = vmatprep.subr.mxu0 0.0
    %1689 = vmatpush1.xpose.msra.mxu0 0.0
    %1690 = vmatprep.subr.mxu0 0.0
    %1691 = vmatpush1.xpose.msra.mxu0 0.0
    %1692 = vmatprep.subr.mxu0 0.0
    %1693 = vmatpush1.xpose.msra.mxu0 0.0
    %1694 = vmatprep.subr.mxu0 0.0
    %1695 = vmatpush1.xpose.msra.mxu0 0.0
    %1696 = vmatprep.subr.mxu0 0.0
    %1697 = vmatpush1.xpose.msra.mxu0 0.0
    %1698 = vmatprep.subr.mxu0 0.0
    %1699 = vmatpush1.xpose.msra.mxu0 %v1666
    %1700 = vmatprep.subr.mxu0 0.0
    %1701 = vmatpush2.xpose.msra.mxu0 0.0
    %1702 = vmatprep.subr.mxu0 0.0
    %1703 = vmatpush2.xpose.msra.mxu0 0.0
    %1704 = vmatprep.subr.mxu0 0.0
    %1705 = vmatpush2.xpose.msra.mxu0 0.0
    %1706 = vmatprep.subr.mxu0 0.0
    %1707 = vmatpush2.xpose.msra.mxu0 0.0
    %1708 = vmatprep.subr.mxu0 0.0
    %1709 = vmatpush2.xpose.msra.mxu0 0.0
    %1710 = vmatprep.subr.mxu0 0.0
    %1711 = vmatpush2.xpose.msra.mxu0 0.0
    %1712 = vmatprep.subr.mxu0 0.0
    %1713 = vmatpush2.xpose.msra.mxu0 0.0
    %1714 = vmatprep.subr.mxu0 0.0
    %1715 = vmatpush2.xpose.msra.mxu0 0.0
    %1716 = vmatprep.subr.mxu0 0.0
    %1717 = vmatpush2.xpose.msra.mxu0 0.0
    %1718 = vmatprep.subr.mxu0 0.0
    %1719 = vmatpush2.xpose.msra.mxu0 0.0
    %1720 = vmatprep.subr.mxu0 0.0
    %1721 = vmatpush2.xpose.msra.mxu0 0.0
    %1722 = vmatprep.subr.mxu0 0.0
    %1723 = vmatpush2.xpose.msra.mxu0 0.0
    %1724 = vmatprep.subr.mxu0 0.0
    %1725 = vmatpush2.xpose.msra.mxu0 0.0
    %1726 = vmatprep.subr.mxu0 0.0
    %1727 = vmatpush2.xpose.msra.mxu0 0.0
    %1728 = vmatprep.subr.mxu0 0.0
    %1729 = vmatpush2.xpose.msra.mxu0 0.0
    %1730 = vmatprep.subr.mxu0 0.0
    %1731 = vmatpush2.xpose.msra.mxu0 0.0
    %1732 = vmatprep.mubr.f32.mxu0 0.0
    %1733 = vmatmul.mubr.f32.gmra.mxu0 %v1663
    %v1734 = vpop.f32.mrf.mxu0
    %v1735 = vadd.f32 %v1204, %v1734
    %v1736 = vpop.f32.mrf.mxu0
    %1737 = vdwg.mxu0
    %v1739 = vsel %vm1205, %v583, 0
    %v1742 = vsel %vm1205, %v893, 0
    %1744 = vmatprep.subr.mxu0 0.0
    %1745 = vmatpush1.xpose.msra.mxu0 0.0
    %1746 = vmatprep.subr.mxu0 0.0
    %1747 = vmatpush1.xpose.msra.mxu0 0.0
    %1748 = vmatprep.subr.mxu0 0.0
    %1749 = vmatpush1.xpose.msra.mxu0 0.0
    %1750 = vmatprep.subr.mxu0 0.0
    %1751 = vmatpush1.xpose.msra.mxu0 0.0
    %1752 = vmatprep.subr.mxu0 0.0
    %1753 = vmatpush1.xpose.msra.mxu0 0.0
    %1754 = vmatprep.subr.mxu0 0.0
    %1755 = vmatpush1.xpose.msra.mxu0 0.0
    %1756 = vmatprep.subr.mxu0 0.0
    %1757 = vmatpush1.xpose.msra.mxu0 0.0
    %1758 = vmatprep.subr.mxu0 0.0
    %1759 = vmatpush1.xpose.msra.mxu0 0.0
    %1760 = vmatprep.subr.mxu0 0.0
    %1761 = vmatpush1.xpose.msra.mxu0 0.0
    %1762 = vmatprep.subr.mxu0 0.0
    %1763 = vmatpush1.xpose.msra.mxu0 0.0
    %1764 = vmatprep.subr.mxu0 0.0
    %1765 = vmatpush1.xpose.msra.mxu0 0.0
    %1766 = vmatprep.subr.mxu0 0.0
    %1767 = vmatpush1.xpose.msra.mxu0 0.0
    %1768 = vmatprep.subr.mxu0 0.0
    %1769 = vmatpush1.xpose.msra.mxu0 0.0
    %1770 = vmatprep.subr.mxu0 0.0
    %1771 = vmatpush1.xpose.msra.mxu0 0.0
    %1772 = vmatprep.subr.mxu0 0.0
    %1773 = vmatpush1.xpose.msra.mxu0 0.0
    %1774 = vmatprep.subr.mxu0 0.0
    %1775 = vmatpush1.xpose.msra.mxu0 %v1742
    %1776 = vmatprep.subr.mxu0 0.0
    %1777 = vmatpush2.xpose.msra.mxu0 0.0
    %1778 = vmatprep.subr.mxu0 0.0
    %1779 = vmatpush2.xpose.msra.mxu0 0.0
    %1780 = vmatprep.subr.mxu0 0.0
    %1781 = vmatpush2.xpose.msra.mxu0 0.0
    %1782 = vmatprep.subr.mxu0 0.0
    %1783 = vmatpush2.xpose.msra.mxu0 0.0
    %1784 = vmatprep.subr.mxu0 0.0
    %1785 = vmatpush2.xpose.msra.mxu0 0.0
    %1786 = vmatprep.subr.mxu0 0.0
    %1787 = vmatpush2.xpose.msra.mxu0 0.0
    %1788 = vmatprep.subr.mxu0 0.0
    %1789 = vmatpush2.xpose.msra.mxu0 0.0
    %1790 = vmatprep.subr.mxu0 0.0
    %1791 = vmatpush2.xpose.msra.mxu0 0.0
    %1792 = vmatprep.subr.mxu0 0.0
    %1793 = vmatpush2.xpose.msra.mxu0 0.0
    %1794 = vmatprep.subr.mxu0 0.0
    %1795 = vmatpush2.xpose.msra.mxu0 0.0
    %1796 = vmatprep.subr.mxu0 0.0
    %1797 = vmatpush2.xpose.msra.mxu0 0.0
    %1798 = vmatprep.subr.mxu0 0.0
    %1799 = vmatpush2.xpose.msra.mxu0 0.0
    %1800 = vmatprep.subr.mxu0 0.0
    %1801 = vmatpush2.xpose.msra.mxu0 0.0
    %1802 = vmatprep.subr.mxu0 0.0
    %1803 = vmatpush2.xpose.msra.mxu0 0.0
    %1804 = vmatprep.subr.mxu0 0.0
    %1805 = vmatpush2.xpose.msra.mxu0 0.0
    %1806 = vmatprep.subr.mxu0 0.0
    %1807 = vmatpush2.xpose.msra.mxu0 0.0
    %1808 = vmatprep.mubr.f32.mxu0 0.0
    %1809 = vmatmul.mubr.f32.gmra.mxu0 %v1739
    %v1810 = vpop.f32.mrf.mxu0
    %v1811 = vadd.f32 %v1204, %v1810
    %v1812 = vpop.f32.mrf.mxu0
    %1813 = vdwg.mxu0
    %v1814 = vsel %vm1205, %v1279, -inf
    %1815 = vmax.xlane.f32.xlu0 %v1814
    %v1816 = vpop.xlane.xlu0 %1815
    %v1817 = vsel %vm1205, %v1355, -inf
    %1818 = vmax.xlane.f32.xlu0 %v1817
    %v1819 = vpop.xlane.xlu0 %1818
    %v1820 = vsel %vm1205, %v1431, -inf
    %1821 = vmax.xlane.f32.xlu0 %v1820
    %v1822 = vpop.xlane.xlu0 %1821
    %v1823 = vsel %vm1205, %v1507, -inf
    %1824 = vmax.xlane.f32.xlu0 %v1823
    %v1825 = vpop.xlane.xlu0 %1824
    %v1826 = vsel %vm1205, %v1583, -inf
    %1827 = vmax.xlane.f32.xlu0 %v1826
    %v1828 = vpop.xlane.xlu0 %1827
    %v1829 = vsel %vm1205, %v1659, -inf
    %1830 = vmax.xlane.f32.xlu0 %v1829
    %v1831 = vpop.xlane.xlu0 %1830
    %v1832 = vsel %vm1205, %v1735, -inf
    %1833 = vmax.xlane.f32.xlu0 %v1832
    %v1834 = vpop.xlane.xlu0 %1833
    %v1835 = vsel %vm1205, %v1811, -inf
    %1836 = vmax.xlane.f32.xlu0 %v1835
    %v1837 = vpop.xlane.xlu0 %1836
    %v1838 = vsub.f32 %v1279, %v1816
    %v1839 = vsub.f32 %v1355, %v1819
    %v1840 = vsub.f32 %v1431, %v1822
    %v1841 = vsub.f32 %v1507, %v1825
    %v1842 = vsub.f32 %v1583, %v1828
    %v1843 = vsub.f32 %v1659, %v1831
    %v1844 = vsub.f32 %v1735, %v1834
    %v1845 = vsub.f32 %v1811, %v1837
    %v1846 = vmul.f32 %v1838, 1.442695
    %v1847 = vpow.pop %v1846
    %v1848 = vmul.f32 %v1839, 1.442695
    %v1849 = vpow.pop %v1848
    %v1850 = vmul.f32 %v1840, 1.442695
    %v1851 = vpow.pop %v1850
    %v1852 = vmul.f32 %v1841, 1.442695
    %v1853 = vpow.pop %v1852
    %v1854 = vmul.f32 %v1842, 1.442695
    %v1855 = vpow.pop %v1854
    %v1856 = vmul.f32 %v1843, 1.442695
    %v1857 = vpow.pop %v1856
    %v1858 = vmul.f32 %v1844, 1.442695
    %v1859 = vpow.pop %v1858
    %v1860 = vmul.f32 %v1845, 1.442695
    %v1861 = vpow.pop %v1860
    %v1862 = vsel %vm1205, %v1847, 0.0
    %1863 = vadd.xlane.f32.xlu0 %v1862
    %v1864 = vpop.xlane.xlu0 %1863
    %v1865 = vsel %vm1205, %v1849, 0.0
    %1866 = vadd.xlane.f32.xlu0 %v1865
    %v1867 = vpop.xlane.xlu0 %1866
    %v1868 = vsel %vm1205, %v1851, 0.0
    %1869 = vadd.xlane.f32.xlu0 %v1868
    %v1870 = vpop.xlane.xlu0 %1869
    %v1871 = vsel %vm1205, %v1853, 0.0
    %1872 = vadd.xlane.f32.xlu0 %v1871
    %v1873 = vpop.xlane.xlu0 %1872
    %v1874 = vsel %vm1205, %v1855, 0.0
    %1875 = vadd.xlane.f32.xlu0 %v1874
    %v1876 = vpop.xlane.xlu0 %1875
    %v1877 = vsel %vm1205, %v1857, 0.0
    %1878 = vadd.xlane.f32.xlu0 %v1877
    %v1879 = vpop.xlane.xlu0 %1878
    %v1880 = vsel %vm1205, %v1859, 0.0
    %1881 = vadd.xlane.f32.xlu0 %v1880
    %v1882 = vpop.xlane.xlu0 %1881
    %v1883 = vsel %vm1205, %v1861, 0.0
    %1884 = vadd.xlane.f32.xlu0 %v1883
    %v1885 = vpop.xlane.xlu0 %1884
    %v1886 = vrcp.pop %v1864
    %v1887 = vrcp.pop %v1867
    %v1888 = vrcp.pop %v1870
    %v1889 = vrcp.pop %v1873
    %v1890 = vrcp.pop %v1876
    %v1891 = vrcp.pop %v1879
    %v1892 = vrcp.pop %v1882
    %v1893 = vrcp.pop %v1885
    %v1894 = vmul.f32 %v1847, %v1886
    %v1895 = vmul.f32 %v1849, %v1887
    %v1896 = vmul.f32 %v1851, %v1888
    %v1897 = vmul.f32 %v1853, %v1889
    %v1898 = vmul.f32 %v1855, %v1890
    %v1899 = vmul.f32 %v1857, %v1891
    %v1900 = vmul.f32 %v1859, %v1892
    %v1901 = vmul.f32 %v1861, %v1893
    %v1903 = vsel %vm1205, %v1894, 0
    %1905 = vmatprep.subr.mxu0 0.0
    %1906 = vmatpush1.msra.mxu0 0.0
    %1907 = vmatprep.subr.mxu0 0.0
    %1908 = vmatpush1.msra.mxu0 0.0
    %1909 = vmatprep.subr.mxu0 0.0
    %1910 = vmatpush1.msra.mxu0 0.0
    %1911 = vmatprep.subr.mxu0 0.0
    %1912 = vmatpush1.msra.mxu0 0.0
    %1913 = vmatprep.subr.mxu0 0.0
    %1914 = vmatpush1.msra.mxu0 0.0
    %1915 = vmatprep.subr.mxu0 0.0
    %1916 = vmatpush1.msra.mxu0 0.0
    %1917 = vmatprep.subr.mxu0 0.0
    %1918 = vmatpush1.msra.mxu0 0.0
    %1919 = vmatprep.subr.mxu0 0.0
    %1920 = vmatpush1.msra.mxu0 0.0
    %1921 = vmatprep.subr.mxu0 0.0
    %1922 = vmatpush1.msra.mxu0 0.0
    %1923 = vmatprep.subr.mxu0 0.0
    %1924 = vmatpush1.msra.mxu0 0.0
    %1925 = vmatprep.subr.mxu0 0.0
    %1926 = vmatpush1.msra.mxu0 0.0
    %1927 = vmatprep.subr.mxu0 0.0
    %1928 = vmatpush1.msra.mxu0 0.0
    %1929 = vmatprep.subr.mxu0 0.0
    %1930 = vmatpush1.msra.mxu0 0.0
    %1931 = vmatprep.subr.mxu0 0.0
    %1932 = vmatpush1.msra.mxu0 0.0
    %1933 = vmatprep.subr.mxu0 0.0
    %1934 = vmatpush1.msra.mxu0 0.0
    %1935 = vmatprep.subr.mxu0 0.0
    %1936 = vmatpush1.msra.mxu0 %v1132
    %1937 = vmatprep.subr.mxu0 0.0
    %1938 = vmatpush2.msra.mxu0 0.0
    %1939 = vmatprep.subr.mxu0 0.0
    %1940 = vmatpush2.msra.mxu0 0.0
    %1941 = vmatprep.subr.mxu0 0.0
    %1942 = vmatpush2.msra.mxu0 0.0
    %1943 = vmatprep.subr.mxu0 0.0
    %1944 = vmatpush2.msra.mxu0 0.0
    %1945 = vmatprep.subr.mxu0 0.0
    %1946 = vmatpush2.msra.mxu0 0.0
    %1947 = vmatprep.subr.mxu0 0.0
    %1948 = vmatpush2.msra.mxu0 0.0
    %1949 = vmatprep.subr.mxu0 0.0
    %1950 = vmatpush2.msra.mxu0 0.0
    %1951 = vmatprep.subr.mxu0 0.0
    %1952 = vmatpush2.msra.mxu0 0.0
    %1953 = vmatprep.subr.mxu0 0.0
    %1954 = vmatpush2.msra.mxu0 0.0
    %1955 = vmatprep.subr.mxu0 0.0
    %1956 = vmatpush2.msra.mxu0 0.0
    %1957 = vmatprep.subr.mxu0 0.0
    %1958 = vmatpush2.msra.mxu0 0.0
    %1959 = vmatprep.subr.mxu0 0.0
    %1960 = vmatpush2.msra.mxu0 0.0
    %1961 = vmatprep.subr.mxu0 0.0
    %1962 = vmatpush2.msra.mxu0 0.0
    %1963 = vmatprep.subr.mxu0 0.0
    %1964 = vmatpush2.msra.mxu0 0.0
    %1965 = vmatprep.subr.mxu0 0.0
    %1966 = vmatpush2.msra.mxu0 0.0
    %1967 = vmatprep.subr.mxu0 0.0
    %1968 = vmatpush2.msra.mxu0 0.0
    %1969 = vmatprep.mubr.f32.mxu0 0.0
    %1970 = vmatmul.mubr.f32.gmra.mxu0 %v1903
    %v1971 = vpop.f32.mrf.mxu0
    %v1972 = vadd.f32 0.0, %v1971
    %v1973 = vpop.f32.mrf.mxu0
    %1974 = vdwg.mxu0
    %v1976 = vsel %vm1205, %v1895, 0
    %1978 = vmatprep.subr.mxu0 0.0
    %1979 = vmatpush1.msra.mxu0 0.0
    %1980 = vmatprep.subr.mxu0 0.0
    %1981 = vmatpush1.msra.mxu0 0.0
    %1982 = vmatprep.subr.mxu0 0.0
    %1983 = vmatpush1.msra.mxu0 0.0
    %1984 = vmatprep.subr.mxu0 0.0
    %1985 = vmatpush1.msra.mxu0 0.0
    %1986 = vmatprep.subr.mxu0 0.0
    %1987 = vmatpush1.msra.mxu0 0.0
    %1988 = vmatprep.subr.mxu0 0.0
    %1989 = vmatpush1.msra.mxu0 0.0
    %1990 = vmatprep.subr.mxu0 0.0
    %1991 = vmatpush1.msra.mxu0 0.0
    %1992 = vmatprep.subr.mxu0 0.0
    %1993 = vmatpush1.msra.mxu0 0.0
    %1994 = vmatprep.subr.mxu0 0.0
    %1995 = vmatpush1.msra.mxu0 0.0
    %1996 = vmatprep.subr.mxu0 0.0
    %1997 = vmatpush1.msra.mxu0 0.0
    %1998 = vmatprep.subr.mxu0 0.0
    %1999 = vmatpush1.msra.mxu0 0.0
    %2000 = vmatprep.subr.mxu0 0.0
    %2001 = vmatpush1.msra.mxu0 0.0
    %2002 = vmatprep.subr.mxu0 0.0
    %2003 = vmatpush1.msra.mxu0 0.0
    %2004 = vmatprep.subr.mxu0 0.0
    %2005 = vmatpush1.msra.mxu0 0.0
    %2006 = vmatprep.subr.mxu0 0.0
    %2007 = vmatpush1.msra.mxu0 0.0
    %2008 = vmatprep.subr.mxu0 0.0
    %2009 = vmatpush1.msra.mxu0 %v1133
    %2010 = vmatprep.subr.mxu0 0.0
    %2011 = vmatpush2.msra.mxu0 0.0
    %2012 = vmatprep.subr.mxu0 0.0
    %2013 = vmatpush2.msra.mxu0 0.0
    %2014 = vmatprep.subr.mxu0 0.0
    %2015 = vmatpush2.msra.mxu0 0.0
    %2016 = vmatprep.subr.mxu0 0.0
    %2017 = vmatpush2.msra.mxu0 0.0
    %2018 = vmatprep.subr.mxu0 0.0
    %2019 = vmatpush2.msra.mxu0 0.0
    %2020 = vmatprep.subr.mxu0 0.0
    %2021 = vmatpush2.msra.mxu0 0.0
    %2022 = vmatprep.subr.mxu0 0.0
    %2023 = vmatpush2.msra.mxu0 0.0
    %2024 = vmatprep.subr.mxu0 0.0
    %2025 = vmatpush2.msra.mxu0 0.0
    %2026 = vmatprep.subr.mxu0 0.0
    %2027 = vmatpush2.msra.mxu0 0.0
    %2028 = vmatprep.subr.mxu0 0.0
    %2029 = vmatpush2.msra.mxu0 0.0
    %2030 = vmatprep.subr.mxu0 0.0
    %2031 = vmatpush2.msra.mxu0 0.0
    %2032 = vmatprep.subr.mxu0 0.0
    %2033 = vmatpush2.msra.mxu0 0.0
    %2034 = vmatprep.subr.mxu0 0.0
    %2035 = vmatpush2.msra.mxu0 0.0
    %2036 = vmatprep.subr.mxu0 0.0
    %2037 = vmatpush2.msra.mxu0 0.0
    %2038 = vmatprep.subr.mxu0 0.0
    %2039 = vmatpush2.msra.mxu0 0.0
    %2040 = vmatprep.subr.mxu0 0.0
    %2041 = vmatpush2.msra.mxu0 0.0
    %2042 = vmatprep.mubr.f32.mxu0 0.0
    %2043 = vmatmul.mubr.f32.gmra.mxu0 %v1976
    %v2044 = vpop.f32.mrf.mxu0
    %v2045 = vadd.f32 0.0, %v2044
    %v2046 = vpop.f32.mrf.mxu0
    %2047 = vdwg.mxu0
    %v2049 = vsel %vm1205, %v1896, 0
    %2051 = vmatprep.subr.mxu0 0.0
    %2052 = vmatpush1.msra.mxu0 0.0
    %2053 = vmatprep.subr.mxu0 0.0
    %2054 = vmatpush1.msra.mxu0 0.0
    %2055 = vmatprep.subr.mxu0 0.0
    %2056 = vmatpush1.msra.mxu0 0.0
    %2057 = vmatprep.subr.mxu0 0.0
    %2058 = vmatpush1.msra.mxu0 0.0
    %2059 = vmatprep.subr.mxu0 0.0
    %2060 = vmatpush1.msra.mxu0 0.0
    %2061 = vmatprep.subr.mxu0 0.0
    %2062 = vmatpush1.msra.mxu0 0.0
    %2063 = vmatprep.subr.mxu0 0.0
    %2064 = vmatpush1.msra.mxu0 0.0
    %2065 = vmatprep.subr.mxu0 0.0
    %2066 = vmatpush1.msra.mxu0 0.0
    %2067 = vmatprep.subr.mxu0 0.0
    %2068 = vmatpush1.msra.mxu0 0.0
    %2069 = vmatprep.subr.mxu0 0.0
    %2070 = vmatpush1.msra.mxu0 0.0
    %2071 = vmatprep.subr.mxu0 0.0
    %2072 = vmatpush1.msra.mxu0 0.0
    %2073 = vmatprep.subr.mxu0 0.0
    %2074 = vmatpush1.msra.mxu0 0.0
    %2075 = vmatprep.subr.mxu0 0.0
    %2076 = vmatpush1.msra.mxu0 0.0
    %2077 = vmatprep.subr.mxu0 0.0
    %2078 = vmatpush1.msra.mxu0 0.0
    %2079 = vmatprep.subr.mxu0 0.0
    %2080 = vmatpush1.msra.mxu0 0.0
    %2081 = vmatprep.subr.mxu0 0.0
    %2082 = vmatpush1.msra.mxu0 %v1134
    %2083 = vmatprep.subr.mxu0 0.0
    %2084 = vmatpush2.msra.mxu0 0.0
    %2085 = vmatprep.subr.mxu0 0.0
    %2086 = vmatpush2.msra.mxu0 0.0
    %2087 = vmatprep.subr.mxu0 0.0
    %2088 = vmatpush2.msra.mxu0 0.0
    %2089 = vmatprep.subr.mxu0 0.0
    %2090 = vmatpush2.msra.mxu0 0.0
    %2091 = vmatprep.subr.mxu0 0.0
    %2092 = vmatpush2.msra.mxu0 0.0
    %2093 = vmatprep.subr.mxu0 0.0
    %2094 = vmatpush2.msra.mxu0 0.0
    %2095 = vmatprep.subr.mxu0 0.0
    %2096 = vmatpush2.msra.mxu0 0.0
    %2097 = vmatprep.subr.mxu0 0.0
    %2098 = vmatpush2.msra.mxu0 0.0
    %2099 = vmatprep.subr.mxu0 0.0
    %2100 = vmatpush2.msra.mxu0 0.0
    %2101 = vmatprep.subr.mxu0 0.0
    %2102 = vmatpush2.msra.mxu0 0.0
    %2103 = vmatprep.subr.mxu0 0.0
    %2104 = vmatpush2.msra.mxu0 0.0
    %2105 = vmatprep.subr.mxu0 0.0
    %2106 = vmatpush2.msra.mxu0 0.0
    %2107 = vmatprep.subr.mxu0 0.0
    %2108 = vmatpush2.msra.mxu0 0.0
    %2109 = vmatprep.subr.mxu0 0.0
    %2110 = vmatpush2.msra.mxu0 0.0
    %2111 = vmatprep.subr.mxu0 0.0
    %2112 = vmatpush2.msra.mxu0 0.0
    %2113 = vmatprep.subr.mxu0 0.0
    %2114 = vmatpush2.msra.mxu0 0.0
    %2115 = vmatprep.mubr.f32.mxu0 0.0
    %2116 = vmatmul.mubr.f32.gmra.mxu0 %v2049
    %v2117 = vpop.f32.mrf.mxu0
    %v2118 = vadd.f32 0.0, %v2117
    %v2119 = vpop.f32.mrf.mxu0
    %2120 = vdwg.mxu0
    %v2122 = vsel %vm1205, %v1897, 0
    %2124 = vmatprep.subr.mxu0 0.0
    %2125 = vmatpush1.msra.mxu0 0.0
    %2126 = vmatprep.subr.mxu0 0.0
    %2127 = vmatpush1.msra.mxu0 0.0
    %2128 = vmatprep.subr.mxu0 0.0
    %2129 = vmatpush1.msra.mxu0 0.0
    %2130 = vmatprep.subr.mxu0 0.0
    %2131 = vmatpush1.msra.mxu0 0.0
    %2132 = vmatprep.subr.mxu0 0.0
    %2133 = vmatpush1.msra.mxu0 0.0
    %2134 = vmatprep.subr.mxu0 0.0
    %2135 = vmatpush1.msra.mxu0 0.0
    %2136 = vmatprep.subr.mxu0 0.0
    %2137 = vmatpush1.msra.mxu0 0.0
    %2138 = vmatprep.subr.mxu0 0.0
    %2139 = vmatpush1.msra.mxu0 0.0
    %2140 = vmatprep.subr.mxu0 0.0
    %2141 = vmatpush1.msra.mxu0 0.0
    %2142 = vmatprep.subr.mxu0 0.0
    %2143 = vmatpush1.msra.mxu0 0.0
    %2144 = vmatprep.subr.mxu0 0.0
    %2145 = vmatpush1.msra.mxu0 0.0
    %2146 = vmatprep.subr.mxu0 0.0
    %2147 = vmatpush1.msra.mxu0 0.0
    %2148 = vmatprep.subr.mxu0 0.0
    %2149 = vmatpush1.msra.mxu0 0.0
    %2150 = vmatprep.subr.mxu0 0.0
    %2151 = vmatpush1.msra.mxu0 0.0
    %2152 = vmatprep.subr.mxu0 0.0
    %2153 = vmatpush1.msra.mxu0 0.0
    %2154 = vmatprep.subr.mxu0 0.0
    %2155 = vmatpush1.msra.mxu0 %v1135
    %2156 = vmatprep.subr.mxu0 0.0
    %2157 = vmatpush2.msra.mxu0 0.0
    %2158 = vmatprep.subr.mxu0 0.0
    %2159 = vmatpush2.msra.mxu0 0.0
    %2160 = vmatprep.subr.mxu0 0.0
    %2161 = vmatpush2.msra.mxu0 0.0
    %2162 = vmatprep.subr.mxu0 0.0
    %2163 = vmatpush2.msra.mxu0 0.0
    %2164 = vmatprep.subr.mxu0 0.0
    %2165 = vmatpush2.msra.mxu0 0.0
    %2166 = vmatprep.subr.mxu0 0.0
    %2167 = vmatpush2.msra.mxu0 0.0
    %2168 = vmatprep.subr.mxu0 0.0
    %2169 = vmatpush2.msra.mxu0 0.0
    %2170 = vmatprep.subr.mxu0 0.0
    %2171 = vmatpush2.msra.mxu0 0.0
    %2172 = vmatprep.subr.mxu0 0.0
    %2173 = vmatpush2.msra.mxu0 0.0
    %2174 = vmatprep.subr.mxu0 0.0
    %2175 = vmatpush2.msra.mxu0 0.0
    %2176 = vmatprep.subr.mxu0 0.0
    %2177 = vmatpush2.msra.mxu0 0.0
    %2178 = vmatprep.subr.mxu0 0.0
    %2179 = vmatpush2.msra.mxu0 0.0
    %2180 = vmatprep.subr.mxu0 0.0
    %2181 = vmatpush2.msra.mxu0 0.0
    %2182 = vmatprep.subr.mxu0 0.0
    %2183 = vmatpush2.msra.mxu0 0.0
    %2184 = vmatprep.subr.mxu0 0.0
    %2185 = vmatpush2.msra.mxu0 0.0
    %2186 = vmatprep.subr.mxu0 0.0
    %2187 = vmatpush2.msra.mxu0 0.0
    %2188 = vmatprep.mubr.f32.mxu0 0.0
    %2189 = vmatmul.mubr.f32.gmra.mxu0 %v2122
    %v2190 = vpop.f32.mrf.mxu0
    %v2191 = vadd.f32 0.0, %v2190
    %v2192 = vpop.f32.mrf.mxu0
    %2193 = vdwg.mxu0
    %v2195 = vsel %vm1205, %v1898, 0
    %2197 = vmatprep.subr.mxu0 0.0
    %2198 = vmatpush1.msra.mxu0 0.0
    %2199 = vmatprep.subr.mxu0 0.0
    %2200 = vmatpush1.msra.mxu0 0.0
    %2201 = vmatprep.subr.mxu0 0.0
    %2202 = vmatpush1.msra.mxu0 0.0
    %2203 = vmatprep.subr.mxu0 0.0
    %2204 = vmatpush1.msra.mxu0 0.0
    %2205 = vmatprep.subr.mxu0 0.0
    %2206 = vmatpush1.msra.mxu0 0.0
    %2207 = vmatprep.subr.mxu0 0.0
    %2208 = vmatpush1.msra.mxu0 0.0
    %2209 = vmatprep.subr.mxu0 0.0
    %2210 = vmatpush1.msra.mxu0 0.0
    %2211 = vmatprep.subr.mxu0 0.0
    %2212 = vmatpush1.msra.mxu0 0.0
    %2213 = vmatprep.subr.mxu0 0.0
    %2214 = vmatpush1.msra.mxu0 0.0
    %2215 = vmatprep.subr.mxu0 0.0
    %2216 = vmatpush1.msra.mxu0 0.0
    %2217 = vmatprep.subr.mxu0 0.0
    %2218 = vmatpush1.msra.mxu0 0.0
    %2219 = vmatprep.subr.mxu0 0.0
    %2220 = vmatpush1.msra.mxu0 0.0
    %2221 = vmatprep.subr.mxu0 0.0
    %2222 = vmatpush1.msra.mxu0 0.0
    %2223 = vmatprep.subr.mxu0 0.0
    %2224 = vmatpush1.msra.mxu0 0.0
    %2225 = vmatprep.subr.mxu0 0.0
    %2226 = vmatpush1.msra.mxu0 0.0
    %2227 = vmatprep.subr.mxu0 0.0
    %2228 = vmatpush1.msra.mxu0 %v1200
    %2229 = vmatprep.subr.mxu0 0.0
    %2230 = vmatpush2.msra.mxu0 0.0
    %2231 = vmatprep.subr.mxu0 0.0
    %2232 = vmatpush2.msra.mxu0 0.0
    %2233 = vmatprep.subr.mxu0 0.0
    %2234 = vmatpush2.msra.mxu0 0.0
    %2235 = vmatprep.subr.mxu0 0.0
    %2236 = vmatpush2.msra.mxu0 0.0
    %2237 = vmatprep.subr.mxu0 0.0
    %2238 = vmatpush2.msra.mxu0 0.0
    %2239 = vmatprep.subr.mxu0 0.0
    %2240 = vmatpush2.msra.mxu0 0.0
    %2241 = vmatprep.subr.mxu0 0.0
    %2242 = vmatpush2.msra.mxu0 0.0
    %2243 = vmatprep.subr.mxu0 0.0
    %2244 = vmatpush2.msra.mxu0 0.0
    %2245 = vmatprep.subr.mxu0 0.0
    %2246 = vmatpush2.msra.mxu0 0.0
    %2247 = vmatprep.subr.mxu0 0.0
    %2248 = vmatpush2.msra.mxu0 0.0
    %2249 = vmatprep.subr.mxu0 0.0
    %2250 = vmatpush2.msra.mxu0 0.0
    %2251 = vmatprep.subr.mxu0 0.0
    %2252 = vmatpush2.msra.mxu0 0.0
    %2253 = vmatprep.subr.mxu0 0.0
    %2254 = vmatpush2.msra.mxu0 0.0
    %2255 = vmatprep.subr.mxu0 0.0
    %2256 = vmatpush2.msra.mxu0 0.0
    %2257 = vmatprep.subr.mxu0 0.0
    %2258 = vmatpush2.msra.mxu0 0.0
    %2259 = vmatprep.subr.mxu0 0.0
    %2260 = vmatpush2.msra.mxu0 0.0
    %2261 = vmatprep.mubr.f32.mxu0 0.0
    %2262 = vmatmul.mubr.f32.gmra.mxu0 %v2195
    %v2263 = vpop.f32.mrf.mxu0
    %v2264 = vadd.f32 0.0, %v2263
    %v2265 = vpop.f32.mrf.mxu0
    %2266 = vdwg.mxu0
    %v2268 = vsel %vm1205, %v1899, 0
    %2270 = vmatprep.subr.mxu0 0.0
    %2271 = vmatpush1.msra.mxu0 0.0
    %2272 = vmatprep.subr.mxu0 0.0
    %2273 = vmatpush1.msra.mxu0 0.0
    %2274 = vmatprep.subr.mxu0 0.0
    %2275 = vmatpush1.msra.mxu0 0.0
    %2276 = vmatprep.subr.mxu0 0.0
    %2277 = vmatpush1.msra.mxu0 0.0
    %2278 = vmatprep.subr.mxu0 0.0
    %2279 = vmatpush1.msra.mxu0 0.0
    %2280 = vmatprep.subr.mxu0 0.0
    %2281 = vmatpush1.msra.mxu0 0.0
    %2282 = vmatprep.subr.mxu0 0.0
    %2283 = vmatpush1.msra.mxu0 0.0
    %2284 = vmatprep.subr.mxu0 0.0
    %2285 = vmatpush1.msra.mxu0 0.0
    %2286 = vmatprep.subr.mxu0 0.0
    %2287 = vmatpush1.msra.mxu0 0.0
    %2288 = vmatprep.subr.mxu0 0.0
    %2289 = vmatpush1.msra.mxu0 0.0
    %2290 = vmatprep.subr.mxu0 0.0
    %2291 = vmatpush1.msra.mxu0 0.0
    %2292 = vmatprep.subr.mxu0 0.0
    %2293 = vmatpush1.msra.mxu0 0.0
    %2294 = vmatprep.subr.mxu0 0.0
    %2295 = vmatpush1.msra.mxu0 0.0
    %2296 = vmatprep.subr.mxu0 0.0
    %2297 = vmatpush1.msra.mxu0 0.0
    %2298 = vmatprep.subr.mxu0 0.0
    %2299 = vmatpush1.msra.mxu0 0.0
    %2300 = vmatprep.subr.mxu0 0.0
    %2301 = vmatpush1.msra.mxu0 %v1201
    %2302 = vmatprep.subr.mxu0 0.0
    %2303 = vmatpush2.msra.mxu0 0.0
    %2304 = vmatprep.subr.mxu0 0.0
    %2305 = vmatpush2.msra.mxu0 0.0
    %2306 = vmatprep.subr.mxu0 0.0
    %2307 = vmatpush2.msra.mxu0 0.0
    %2308 = vmatprep.subr.mxu0 0.0
    %2309 = vmatpush2.msra.mxu0 0.0
    %2310 = vmatprep.subr.mxu0 0.0
    %2311 = vmatpush2.msra.mxu0 0.0
    %2312 = vmatprep.subr.mxu0 0.0
    %2313 = vmatpush2.msra.mxu0 0.0
    %2314 = vmatprep.subr.mxu0 0.0
    %2315 = vmatpush2.msra.mxu0 0.0
    %2316 = vmatprep.subr.mxu0 0.0
    %2317 = vmatpush2.msra.mxu0 0.0
    %2318 = vmatprep.subr.mxu0 0.0
    %2319 = vmatpush2.msra.mxu0 0.0
    %2320 = vmatprep.subr.mxu0 0.0
    %2321 = vmatpush2.msra.mxu0 0.0
    %2322 = vmatprep.subr.mxu0 0.0
    %2323 = vmatpush2.msra.mxu0 0.0
    %2324 = vmatprep.subr.mxu0 0.0
    %2325 = vmatpush2.msra.mxu0 0.0
    %2326 = vmatprep.subr.mxu0 0.0
    %2327 = vmatpush2.msra.mxu0 0.0
    %2328 = vmatprep.subr.mxu0 0.0
    %2329 = vmatpush2.msra.mxu0 0.0
    %2330 = vmatprep.subr.mxu0 0.0
    %2331 = vmatpush2.msra.mxu0 0.0
    %2332 = vmatprep.subr.mxu0 0.0
    %2333 = vmatpush2.msra.mxu0 0.0
    %2334 = vmatprep.mubr.f32.mxu0 0.0
    %2335 = vmatmul.mubr.f32.gmra.mxu0 %v2268
    %v2336 = vpop.f32.mrf.mxu0
    %v2337 = vadd.f32 0.0, %v2336
    %v2338 = vpop.f32.mrf.mxu0
    %2339 = vdwg.mxu0
    %v2341 = vsel %vm1205, %v1900, 0
    %2343 = vmatprep.subr.mxu0 0.0
    %2344 = vmatpush1.msra.mxu0 0.0
    %2345 = vmatprep.subr.mxu0 0.0
    %2346 = vmatpush1.msra.mxu0 0.0
    %2347 = vmatprep.subr.mxu0 0.0
    %2348 = vmatpush1.msra.mxu0 0.0
    %2349 = vmatprep.subr.mxu0 0.0
    %2350 = vmatpush1.msra.mxu0 0.0
    %2351 = vmatprep.subr.mxu0 0.0
    %2352 = vmatpush1.msra.mxu0 0.0
    %2353 = vmatprep.subr.mxu0 0.0
    %2354 = vmatpush1.msra.mxu0 0.0
    %2355 = vmatprep.subr.mxu0 0.0
    %2356 = vmatpush1.msra.mxu0 0.0
    %2357 = vmatprep.subr.mxu0 0.0
    %2358 = vmatpush1.msra.mxu0 0.0
    %2359 = vmatprep.subr.mxu0 0.0
    %2360 = vmatpush1.msra.mxu0 0.0
    %2361 = vmatprep.subr.mxu0 0.0
    %2362 = vmatpush1.msra.mxu0 0.0
    %2363 = vmatprep.subr.mxu0 0.0
    %2364 = vmatpush1.msra.mxu0 0.0
    %2365 = vmatprep.subr.mxu0 0.0
    %2366 = vmatpush1.msra.mxu0 0.0
    %2367 = vmatprep.subr.mxu0 0.0
    %2368 = vmatpush1.msra.mxu0 0.0
    %2369 = vmatprep.subr.mxu0 0.0
    %2370 = vmatpush1.msra.mxu0 0.0
    %2371 = vmatprep.subr.mxu0 0.0
    %2372 = vmatpush1.msra.mxu0 0.0
    %2373 = vmatprep.subr.mxu0 0.0
    %2374 = vmatpush1.msra.mxu0 %v1202
    %2375 = vmatprep.subr.mxu0 0.0
    %2376 = vmatpush2.msra.mxu0 0.0
    %2377 = vmatprep.subr.mxu0 0.0
    %2378 = vmatpush2.msra.mxu0 0.0
    %2379 = vmatprep.subr.mxu0 0.0
    %2380 = vmatpush2.msra.mxu0 0.0
    %2381 = vmatprep.subr.mxu0 0.0
    %2382 = vmatpush2.msra.mxu0 0.0
    %2383 = vmatprep.subr.mxu0 0.0
    %2384 = vmatpush2.msra.mxu0 0.0
    %2385 = vmatprep.subr.mxu0 0.0
    %2386 = vmatpush2.msra.mxu0 0.0
    %2387 = vmatprep.subr.mxu0 0.0
    %2388 = vmatpush2.msra.mxu0 0.0
    %2389 = vmatprep.subr.mxu0 0.0
    %2390 = vmatpush2.msra.mxu0 0.0
    %2391 = vmatprep.subr.mxu0 0.0
    %2392 = vmatpush2.msra.mxu0 0.0
    %2393 = vmatprep.subr.mxu0 0.0
    %2394 = vmatpush2.msra.mxu0 0.0
    %2395 = vmatprep.subr.mxu0 0.0
    %2396 = vmatpush2.msra.mxu0 0.0
    %2397 = vmatprep.subr.mxu0 0.0
    %2398 = vmatpush2.msra.mxu0 0.0
    %2399 = vmatprep.subr.mxu0 0.0
    %2400 = vmatpush2.msra.mxu0 0.0
    %2401 = vmatprep.subr.mxu0 0.0
    %2402 = vmatpush2.msra.mxu0 0.0
    %2403 = vmatprep.subr.mxu0 0.0
    %2404 = vmatpush2.msra.mxu0 0.0
    %2405 = vmatprep.subr.mxu0 0.0
    %2406 = vmatpush2.msra.mxu0 0.0
    %2407 = vmatprep.mubr.f32.mxu0 0.0
    %2408 = vmatmul.mubr.f32.gmra.mxu0 %v2341
    %v2409 = vpop.f32.mrf.mxu0
    %v2410 = vadd.f32 0.0, %v2409
    %v2411 = vpop.f32.mrf.mxu0
    %2412 = vdwg.mxu0
    %v2414 = vsel %vm1205, %v1901, 0
    %2416 = vmatprep.subr.mxu0 0.0
    %2417 = vmatpush1.msra.mxu0 0.0
    %2418 = vmatprep.subr.mxu0 0.0
    %2419 = vmatpush1.msra.mxu0 0.0
    %2420 = vmatprep.subr.mxu0 0.0
    %2421 = vmatpush1.msra.mxu0 0.0
    %2422 = vmatprep.subr.mxu0 0.0
    %2423 = vmatpush1.msra.mxu0 0.0
    %2424 = vmatprep.subr.mxu0 0.0
    %2425 = vmatpush1.msra.mxu0 0.0
    %2426 = vmatprep.subr.mxu0 0.0
    %2427 = vmatpush1.msra.mxu0 0.0
    %2428 = vmatprep.subr.mxu0 0.0
    %2429 = vmatpush1.msra.mxu0 0.0
    %2430 = vmatprep.subr.mxu0 0.0
    %2431 = vmatpush1.msra.mxu0 0.0
    %2432 = vmatprep.subr.mxu0 0.0
    %2433 = vmatpush1.msra.mxu0 0.0
    %2434 = vmatprep.subr.mxu0 0.0
    %2435 = vmatpush1.msra.mxu0 0.0
    %2436 = vmatprep.subr.mxu0 0.0
    %2437 = vmatpush1.msra.mxu0 0.0
    %2438 = vmatprep.subr.mxu0 0.0
    %2439 = vmatpush1.msra.mxu0 0.0
    %2440 = vmatprep.subr.mxu0 0.0
    %2441 = vmatpush1.msra.mxu0 0.0
    %2442 = vmatprep.subr.mxu0 0.0
    %2443 = vmatpush1.msra.mxu0 0.0
    %2444 = vmatprep.subr.mxu0 0.0
    %2445 = vmatpush1.msra.mxu0 0.0
    %2446 = vmatprep.subr.mxu0 0.0
    %2447 = vmatpush1.msra.mxu0 %v1203
    %2448 = vmatprep.subr.mxu0 0.0
    %2449 = vmatpush2.msra.mxu0 0.0
    %2450 = vmatprep.subr.mxu0 0.0
    %2451 = vmatpush2.msra.mxu0 0.0
    %2452 = vmatprep.subr.mxu0 0.0
    %2453 = vmatpush2.msra.mxu0 0.0
    %2454 = vmatprep.subr.mxu0 0.0
    %2455 = vmatpush2.msra.mxu0 0.0
    %2456 = vmatprep.subr.mxu0 0.0
    %2457 = vmatpush2.msra.mxu0 0.0
    %2458 = vmatprep.subr.mxu0 0.0
    %2459 = vmatpush2.msra.mxu0 0.0
    %2460 = vmatprep.subr.mxu0 0.0
    %2461 = vmatpush2.msra.mxu0 0.0
    %2462 = vmatprep.subr.mxu0 0.0
    %2463 = vmatpush2.msra.mxu0 0.0
    %2464 = vmatprep.subr.mxu0 0.0
    %2465 = vmatpush2.msra.mxu0 0.0
    %2466 = vmatprep.subr.mxu0 0.0
    %2467 = vmatpush2.msra.mxu0 0.0
    %2468 = vmatprep.subr.mxu0 0.0
    %2469 = vmatpush2.msra.mxu0 0.0
    %2470 = vmatprep.subr.mxu0 0.0
    %2471 = vmatpush2.msra.mxu0 0.0
    %2472 = vmatprep.subr.mxu0 0.0
    %2473 = vmatpush2.msra.mxu0 0.0
    %2474 = vmatprep.subr.mxu0 0.0
    %2475 = vmatpush2.msra.mxu0 0.0
    %2476 = vmatprep.subr.mxu0 0.0
    %2477 = vmatpush2.msra.mxu0 0.0
    %2478 = vmatprep.subr.mxu0 0.0
    %2479 = vmatpush2.msra.mxu0 0.0
    %2480 = vmatprep.mubr.f32.mxu0 0.0
    %2481 = vmatmul.mubr.f32.gmra.mxu0 %v2414
    %v2482 = vpop.f32.mrf.mxu0
    %v2483 = vadd.f32 0.0, %v2482
    %v2484 = vpop.f32.mrf.mxu0
    %2485 = vdwg.mxu0
    %v2486 = vcombine.low %v1972, %v2118
    %v2487 = vcombine.high %v1972, %v2118
    %v2489 = vunpack.c.l.s4 1983009808
    %v2490 = vunpack.c.0.s8 %v2489
    %v2491 = vlaneseq
    %v2492 = vshrl.u32 %v2491, 7
    %v2493 = vsub.s32 %v2490, %v2492
    %v2494 = vrot.slane %v2486, %v2493
    %v2496 = vunpack.c.l.s4 1983009808
    %v2497 = vunpack.c.0.s8 %v2496
    %v2498 = vlaneseq
    %v2499 = vshrl.u32 %v2498, 7
    %v2500 = vsub.s32 %v2497, %v2499
    %v2501 = vrot.slane %v2487, %v2500
    %v2502 = vcombine.low %v2045, %v2191
    %v2503 = vcombine.high %v2045, %v2191
    %v2505 = vunpack.c.l.s4 1983009808
    %v2506 = vunpack.c.0.s8 %v2505
    %v2507 = vlaneseq
    %v2508 = vshrl.u32 %v2507, 7
    %v2509 = vsub.s32 %v2506, %v2508
    %v2510 = vrot.slane %v2502, %v2509
    %v2512 = vunpack.c.l.s4 1983009808
    %v2513 = vunpack.c.0.s8 %v2512
    %v2514 = vlaneseq
    %v2515 = vshrl.u32 %v2514, 7
    %v2516 = vsub.s32 %v2513, %v2515
    %v2517 = vrot.slane %v2503, %v2516
    %v2518 = vcombine.low %v2494, %v2510
    %v2519 = vcombine.high %v2494, %v2510
    %v2521 = vunpack.c.l.s4 1934713408
    %v2522 = vunpack.c.0.s8 %v2521
    %v2523 = vlaneseq
    %v2524 = vshrl.u32 %v2523, 7
    %v2525 = vsub.s32 %v2522, %v2524
    %v2526 = vrot.slane %v2518, %v2525
    %v2528 = vunpack.c.l.s4 1934713408
    %v2529 = vunpack.c.0.s8 %v2528
    %v2530 = vlaneseq
    %v2531 = vshrl.u32 %v2530, 7
    %v2532 = vsub.s32 %v2529, %v2531
    %v2533 = vrot.slane %v2519, %v2532
    %v2534 = vcombine.low %v2501, %v2517
    %v2535 = vcombine.high %v2501, %v2517
    %v2537 = vunpack.c.l.s4 1934713408
    %v2538 = vunpack.c.0.s8 %v2537
    %v2539 = vlaneseq
    %v2540 = vshrl.u32 %v2539, 7
    %v2541 = vsub.s32 %v2538, %v2540
    %v2542 = vrot.slane %v2534, %v2541
    %v2544 = vunpack.c.l.s4 1934713408
    %v2545 = vunpack.c.0.s8 %v2544
    %v2546 = vlaneseq
    %v2547 = vshrl.u32 %v2546, 7
    %v2548 = vsub.s32 %v2545, %v2547
    %v2549 = vrot.slane %v2535, %v2548
    %v2550 = vcombine.high %v2526, 0.0
    %v2551 = vcombine.high %v2533, 0.0
    %v2552 = vcombine.high %v2542, 0.0
    %v2553 = vcombine.high %v2549, 0.0
    %v2554 = vcombine.low %v2264, %v2410
    %v2555 = vcombine.high %v2264, %v2410
    %v2557 = vunpack.c.l.s4 1983009808
    %v2558 = vunpack.c.0.s8 %v2557
    %v2559 = vlaneseq
    %v2560 = vshrl.u32 %v2559, 7
    %v2561 = vsub.s32 %v2558, %v2560
    %v2562 = vrot.slane %v2554, %v2561
    %v2564 = vunpack.c.l.s4 1983009808
    %v2565 = vunpack.c.0.s8 %v2564
    %v2566 = vlaneseq
    %v2567 = vshrl.u32 %v2566, 7
    %v2568 = vsub.s32 %v2565, %v2567
    %v2569 = vrot.slane %v2555, %v2568
    %v2570 = vcombine.low %v2337, %v2483
    %v2571 = vcombine.high %v2337, %v2483
    %v2573 = vunpack.c.l.s4 1983009808
    %v2574 = vunpack.c.0.s8 %v2573
    %v2575 = vlaneseq
    %v2576 = vshrl.u32 %v2575, 7
    %v2577 = vsub.s32 %v2574, %v2576
    %v2578 = vrot.slane %v2570, %v2577
    %v2580 = vunpack.c.l.s4 1983009808
    %v2581 = vunpack.c.0.s8 %v2580
    %v2582 = vlaneseq
    %v2583 = vshrl.u32 %v2582, 7
    %v2584 = vsub.s32 %v2581, %v2583
    %v2585 = vrot.slane %v2571, %v2584
    %v2586 = vcombine.low %v2562, %v2578
    %v2587 = vcombine.high %v2562, %v2578
    %v2589 = vunpack.c.l.s4 1934713408
    %v2590 = vunpack.c.0.s8 %v2589
    %v2591 = vlaneseq
    %v2592 = vshrl.u32 %v2591, 7
    %v2593 = vsub.s32 %v2590, %v2592
    %v2594 = vrot.slane %v2586, %v2593
    %v2596 = vunpack.c.l.s4 1934713408
    %v2597 = vunpack.c.0.s8 %v2596
    %v2598 = vlaneseq
    %v2599 = vshrl.u32 %v2598, 7
    %v2600 = vsub.s32 %v2597, %v2599
    %v2601 = vrot.slane %v2587, %v2600
    %v2602 = vcombine.low %v2569, %v2585
    %v2603 = vcombine.high %v2569, %v2585
    %v2605 = vunpack.c.l.s4 1934713408
    %v2606 = vunpack.c.0.s8 %v2605
    %v2607 = vlaneseq
    %v2608 = vshrl.u32 %v2607, 7
    %v2609 = vsub.s32 %v2606, %v2608
    %v2610 = vrot.slane %v2602, %v2609
    %v2612 = vunpack.c.l.s4 1934713408
    %v2613 = vunpack.c.0.s8 %v2612
    %v2614 = vlaneseq
    %v2615 = vshrl.u32 %v2614, 7
    %v2616 = vsub.s32 %v2613, %v2615
    %v2617 = vrot.slane %v2603, %v2616
    %v2618 = vcombine.high %v2594, 0.0
    %v2619 = vcombine.high %v2601, 0.0
    %v2620 = vcombine.high %v2610, 0.0
    %v2621 = vcombine.high %v2617, 0.0
    %v2622 = vcombine.low %v2526, %v2533
    %v2624 = vunpack.c.l.s4 1983009808
    %v2625 = vunpack.c.0.s8 %v2624
    %v2626 = vlaneseq
    %v2627 = vshrl.u32 %v2626, 7
    %v2628 = vsub.s32 %v2625, %v2627
    %v2629 = vrot.slane %v2622, %v2628
    %v2630 = vcombine.low %v2550, %v2551
    %v2632 = vunpack.c.l.s4 1983009808
    %v2633 = vunpack.c.0.s8 %v2632
    %v2634 = vlaneseq
    %v2635 = vshrl.u32 %v2634, 7
    %v2636 = vsub.s32 %v2633, %v2635
    %v2637 = vrot.slane %v2630, %v2636
    %v2638 = vcombine.low %v2542, %v2549
    %v2640 = vunpack.c.l.s4 1983009808
    %v2641 = vunpack.c.0.s8 %v2640
    %v2642 = vlaneseq
    %v2643 = vshrl.u32 %v2642, 7
    %v2644 = vsub.s32 %v2641, %v2643
    %v2645 = vrot.slane %v2638, %v2644
    %v2646 = vcombine.low %v2552, %v2553
    %v2648 = vunpack.c.l.s4 1983009808
    %v2649 = vunpack.c.0.s8 %v2648
    %v2650 = vlaneseq
    %v2651 = vshrl.u32 %v2650, 7
    %v2652 = vsub.s32 %v2649, %v2651
    %v2653 = vrot.slane %v2646, %v2652
    %v2654 = vcombine.low %v2629, %v2637
    %v2655 = vcombine.high %v2629, %v2637
    %v2657 = vunpack.c.l.s4 1934713408
    %v2658 = vunpack.c.0.s8 %v2657
    %v2659 = vlaneseq
    %v2660 = vshrl.u32 %v2659, 7
    %v2661 = vsub.s32 %v2658, %v2660
    %v2662 = vrot.slane %v2654, %v2661
    %v2664 = vunpack.c.l.s4 1934713408
    %v2665 = vunpack.c.0.s8 %v2664
    %v2666 = vlaneseq
    %v2667 = vshrl.u32 %v2666, 7
    %v2668 = vsub.s32 %v2665, %v2667
    %v2669 = vrot.slane %v2655, %v2668
    %v2670 = vcombine.low %v2645, %v2653
    %v2671 = vcombine.high %v2645, %v2653
    %v2673 = vunpack.c.l.s4 1934713408
    %v2674 = vunpack.c.0.s8 %v2673
    %v2675 = vlaneseq
    %v2676 = vshrl.u32 %v2675, 7
    %v2677 = vsub.s32 %v2674, %v2676
    %v2678 = vrot.slane %v2670, %v2677
    %v2680 = vunpack.c.l.s4 1934713408
    %v2681 = vunpack.c.0.s8 %v2680
    %v2682 = vlaneseq
    %v2683 = vshrl.u32 %v2682, 7
    %v2684 = vsub.s32 %v2681, %v2683
    %v2685 = vrot.slane %v2671, %v2684
    %v2686 = vcombine.low %v2662, %v2678
    %v2687 = vcombine.high %v2662, %v2678
    %v2688 = vcombine.low %v2669, %v2685
    %v2689 = vcombine.high %v2669, %v2685
    %v2690 = vcombine.low %v2594, %v2601
    %v2692 = vunpack.c.l.s4 1983009808
    %v2693 = vunpack.c.0.s8 %v2692
    %v2694 = vlaneseq
    %v2695 = vshrl.u32 %v2694, 7
    %v2696 = vsub.s32 %v2693, %v2695
    %v2697 = vrot.slane %v2690, %v2696
    %v2698 = vcombine.low %v2618, %v2619
    %v2700 = vunpack.c.l.s4 1983009808
    %v2701 = vunpack.c.0.s8 %v2700
    %v2702 = vlaneseq
    %v2703 = vshrl.u32 %v2702, 7
    %v2704 = vsub.s32 %v2701, %v2703
    %v2705 = vrot.slane %v2698, %v2704
    %v2706 = vcombine.low %v2610, %v2617
    %v2708 = vunpack.c.l.s4 1983009808
    %v2709 = vunpack.c.0.s8 %v2708
    %v2710 = vlaneseq
    %v2711 = vshrl.u32 %v2710, 7
    %v2712 = vsub.s32 %v2709, %v2711
    %v2713 = vrot.slane %v2706, %v2712
    %v2714 = vcombine.low %v2620, %v2621
    %v2716 = vunpack.c.l.s4 1983009808
    %v2717 = vunpack.c.0.s8 %v2716
    %v2718 = vlaneseq
    %v2719 = vshrl.u32 %v2718, 7
    %v2720 = vsub.s32 %v2717, %v2719
    %v2721 = vrot.slane %v2714, %v2720
    %v2722 = vcombine.low %v2697, %v2705
    %v2723 = vcombine.high %v2697, %v2705
    %v2725 = vunpack.c.l.s4 1934713408
    %v2726 = vunpack.c.0.s8 %v2725
    %v2727 = vlaneseq
    %v2728 = vshrl.u32 %v2727, 7
    %v2729 = vsub.s32 %v2726, %v2728
    %v2730 = vrot.slane %v2722, %v2729
    %v2732 = vunpack.c.l.s4 1934713408
    %v2733 = vunpack.c.0.s8 %v2732
    %v2734 = vlaneseq
    %v2735 = vshrl.u32 %v2734, 7
    %v2736 = vsub.s32 %v2733, %v2735
    %v2737 = vrot.slane %v2723, %v2736
    %v2738 = vcombine.low %v2713, %v2721
    %v2739 = vcombine.high %v2713, %v2721
    %v2741 = vunpack.c.l.s4 1934713408
    %v2742 = vunpack.c.0.s8 %v2741
    %v2743 = vlaneseq
    %v2744 = vshrl.u32 %v2743, 7
    %v2745 = vsub.s32 %v2742, %v2744
    %v2746 = vrot.slane %v2738, %v2745
    %v2748 = vunpack.c.l.s4 1934713408
    %v2749 = vunpack.c.0.s8 %v2748
    %v2750 = vlaneseq
    %v2751 = vshrl.u32 %v2750, 7
    %v2752 = vsub.s32 %v2749, %v2751
    %v2753 = vrot.slane %v2739, %v2752
    %v2754 = vcombine.low %v2730, %v2746
    %v2755 = vcombine.high %v2730, %v2746
    %v2756 = vcombine.low %v2737, %v2753
    %v2757 = vcombine.high %v2737, %v2753
    %2760 = vrot.lane.b32.xlu0 %v2687, 8
    %v2761 = vpop.permute.xlu0 %2760
    %2762 = vrot.lane.b32.xlu0 %v2755, 8
    %v2763 = vpop.permute.xlu0 %2762
    %2768 = vrot.lane.b32.xlu0 %v2688, 16
    %v2769 = vpop.permute.xlu0 %2768
    %2770 = vrot.lane.b32.xlu0 %v2756, 16
    %v2771 = vpop.permute.xlu0 %2770
    %2776 = vrot.lane.b32.xlu0 %v2689, 24
    %v2777 = vpop.permute.xlu0 %2776
    %2778 = vrot.lane.b32.xlu0 %v2757, 24
    %v2779 = vpop.permute.xlu0 %2778
    %v2782 = vsel %vm1205, %v2686, %v2761
    %v2783 = vsel %vm1205, %v2754, %v2763
    %vm2784 = vcmask 130048
    %v2785 = vsel %vm2784, %v2782, %v2769
    %v2786 = vsel %vm2784, %v2783, %v2771
    %vm2787 = vcmask 195584
    %v2788 = vsel %vm2787, %v2785, %v2777
    %v2789 = vsel %vm2787, %v2786, %v2779
    %v2790 = vld [vmem:[%s8] sm:$0xff]
    %v2791 = vld [vmem:[%s8 + $0x8] sm:$0xff]
    %v2792 = vld [vmem:[%s8 + $0x10] sm:$0xff]
    %v2793 = vld [vmem:[%s8 + $0x18] sm:$0xff]
    %v2795 = vsel %vm109, %v2788, 0
    %v2798 = vsel %vm109, %v2789, 0
    %2800 = vmatprep.subr.mxu0 0.0
    %2801 = vmatpush1.msra.mxu0 0.0
    %2802 = vmatprep.subr.mxu0 0.0
    %2803 = vmatpush1.msra.mxu0 0.0
    %2804 = vmatprep.subr.mxu0 0.0
    %2805 = vmatpush1.msra.mxu0 0.0
    %2806 = vmatprep.subr.mxu0 0.0
    %2807 = vmatpush1.msra.mxu0 0.0
    %2808 = vmatprep.subr.mxu0 0.0
    %2809 = vmatpush1.msra.mxu0 0.0
    %2810 = vmatprep.subr.mxu0 0.0
    %2811 = vmatpush1.msra.mxu0 0.0
    %2812 = vmatprep.subr.mxu0 0.0
    %2813 = vmatpush1.msra.mxu0 0.0
    %2814 = vmatprep.subr.mxu0 0.0
    %2815 = vmatpush1.msra.mxu0 0.0
    %2816 = vmatprep.subr.mxu0 0.0
    %2817 = vmatpush1.msra.mxu0 0.0
    %2818 = vmatprep.subr.mxu0 0.0
    %2819 = vmatpush1.msra.mxu0 0.0
    %2820 = vmatprep.subr.mxu0 0.0
    %2821 = vmatpush1.msra.mxu0 0.0
    %2822 = vmatprep.subr.mxu0 0.0
    %2823 = vmatpush1.msra.mxu0 0.0
    %2824 = vmatprep.subr.mxu0 0.0
    %2825 = vmatpush1.msra.mxu0 %v2793
    %2826 = vmatprep.subr.mxu0 0.0
    %2827 = vmatpush1.msra.mxu0 %v2792
    %2828 = vmatprep.subr.mxu0 0.0
    %2829 = vmatpush1.msra.mxu0 %v2791
    %2830 = vmatprep.subr.mxu0 0.0
    %2831 = vmatpush1.msra.mxu0 %v2790
    %2832 = vmatprep.subr.mxu0 0.0
    %2833 = vmatpush2.msra.mxu0 0.0
    %2834 = vmatprep.subr.mxu0 0.0
    %2835 = vmatpush2.msra.mxu0 0.0
    %2836 = vmatprep.subr.mxu0 0.0
    %2837 = vmatpush2.msra.mxu0 0.0
    %2838 = vmatprep.subr.mxu0 0.0
    %2839 = vmatpush2.msra.mxu0 0.0
    %2840 = vmatprep.subr.mxu0 0.0
    %2841 = vmatpush2.msra.mxu0 0.0
    %2842 = vmatprep.subr.mxu0 0.0
    %2843 = vmatpush2.msra.mxu0 0.0
    %2844 = vmatprep.subr.mxu0 0.0
    %2845 = vmatpush2.msra.mxu0 0.0
    %2846 = vmatprep.subr.mxu0 0.0
    %2847 = vmatpush2.msra.mxu0 0.0
    %2848 = vmatprep.subr.mxu0 0.0
    %2849 = vmatpush2.msra.mxu0 0.0
    %2850 = vmatprep.subr.mxu0 0.0
    %2851 = vmatpush2.msra.mxu0 0.0
    %2852 = vmatprep.subr.mxu0 0.0
    %2853 = vmatpush2.msra.mxu0 0.0
    %2854 = vmatprep.subr.mxu0 0.0
    %2855 = vmatpush2.msra.mxu0 0.0
    %2856 = vmatprep.subr.mxu0 0.0
    %2857 = vmatpush2.msra.mxu0 0.0
    %2858 = vmatprep.subr.mxu0 0.0
    %2859 = vmatpush2.msra.mxu0 0.0
    %2860 = vmatprep.subr.mxu0 0.0
    %2861 = vmatpush2.msra.mxu0 0.0
    %2862 = vmatprep.subr.mxu0 0.0
    %2863 = vmatpush2.msra.mxu0 0.0
    %2864 = vmatprep.mubr.f32.mxu0 0.0
    %2865 = vmatmul.mubr.f32.gmra.mxu0 %v2795
    %v2866 = vpop.f32.mrf.mxu0
    %v2867 = vadd.f32 0.0, %v2866
    %v2868 = vpop.f32.mrf.mxu0
    %2869 = vmatprep.mubr.f32.mxu0 0.0
    %2870 = vmatmul.mubr.f32.gmra.mxu0 %v2798
    %v2871 = vpop.f32.mrf.mxu0
    %v2872 = vadd.f32 0.0, %v2871
    %v2873 = vpop.f32.mrf.mxu0
    %2874 = vdwg.mxu0
    %v2875 = vadd.f32 %v103, %v2867
    %v2876 = vadd.f32 %v104, %v2872
    %v2877 = vld [vmem:[%s9] sm:$0x1]
    %v2879 = vlaneseq
    %v2880 = vshrl.u32 %v2879, 7
    %v2881 = vsub.s32 0, %v2880
    %v2882 = vrot.slane %v2877, %v2881
    %v2884 = vadd.f32 %v2875, %v2882
    %v2885 = vadd.f32 %v2876, %v2882
    %v2886 = vld [vmem:[%s10] sm:$0x1]
    %v2887 = vld [vmem:[%s11] sm:$0x1]
    %v2888 = vsel %vm109, %v2884, 0.0
    %2889 = vadd.xlane.f32.xlu0 %v2888
    %v2890 = vpop.xlane.xlu0 %2889
    %v2891 = vsel %vm109, %v2885, 0.0
    %2892 = vadd.xlane.f32.xlu0 %v2891
    %v2893 = vpop.xlane.xlu0 %2892
    %v2894 = vmul.f32 %v2890, %v116
    %v2895 = vmul.f32 %v2893, %v116
    %v2896 = vsub.f32 %v2884, %v2894
    %v2897 = vsub.f32 %v2885, %v2895
    %v2898 = vmul.f32 %v2896, %v2896
    %v2899 = vmul.f32 %v2897, %v2897
    %v2900 = vsel %vm109, %v2898, 0.0
    %2901 = vadd.xlane.f32.xlu0 %v2900
    %v2902 = vpop.xlane.xlu0 %2901
    %v2903 = vsel %vm109, %v2899, 0.0
    %2904 = vadd.xlane.f32.xlu0 %v2903
    %v2905 = vpop.xlane.xlu0 %2904
    %v2906 = vmul.f32 %v2902, %v116
    %v2907 = vmul.f32 %v2905, %v116
    %v2908 = vadd.f32 %v2906, 1e-05
    %v2909 = vadd.f32 %v2907, 1e-05
    %v2910 = vrsqrt.pop %v2908
    %v2911 = vrsqrt.pop %v2909
    %v2912 = vmul.f32 %v2896, %v2910
    %v2913 = vmul.f32 %v2897, %v2911
    %v2915 = vlaneseq
    %v2916 = vshrl.u32 %v2915, 7
    %v2917 = vsub.s32 0, %v2916
    %v2918 = vrot.slane %v2886, %v2917
    %v2920 = vmul.f32 %v2912, %v2918
    %v2921 = vmul.f32 %v2913, %v2918
    %v2923 = vlaneseq
    %v2924 = vshrl.u32 %v2923, 7
    %v2925 = vsub.s32 0, %v2924
    %v2926 = vrot.slane %v2887, %v2925
    %v2928 = vadd.f32 %v2920, %v2926
    %v2929 = vadd.f32 %v2921, %v2926
    %v2930 = vld [vmem:[%s12] sm:$0xff]
    %v2931 = vld [vmem:[%s12 + $0x8] sm:$0xff]
    %v2932 = vld [vmem:[%s12 + $0x10] sm:$0xff]
    %v2933 = vld [vmem:[%s12 + $0x18] sm:$0xff]
    %v2934 = vld [vmem:[%s12 + $0x20] sm:$0xff]
    %v2935 = vld [vmem:[%s12 + $0x28] sm:$0xff]
    %v2936 = vld [vmem:[%s12 + $0x30] sm:$0xff]
    %v2937 = vld [vmem:[%s12 + $0x38] sm:$0xff]
    %v2938 = vld [vmem:[%s13] sm:$0x3]
    %v2940 = vlaneseq
    %v2941 = vshrl.u32 %v2940, 7
    %v2942 = vsub.s32 0, %v2941
    %v2943 = vrot.slane %v2938, %v2942
    %v2944 = vlaneseq
    %v2945 = vshrl.u32 %v2944, 7
    %v2946 = vsub.s32 1, %v2945
    %v2947 = vrot.slane %v2938, %v2946
    %v2951 = vsel %vm109, %v2928, 0
    %v2954 = vsel %vm109, %v2929, 0
    %2956 = vmatprep.subr.mxu0 0.0
    %2957 = vmatpush1.msra.mxu0 0.0
    %2958 = vmatprep.subr.mxu0 0.0
    %2959 = vmatpush1.msra.mxu0 0.0
    %2960 = vmatprep.subr.mxu0 0.0
    %2961 = vmatpush1.msra.mxu0 0.0
    %2962 = vmatprep.subr.mxu0 0.0
    %2963 = vmatpush1.msra.mxu0 0.0
    %2964 = vmatprep.subr.mxu0 0.0
    %2965 = vmatpush1.msra.mxu0 0.0
    %2966 = vmatprep.subr.mxu0 0.0
    %2967 = vmatpush1.msra.mxu0 0.0
    %2968 = vmatprep.subr.mxu0 0.0
    %2969 = vmatpush1.msra.mxu0 0.0
    %2970 = vmatprep.subr.mxu0 0.0
    %2971 = vmatpush1.msra.mxu0 0.0
    %2972 = vmatprep.subr.mxu0 0.0
    %2973 = vmatpush1.msra.mxu0 0.0
    %2974 = vmatprep.subr.mxu0 0.0
    %2975 = vmatpush1.msra.mxu0 0.0
    %2976 = vmatprep.subr.mxu0 0.0
    %2977 = vmatpush1.msra.mxu0 0.0
    %2978 = vmatprep.subr.mxu0 0.0
    %2979 = vmatpush1.msra.mxu0 0.0
    %2980 = vmatprep.subr.mxu0 %v2937
    %2981 = vmatpush1.msra.mxu0 %v2936
    %2982 = vmatprep.subr.mxu0 %v2935
    %2983 = vmatpush1.msra.mxu0 %v2934
    %2984 = vmatprep.subr.mxu0 %v2933
    %2985 = vmatpush1.msra.mxu0 %v2932
    %2986 = vmatprep.subr.mxu0 %v2931
    %2987 = vmatpush1.msra.mxu0 %v2930
    %2988 = vmatprep.subr.mxu0 0.0
    %2989 = vmatpush2.msra.mxu0 0.0
    %2990 = vmatprep.subr.mxu0 0.0
    %2991 = vmatpush2.msra.mxu0 0.0
    %2992 = vmatprep.subr.mxu0 0.0
    %2993 = vmatpush2.msra.mxu0 0.0
    %2994 = vmatprep.subr.mxu0 0.0
    %2995 = vmatpush2.msra.mxu0 0.0
    %2996 = vmatprep.subr.mxu0 0.0
    %2997 = vmatpush2.msra.mxu0 0.0
    %2998 = vmatprep.subr.mxu0 0.0
    %2999 = vmatpush2.msra.mxu0 0.0
    %3000 = vmatprep.subr.mxu0 0.0
    %3001 = vmatpush2.msra.mxu0 0.0
    %3002 = vmatprep.subr.mxu0 0.0
    %3003 = vmatpush2.msra.mxu0 0.0
    %3004 = vmatprep.subr.mxu0 0.0
    %3005 = vmatpush2.msra.mxu0 0.0
    %3006 = vmatprep.subr.mxu0 0.0
    %3007 = vmatpush2.msra.mxu0 0.0
    %3008 = vmatprep.subr.mxu0 0.0
    %3009 = vmatpush2.msra.mxu0 0.0
    %3010 = vmatprep.subr.mxu0 0.0
    %3011 = vmatpush2.msra.mxu0 0.0
    %3012 = vmatprep.subr.mxu0 0.0
    %3013 = vmatpush2.msra.mxu0 0.0
    %3014 = vmatprep.subr.mxu0 0.0
    %3015 = vmatpush2.msra.mxu0 0.0
    %3016 = vmatprep.subr.mxu0 0.0
    %3017 = vmatpush2.msra.mxu0 0.0
    %3018 = vmatprep.subr.mxu0 0.0
    %3019 = vmatpush2.msra.mxu0 0.0
    %3020 = vmatprep.mubr.f32.mxu0 0.0
    %3021 = vmatmul.mubr.f32.gmra.mxu0 %v2951
    %v3022 = vpop.f32.mrf.mxu0
    %v3023 = vadd.f32 %v2943, %v3022
    %v3024 = vpop.f32.mrf.mxu0
    %v3025 = vadd.f32 %v2947, %v3024
    %3026 = vmatprep.mubr.f32.mxu0 0.0
    %3027 = vmatmul.mubr.f32.gmra.mxu0 %v2954
    %v3028 = vpop.f32.mrf.mxu0
    %v3029 = vadd.f32 %v2943, %v3028
    %v3030 = vpop.f32.mrf.mxu0
    %v3031 = vadd.f32 %v2947, %v3030
    %3032 = vdwg.mxu0
    %v3033 = vxor.u32 %v3025, 2147483648
    %v3034 = vxor.u32 %v3031, 2147483648
    %v3035 = vmul.f32 %v3033, 1.442695
    %v3036 = vpow.pop %v3035
    %v3037 = vmul.f32 %v3034, 1.442695
    %v3038 = vpow.pop %v3037
    %v3039 = vadd.f32 %v3036, 1.0
    %v3040 = vadd.f32 %v3038, 1.0
    %v3041 = vrcp.pop %v3039
    %v3042 = vmul.f32 1.0, %v3041
    %v3043 = vrcp.pop %v3040
    %v3044 = vmul.f32 1.0, %v3043
    %v3045 = vmul.f32 %v3025, %v3042
    %v3046 = vmul.f32 %v3031, %v3044
    %v3047 = vmul.f32 %v3023, %v3045
    %v3048 = vmul.f32 %v3029, %v3046
    %v3049 = vld [vmem:[%s14] sm:$0xff]
    %v3050 = vld [vmem:[%s14 + $0x8] sm:$0xff]
    %v3051 = vld [vmem:[%s14 + $0x10] sm:$0xff]
    %v3052 = vld [vmem:[%s14 + $0x18] sm:$0xff]
    %v3053 = vld [vmem:[%s14 + $0x20] sm:$0xff]
    %v3054 = vld [vmem:[%s14 + $0x28] sm:$0xff]
    %v3055 = vld [vmem:[%s14 + $0x30] sm:$0xff]
    %v3056 = vld [vmem:[%s14 + $0x38] sm:$0xff]
    %v3057 = vld [vmem:[%s14 + $0x40] sm:$0xff]
    %v3058 = vld [vmem:[%s14 + $0x48] sm:$0xff]
    %v3059 = vld [vmem:[%s14 + $0x50] sm:$0xff]
    %v3060 = vld [vmem:[%s14 + $0x58] sm:$0xff]
    %v3061 = vld [vmem:[%s14 + $0x60] sm:$0xff]
    %v3062 = vld [vmem:[%s14 + $0x68] sm:$0xff]
    %v3063 = vld [vmem:[%s14 + $0x70] sm:$0xff]
    %v3064 = vld [vmem:[%s14 + $0x78] sm:$0xff]
    %3065 = vmatprep.subr.mxu0 0.0
    %3066 = vmatpush1.msra.mxu0 %v3064
    %3067 = vmatprep.subr.mxu0 0.0
    %3068 = vmatpush1.msra.mxu0 %v3063
    %3069 = vmatprep.subr.mxu0 0.0
    %3070 = vmatpush1.msra.mxu0 %v3062
    %3071 = vmatprep.subr.mxu0 0.0
    %3072 = vmatpush1.msra.mxu0 %v3061
    %3073 = vmatprep.subr.mxu0 0.0
    %3074 = vmatpush1.msra.mxu0 %v3060
    %3075 = vmatprep.subr.mxu0 0.0
    %3076 = vmatpush1.msra.mxu0 %v3059
    %3077 = vmatprep.subr.mxu0 0.0
    %3078 = vmatpush1.msra.mxu0 %v3058
    %3079 = vmatprep.subr.mxu0 0.0
    %3080 = vmatpush1.msra.mxu0 %v3057
    %3081 = vmatprep.subr.mxu0 0.0
    %3082 = vmatpush1.msra.mxu0 %v3056
    %3083 = vmatprep.subr.mxu0 0.0
    %3084 = vmatpush1.msra.mxu0 %v3055
    %3085 = vmatprep.subr.mxu0 0.0
    %3086 = vmatpush1.msra.mxu0 %v3054
    %3087 = vmatprep.subr.mxu0 0.0
    %3088 = vmatpush1.msra.mxu0 %v3053
    %3089 = vmatprep.subr.mxu0 0.0
    %3090 = vmatpush1.msra.mxu0 %v3052
    %3091 = vmatprep.subr.mxu0 0.0
    %3092 = vmatpush1.msra.mxu0 %v3051
    %3093 = vmatprep.subr.mxu0 0.0
    %3094 = vmatpush1.msra.mxu0 %v3050
    %3095 = vmatprep.subr.mxu0 0.0
    %3096 = vmatpush1.msra.mxu0 %v3049
    %3097 = vmatprep.subr.mxu0 0.0
    %3098 = vmatpush2.msra.mxu0 0.0
    %3099 = vmatprep.subr.mxu0 0.0
    %3100 = vmatpush2.msra.mxu0 0.0
    %3101 = vmatprep.subr.mxu0 0.0
    %3102 = vmatpush2.msra.mxu0 0.0
    %3103 = vmatprep.subr.mxu0 0.0
    %3104 = vmatpush2.msra.mxu0 0.0
    %3105 = vmatprep.subr.mxu0 0.0
    %3106 = vmatpush2.msra.mxu0 0.0
    %3107 = vmatprep.subr.mxu0 0.0
    %3108 = vmatpush2.msra.mxu0 0.0
    %3109 = vmatprep.subr.mxu0 0.0
    %3110 = vmatpush2.msra.mxu0 0.0
    %3111 = vmatprep.subr.mxu0 0.0
    %3112 = vmatpush2.msra.mxu0 0.0
    %3113 = vmatprep.subr.mxu0 0.0
    %3114 = vmatpush2.msra.mxu0 0.0
    %3115 = vmatprep.subr.mxu0 0.0
    %3116 = vmatpush2.msra.mxu0 0.0
    %3117 = vmatprep.subr.mxu0 0.0
    %3118 = vmatpush2.msra.mxu0 0.0
    %3119 = vmatprep.subr.mxu0 0.0
    %3120 = vmatpush2.msra.mxu0 0.0
    %3121 = vmatprep.subr.mxu0 0.0
    %3122 = vmatpush2.msra.mxu0 0.0
    %3123 = vmatprep.subr.mxu0 0.0
    %3124 = vmatpush2.msra.mxu0 0.0
    %3125 = vmatprep.subr.mxu0 0.0
    %3126 = vmatpush2.msra.mxu0 0.0
    %3127 = vmatprep.subr.mxu0 0.0
    %3128 = vmatpush2.msra.mxu0 0.0
    %3129 = vmatprep.mubr.f32.mxu0 0.0
    %3130 = vmatmul.mubr.f32.gmra.mxu0 %v3047
    %v3131 = vpop.f32.mrf.mxu0
    %v3132 = vadd.f32 0.0, %v3131
    %v3133 = vpop.f32.mrf.mxu0
    %3134 = vmatprep.mubr.f32.mxu0 0.0
    %3135 = vmatmul.mubr.f32.gmra.mxu0 %v3048
    %v3136 = vpop.f32.mrf.mxu0
    %v3137 = vadd.f32 0.0, %v3136
    %v3138 = vpop.f32.mrf.mxu0
    %3139 = vdwg.mxu0
    %v3140 = vadd.f32 %v2884, %v3132
    %v3141 = vadd.f32 %v2885, %v3137
    %v3142 = vld [vmem:[%s15] sm:$0x1]
    %v3144 = vlaneseq
    %v3145 = vshrl.u32 %v3144, 7
    %v3146 = vsub.s32 0, %v3145
    %v3147 = vrot.slane %v3142, %v3146
    %v3149 = vadd.f32 %v3140, %v3147
    %v3150 = vadd.f32 %v3141, %v3147
    %3151 = vst.msk [vmem:[#allocation10] sm:$0xff] %vm109, %v3149
    %3152 = vst.msk [vmem:[#allocation10 + $0x8] sm:$0xff] %vm109, %v3150
    // Predicated region
    $region82: #{tpu_custom_call.1} parent=1 // pred_check
      _
    $region83: #{tpu_custom_call.1} parent=1 // pred_check_branch
      %3154 = sbr.rel (0) target = $region85
    $region84: #{tpu_custom_call.1} parent=1 // pred_region
      %s3156 = ssub.s32 256, 256
      %3157 = vsyncadd [#allocation4], %s3156
      %s3158 = sshll.u32 [#allocation10], 4
      %s3159 = int_to_ptr.vmem [resolvable:$true] %s3158
      %3164 = dma.vmem_to_hbm [thread:$0]  %s3159, 256, %s16, [#allocation4], 128, 128, 8
    $region85: #{tpu_custom_call.1} parent=1 // pred_fallthru
      _
    // Predicated region
    $region86: #{tpu_custom_call.1} parent=1 // pred_check
      _
    $region87: #{tpu_custom_call.1} parent=1 // pred_check_branch
      %3166 = sbr.rel (0) target = $region89
    $region88: #{tpu_custom_call.1} parent=1 // pred_region
      %3167 = dma.done [#allocation4], 256
    $region89: #{tpu_custom_call.1} parent=1 // pred_fallthru
      _
    %3168 = vsyncpa [#allocation3], 1
    %3169 = vsyncpa [#allocation6], 1
    %3170 = vsyncpa [#allocation9], 1
    %3171 = vsyncpa [#allocation4], 1

</llo_original>
